<compile_context>
chip_gen: v7x
topology: tpu7x:2x2x1
jax: 0.10.0
libtpu: 0.0.40
codegen_flags: <defaults>
</compile_context>

<pallas_src>
import functools

import jax
import jax.numpy as jnp
from jax.experimental import pallas as pl
from jax.experimental.pallas import tpu as pltpu


# ---------------------------------------------------------------------------
# In-kernel helpers
# ---------------------------------------------------------------------------
def _conv1_vpu(x, w1t):
    """conv1 as 3 outer-product FMAs on the VPU.

    x:   (3, tile_N) f32   (channels on sublanes, points on lanes)
    w1t: (64, 3)     f32   (out-channel major)
    returns (64, tile_N) f32
    """
    return (w1t[:, 0:1] * x[0:1, :]
            + w1t[:, 1:2] * x[1:2, :]
            + w1t[:, 2:3] * x[2:3, :])


def _is_first_step():
    return (pl.program_id(0) == 0) & (pl.program_id(1) == 0)


# ---------------------------------------------------------------------------
# Pass 1: per-channel sum / sumsq of conv1(x)   -> bn1 statistics
# ---------------------------------------------------------------------------
def _stats1_kernel(x_ref, w1t_ref, sum_ref, ssq_ref):
    @pl.when(_is_first_step())
    def _():
        sum_ref[...] = jnp.zeros_like(sum_ref)
        ssq_ref[...] = jnp.zeros_like(ssq_ref)

    h1 = _conv1_vpu(x_ref[0], w1t_ref[...])                    # (64, tN) f32
    sum_ref[...] += jnp.sum(h1, axis=1, keepdims=True)          # XLU lane reduce
    ssq_ref[...] += jnp.sum(h1 * h1, axis=1, keepdims=True)


# ---------------------------------------------------------------------------
# Pass 2: per-channel sum / sumsq of conv2(relu(bn1(conv1(x)))) -> bn2 stats
# ---------------------------------------------------------------------------
def _stats2_kernel(x_ref, w1t_ref, sc1_ref, sh1_ref, w2t_ref, sum_ref, ssq_ref):
    @pl.when(_is_first_step())
    def _():
        sum_ref[...] = jnp.zeros_like(sum_ref)
        ssq_ref[...] = jnp.zeros_like(ssq_ref)

    h1 = _conv1_vpu(x_ref[0], w1t_ref[...])                      # (64, tN) f32
    h1 = jnp.maximum(h1 * sc1_ref[...] + sh1_ref[...], 0.0)      # folded bn1+relu
    h2 = jnp.dot(w2t_ref[...], h1.astype(jnp.bfloat16),          # MXU, K=64
                 preferred_element_type=jnp.float32)              # (128, tN) f32
    sum_ref[...] += jnp.sum(h2, axis=1, keepdims=True)
    ssq_ref[...] += jnp.sum(h2 * h2, axis=1, keepdims=True)


# ---------------------------------------------------------------------------
# Pass 3: recompute both convs, apply folded bn1/bn2 + ReLU, write output
# ---------------------------------------------------------------------------
def _apply_kernel(x_ref, w1t_ref, sc1_ref, sh1_ref, w2t_ref, sc2_ref, sh2_ref,
                  o_ref):
    h1 = _conv1_vpu(x_ref[0], w1t_ref[...])
    h1 = jnp.maximum(h1 * sc1_ref[...] + sh1_ref[...], 0.0)
    h2 = jnp.dot(w2t_ref[...], h1.astype(jnp.bfloat16),
                 preferred_element_type=jnp.float32)
    h2 = jnp.maximum(h2 * sc2_ref[...] + sh2_ref[...], 0.0)
    # Lane-dense store: (128, tile_N) block, no transpose needed afterwards.
    o_ref[0] = h2.astype(o_ref.dtype)


# ---------------------------------------------------------------------------
# Host-side glue
# ---------------------------------------------------------------------------
def _choose_tile_n(n, target=512):
    """Largest divisor of n that is a multiple of 128 and <= target (else n)."""
    if n % 128 != 0:
        return n                      # block == full dim is always legal
    t = min(target, n)
    t -= t % 128
    while n % t != 0:
        t -= 128
    return t


def _fold_bn(s, ss, count, gamma, beta, eps):
    """Training-mode BN folded to per-channel scale/shift (tiny (C,1) vectors)."""
    mean = s / count
    var = jnp.maximum(ss / count - mean * mean, 0.0)   # clamp vs. cancellation
    scale = gamma * jax.lax.rsqrt(var + eps)
    shift = beta - mean * scale
    return scale, shift


def conv_layer_forward(x, params, eps=1e-5, tile_n_target=512):
    """x: (B, 3, N) float32 (PyTorch NCL layout). Returns (B, 128, N) float32."""
    w1t, _b1, g1, be1, w2t, _b2, g2, be2 = params   # biases cancelled by BN
    B, c_in, N = x.shape
    c1 = w1t.shape[0]
    c2 = w2t.shape[0]
    tn = _choose_tile_n(N, tile_n_target)
    grid = (B, N // tn)
    M = B * N

    x_spec = pl.BlockSpec((1, c_in, tn), lambda b, t: (b, 0, t))
    w1_spec = pl.BlockSpec((c1, c_in), lambda b, t: (0, 0))
    w2_spec = pl.BlockSpec((c2, c1), lambda b, t: (0, 0))
    v1_spec = pl.BlockSpec((c1, 1), lambda b, t: (0, 0))
    v2_spec = pl.BlockSpec((c2, 1), lambda b, t: (0, 0))
    out_spec = pl.BlockSpec((1, c2, tn), lambda b, t: (b, 0, t))

    stats_params = pltpu.CompilerParams(
        dimension_semantics=("arbitrary", "arbitrary"))  # revisited accumulator

    # -- pass 1: bn1 batch statistics --------------------------------------
    s1, ss1 = pl.pallas_call(
        _stats1_kernel,
        out_shape=(jax.ShapeDtypeStruct((c1, 1), jnp.float32),
                   jax.ShapeDtypeStruct((c1, 1), jnp.float32)),
        grid=grid,
        in_specs=[x_spec, w1_spec],
        out_specs=(v1_spec, v1_spec),
        compiler_params=stats_params,
    )(x, w1t)
    scale1, shift1 = _fold_bn(s1, ss1, M, g1, be1, eps)

    # -- pass 2: bn2 batch statistics (recompute conv1, apply bn1) ---------
    s2, ss2 = pl.pallas_call(
        _stats2_kernel,
        out_shape=(jax.ShapeDtypeStruct((c2, 1), jnp.float32),
                   jax.ShapeDtypeStruct((c2, 1), jnp.float32)),
        grid=grid,
        in_specs=[x_spec, w1_spec, v1_spec, v1_spec, w2_spec],
        out_specs=(v2_spec, v2_spec),
        compiler_params=stats_params,
    )(x, w1t, scale1, shift1, w2t)
    scale2, shift2 = _fold_bn(s2, ss2, M, g2, be2, eps)

    # -- pass 3: apply + write output (channels-major, no wrapper transpose)
    flops = 2 * M * (c_in * c1 + c1 * c2)
    bytes_accessed = int(M * c_in * 4 + M * c2 * 4
                         + w1t.size * 4 + w2t.size * 2
                         + (c1 + c2) * 2 * 4)
    out = pl.pallas_call(
        _apply_kernel,
        out_shape=jax.ShapeDtypeStruct((B, c2, N), jnp.float32),
        grid=grid,
        in_specs=[x_spec, w1_spec, v1_spec, v1_spec, w2_spec, v2_spec, v2_spec],
        out_specs=out_spec,
        compiler_params=pltpu.CompilerParams(
            dimension_semantics=("parallel", "parallel")),
        cost_estimate=pl.CostEstimate(flops=flops, transcendentals=0,
                                      bytes_accessed=bytes_accessed),
    )(x, w1t, scale1, shift1, w2t, scale2, shift2)
    return out


def init_params(key):
    """Deterministic synthetic parameters, stored kernel-ready.

    Conv weights are out-channel-major: w1t (64, 3) f32 for the VPU conv1,
    w2t (128, 64) bf16 for the MXU conv2. BatchNorm affine params and conv
    biases are (C, 1) f32 column vectors (channels-major broadcast). The conv
    biases are only used by the reference: training-mode BN cancels them.
    """
    c_in, c1, c2 = 3, 64, 128
    k1, k2, k3, k4 = jax.random.split(key, 4)
    w1t = jax.random.normal(k1, (c1, c_in), jnp.float32) * 0.1
    b1 = jax.random.normal(k2, (c1, 1), jnp.float32) * 0.01
    w2t = (jax.random.normal(k3, (c2, c1), jnp.float32) * 0.1).astype(jnp.bfloat16)
    b2 = jax.random.normal(k4, (c2, 1), jnp.float32) * 0.01
    g1, be1 = jnp.ones((c1, 1), jnp.float32), jnp.zeros((c1, 1), jnp.float32)
    g2, be2 = jnp.ones((c2, 1), jnp.float32), jnp.zeros((c2, 1), jnp.float32)
    return (w1t, b1, g1, be1, w2t, b2, g2, be2)


def _reference_forward(x, params, eps=1e-5):
    """Pure-JAX f32 reference (training-mode BN, two-pass stats, with biases)."""
    w1t, b1, g1, be1, w2t, b2, g2, be2 = params

    def bn_relu(h, g, be):
        mean = jnp.mean(h, axis=(0, 2), keepdims=True)
        var = jnp.mean(jnp.square(h - mean), axis=(0, 2), keepdims=True)
        return jnp.maximum((h - mean) * jax.lax.rsqrt(var + eps) * g[None]
                           + be[None], 0.0)

    h1 = jnp.einsum("oc,bcn->bon", w1t.astype(jnp.float32), x) + b1[None]
    h1 = bn_relu(h1, g1, be1)
    h2 = jnp.einsum("oc,bcn->bon", w2t.astype(jnp.float32), h1) + b2[None]
    h2 = bn_relu(h2, g2, be2)
    return h2


if __name__ == "__main__":
    # Small shapes consistent with the module: batch=2, in-channels=3, points=256.
    B, C_IN, N = 2, 3, 256

    key = jax.random.PRNGKey(0)
    kx, kp = jax.random.split(key)
    x = jax.random.normal(kx, (B, C_IN, N), jnp.float32)
    params = init_params(kp)

    fwd = jax.jit(functools.partial(conv_layer_forward, params=params))
    out = jax.block_until_ready(fwd(x))

    assert out.shape == (B, 128, N), out.shape
    assert bool(jnp.all(jnp.isfinite(out)))
    assert bool(jnp.all(out >= 0.0))  # ReLU output range

    ref = jax.block_until_ready(_reference_forward(x, params))
    max_err = float(jnp.max(jnp.abs(out - ref)))
    assert max_err < 1e-1, f"max abs err vs reference: {max_err}"

    print("KERNEL_OK")
</pallas_src>

<mosaic_0001>
module attributes {stable_mosaic.version = 11 : i64} {
  func.func @_stats1_kernel(%arg0: i32, %arg1: i32, %arg2: memref<1x3x256xf32, #tpu.memory_space<vmem>>, %arg3: memref<64x3xf32, #tpu.memory_space<vmem>>, %arg4: memref<64x1xf32, #tpu.memory_space<vmem>>, %arg5: memref<64x1xf32, #tpu.memory_space<vmem>>) attributes {dimension_semantics = [#tpu.dimension_semantics<arbitrary>, #tpu.dimension_semantics<arbitrary>], iteration_bounds = array<i64: 2, 1>, scalar_prefetch = 0 : i64, scratch_operands = 0 : i64, tpu.core_type = #tpu.core_type<tc>, window_params = [{transform_indices = @transform_0, window_bounds = array<i64: 1, 3, 256>}, {pipeline_mode = #tpu.pipeline_mode<synchronous>, transform_indices = @transform_1, window_bounds = array<i64: 64, 3>}, {pipeline_mode = #tpu.pipeline_mode<synchronous>, transform_indices = @transform_2, window_bounds = array<i64: 64, 1>}, {pipeline_mode = #tpu.pipeline_mode<synchronous>, transform_indices = @transform_3, window_bounds = array<i64: 64, 1>}]} {
    %c0_i32 = arith.constant 0 : i32
    %0 = arith.cmpi eq, %arg0, %c0_i32 : i32
    %c0_i32_0 = arith.constant 0 : i32
    %1 = arith.cmpi eq, %arg1, %c0_i32_0 : i32
    %2 = arith.andi %0, %1 : i1
    %3 = arith.extui %2 : i1 to i32
    %c0_i32_1 = arith.constant 0 : i32
    %4 = arith.cmpi ne, %3, %c0_i32_1 : i32
    scf.if %4 {
      %cst_15 = arith.constant 0.000000e+00 : f32
      %36 = vector.broadcast %cst_15 : f32 to vector<64x1xf32>
      %c0_16 = arith.constant 0 : index
      %c0_17 = arith.constant 0 : index
      %37 = vector.load %arg4[%c0_16, %c0_17] : memref<64x1xf32, #tpu.memory_space<vmem>>, vector<64x1xf32>
      tpu.vector_store %arg4[%c0_16, %c0_17], %36 {strides = array<i32>} : memref<64x1xf32, #tpu.memory_space<vmem>>, vector<64x1xf32>,
      %cst_18 = arith.constant 0.000000e+00 : f32
      %38 = vector.broadcast %cst_18 : f32 to vector<64x1xf32>
      %c0_19 = arith.constant 0 : index
      %c0_20 = arith.constant 0 : index
      %39 = vector.load %arg5[%c0_19, %c0_20] : memref<64x1xf32, #tpu.memory_space<vmem>>, vector<64x1xf32>
      tpu.vector_store %arg5[%c0_19, %c0_20], %38 {strides = array<i32>} : memref<64x1xf32, #tpu.memory_space<vmem>>, vector<64x1xf32>,
    } else {
    }
    %c0 = arith.constant 0 : index
    %c0_2 = arith.constant 0 : index
    %c0_3 = arith.constant 0 : index
    %5 = vector.load %arg2[%c0, %c0_2, %c0_3] : memref<1x3x256xf32, #tpu.memory_space<vmem>>, vector<1x3x256xf32>
    %6 = vector.shape_cast %5 : vector<1x3x256xf32> to vector<3x256xf32>
    %c0_4 = arith.constant 0 : index
    %c0_5 = arith.constant 0 : index
    %7 = vector.load %arg3[%c0_4, %c0_5] : memref<64x3xf32, #tpu.memory_space<vmem>>, vector<64x3xf32>
    %8 = vector.extract_strided_slice %7 {offsets = [0, 0], sizes = [64, 1], strides = [1, 1]} : vector<64x3xf32> to vector<64x1xf32>
    %9 = vector.extract_strided_slice %6 {offsets = [0, 0], sizes = [1, 256], strides = [1, 1]} : vector<3x256xf32> to vector<1x256xf32>
    %10 = vector.broadcast %8 : vector<64x1xf32> to vector<64x256xf32>
    %11 = vector.broadcast %9 : vector<1x256xf32> to vector<64x256xf32>
    %12 = arith.mulf %10, %11 : vector<64x256xf32>
    %13 = vector.extract_strided_slice %7 {offsets = [0, 1], sizes = [64, 1], strides = [1, 1]} : vector<64x3xf32> to vector<64x1xf32>
    %14 = vector.extract_strided_slice %6 {offsets = [1, 0], sizes = [1, 256], strides = [1, 1]} : vector<3x256xf32> to vector<1x256xf32>
    %15 = vector.broadcast %13 : vector<64x1xf32> to vector<64x256xf32>
    %16 = vector.broadcast %14 : vector<1x256xf32> to vector<64x256xf32>
    %17 = arith.mulf %15, %16 : vector<64x256xf32>
    %18 = arith.addf %12, %17 : vector<64x256xf32>
    %19 = vector.extract_strided_slice %7 {offsets = [0, 2], sizes = [64, 1], strides = [1, 1]} : vector<64x3xf32> to vector<64x1xf32>
    %20 = vector.extract_strided_slice %6 {offsets = [2, 0], sizes = [1, 256], strides = [1, 1]} : vector<3x256xf32> to vector<1x256xf32>
    %21 = vector.broadcast %19 : vector<64x1xf32> to vector<64x256xf32>
    %22 = vector.broadcast %20 : vector<1x256xf32> to vector<64x256xf32>
    %23 = arith.mulf %21, %22 : vector<64x256xf32>
    %24 = arith.addf %18, %23 : vector<64x256xf32>
    %c0_6 = arith.constant 0 : index
    %c0_7 = arith.constant 0 : index
    %25 = vector.load %arg4[%c0_6, %c0_7] : memref<64x1xf32, #tpu.memory_space<vmem>>, vector<64x1xf32>
    %cst = arith.constant dense<0.000000e+00> : vector<64xf32>
    %26 = vector.multi_reduction <add>, %24, %cst [1] : vector<64x256xf32> to vector<64xf32>
    %27 = vector.shape_cast %26 : vector<64xf32> to vector<64x1xf32>
    %28 = arith.addf %25, %27 : vector<64x1xf32>
    %c0_8 = arith.constant 0 : index
    %c0_9 = arith.constant 0 : index
    %29 = vector.load %arg4[%c0_8, %c0_9] : memref<64x1xf32, #tpu.memory_space<vmem>>, vector<64x1xf32>
    tpu.vector_store %arg4[%c0_8, %c0_9], %28 {strides = array<i32>} : memref<64x1xf32, #tpu.memory_space<vmem>>, vector<64x1xf32>,
    %c0_10 = arith.constant 0 : index
    %c0_11 = arith.constant 0 : index
    %30 = vector.load %arg5[%c0_10, %c0_11] : memref<64x1xf32, #tpu.memory_space<vmem>>, vector<64x1xf32>
    %31 = arith.mulf %24, %24 : vector<64x256xf32>
    %cst_12 = arith.constant dense<0.000000e+00> : vector<64xf32>
    %32 = vector.multi_reduction <add>, %31, %cst_12 [1] : vector<64x256xf32> to vector<64xf32>
    %33 = vector.shape_cast %32 : vector<64xf32> to vector<64x1xf32>
    %34 = arith.addf %30, %33 : vector<64x1xf32>
    %c0_13 = arith.constant 0 : index
    %c0_14 = arith.constant 0 : index
    %35 = vector.load %arg5[%c0_13, %c0_14] : memref<64x1xf32, #tpu.memory_space<vmem>>, vector<64x1xf32>
    tpu.vector_store %arg5[%c0_13, %c0_14], %34 {strides = array<i32>} : memref<64x1xf32, #tpu.memory_space<vmem>>, vector<64x1xf32>,
    return
  }
  func.func @transform_0(%arg0: i32, %arg1: i32) -> (i32, i32, i32) {
    %c0_i32 = arith.constant 0 : i32
    %c0_i32_0 = arith.constant 0 : i32
    return %arg0, %c0_i32, %arg1 : i32, i32, i32
  }
  func.func @transform_1(%arg0: i32, %arg1: i32) -> (i32, i32) {
    %c0_i32 = arith.constant 0 : i32
    %c0_i32_0 = arith.constant 0 : i32
    %c0_i32_1 = arith.constant 0 : i32
    return %c0_i32, %c0_i32_0 : i32, i32
  }
  func.func @transform_2(%arg0: i32, %arg1: i32) -> (i32, i32) {
    %c0_i32 = arith.constant 0 : i32
    %c0_i32_0 = arith.constant 0 : i32
    %c0_i32_1 = arith.constant 0 : i32
    return %c0_i32, %c0_i32_0 : i32, i32
  }
  func.func @transform_3(%arg0: i32, %arg1: i32) -> (i32, i32) {
    %c0_i32 = arith.constant 0 : i32
    %c0_i32_0 = arith.constant 0 : i32
    %c0_i32_1 = arith.constant 0 : i32
    return %c0_i32, %c0_i32_0 : i32, i32
  }
}

module attributes {stable_mosaic.version = 11 : i64} {
  func.func @_stats2_kernel(%arg0: i32, %arg1: i32, %arg2: memref<1x3x256xf32, #tpu.memory_space<vmem>>, %arg3: memref<64x3xf32, #tpu.memory_space<vmem>>, %arg4: memref<64x1xf32, #tpu.memory_space<vmem>>, %arg5: memref<64x1xf32, #tpu.memory_space<vmem>>, %arg6: memref<128x64xbf16, #tpu.memory_space<vmem>>, %arg7: memref<128x1xf32, #tpu.memory_space<vmem>>, %arg8: memref<128x1xf32, #tpu.memory_space<vmem>>) attributes {dimension_semantics = [#tpu.dimension_semantics<arbitrary>, #tpu.dimension_semantics<arbitrary>], iteration_bounds = array<i64: 2, 1>, scalar_prefetch = 0 : i64, scratch_operands = 0 : i64, tpu.core_type = #tpu.core_type<tc>, window_params = [{transform_indices = @transform_0, window_bounds = array<i64: 1, 3, 256>}, {pipeline_mode = #tpu.pipeline_mode<synchronous>, transform_indices = @transform_1, window_bounds = array<i64: 64, 3>}, {pipeline_mode = #tpu.pipeline_mode<synchronous>, transform_indices = @transform_2, window_bounds = array<i64: 64, 1>}, {pipeline_mode = #tpu.pipeline_mode<synchronous>, transform_indices = @transform_3, window_bounds = array<i64: 64, 1>}, {pipeline_mode = #tpu.pipeline_mode<synchronous>, transform_indices = @transform_4, window_bounds = array<i64: 128, 64>}, {pipeline_mode = #tpu.pipeline_mode<synchronous>, transform_indices = @transform_5, window_bounds = array<i64: 128, 1>}, {pipeline_mode = #tpu.pipeline_mode<synchronous>, transform_indices = @transform_6, window_bounds = array<i64: 128, 1>}]} {
    %c0_i32 = arith.constant 0 : i32
    %0 = arith.cmpi eq, %arg0, %c0_i32 : i32
    %c0_i32_0 = arith.constant 0 : i32
    %1 = arith.cmpi eq, %arg1, %c0_i32_0 : i32
    %2 = arith.andi %0, %1 : i1
    %3 = arith.extui %2 : i1 to i32
    %c0_i32_1 = arith.constant 0 : i32
    %4 = arith.cmpi ne, %3, %c0_i32_1 : i32
    scf.if %4 {
      %cst_23 = arith.constant 0.000000e+00 : f32
      %47 = vector.broadcast %cst_23 : f32 to vector<128x1xf32>
      %c0_24 = arith.constant 0 : index
      %c0_25 = arith.constant 0 : index
      %48 = vector.load %arg7[%c0_24, %c0_25] : memref<128x1xf32, #tpu.memory_space<vmem>>, vector<128x1xf32>
      tpu.vector_store %arg7[%c0_24, %c0_25], %47 {strides = array<i32>} : memref<128x1xf32, #tpu.memory_space<vmem>>, vector<128x1xf32>,
      %cst_26 = arith.constant 0.000000e+00 : f32
      %49 = vector.broadcast %cst_26 : f32 to vector<128x1xf32>
      %c0_27 = arith.constant 0 : index
      %c0_28 = arith.constant 0 : index
      %50 = vector.load %arg8[%c0_27, %c0_28] : memref<128x1xf32, #tpu.memory_space<vmem>>, vector<128x1xf32>
      tpu.vector_store %arg8[%c0_27, %c0_28], %49 {strides = array<i32>} : memref<128x1xf32, #tpu.memory_space<vmem>>, vector<128x1xf32>,
    } else {
    }
    %c0 = arith.constant 0 : index
    %c0_2 = arith.constant 0 : index
    %c0_3 = arith.constant 0 : index
    %5 = vector.load %arg2[%c0, %c0_2, %c0_3] : memref<1x3x256xf32, #tpu.memory_space<vmem>>, vector<1x3x256xf32>
    %6 = vector.shape_cast %5 : vector<1x3x256xf32> to vector<3x256xf32>
    %c0_4 = arith.constant 0 : index
    %c0_5 = arith.constant 0 : index
    %7 = vector.load %arg3[%c0_4, %c0_5] : memref<64x3xf32, #tpu.memory_space<vmem>>, vector<64x3xf32>
    %8 = vector.extract_strided_slice %7 {offsets = [0, 0], sizes = [64, 1], strides = [1, 1]} : vector<64x3xf32> to vector<64x1xf32>
    %9 = vector.extract_strided_slice %6 {offsets = [0, 0], sizes = [1, 256], strides = [1, 1]} : vector<3x256xf32> to vector<1x256xf32>
    %10 = vector.broadcast %8 : vector<64x1xf32> to vector<64x256xf32>
    %11 = vector.broadcast %9 : vector<1x256xf32> to vector<64x256xf32>
    %12 = arith.mulf %10, %11 : vector<64x256xf32>
    %13 = vector.extract_strided_slice %7 {offsets = [0, 1], sizes = [64, 1], strides = [1, 1]} : vector<64x3xf32> to vector<64x1xf32>
    %14 = vector.extract_strided_slice %6 {offsets = [1, 0], sizes = [1, 256], strides = [1, 1]} : vector<3x256xf32> to vector<1x256xf32>
    %15 = vector.broadcast %13 : vector<64x1xf32> to vector<64x256xf32>
    %16 = vector.broadcast %14 : vector<1x256xf32> to vector<64x256xf32>
    %17 = arith.mulf %15, %16 : vector<64x256xf32>
    %18 = arith.addf %12, %17 : vector<64x256xf32>
    %19 = vector.extract_strided_slice %7 {offsets = [0, 2], sizes = [64, 1], strides = [1, 1]} : vector<64x3xf32> to vector<64x1xf32>
    %20 = vector.extract_strided_slice %6 {offsets = [2, 0], sizes = [1, 256], strides = [1, 1]} : vector<3x256xf32> to vector<1x256xf32>
    %21 = vector.broadcast %19 : vector<64x1xf32> to vector<64x256xf32>
    %22 = vector.broadcast %20 : vector<1x256xf32> to vector<64x256xf32>
    %23 = arith.mulf %21, %22 : vector<64x256xf32>
    %24 = arith.addf %18, %23 : vector<64x256xf32>
    %c0_6 = arith.constant 0 : index
    %c0_7 = arith.constant 0 : index
    %25 = vector.load %arg4[%c0_6, %c0_7] : memref<64x1xf32, #tpu.memory_space<vmem>>, vector<64x1xf32>
    %26 = vector.broadcast %25 : vector<64x1xf32> to vector<64x256xf32>
    %27 = arith.mulf %24, %26 : vector<64x256xf32>
    %c0_8 = arith.constant 0 : index
    %c0_9 = arith.constant 0 : index
    %28 = vector.load %arg5[%c0_8, %c0_9] : memref<64x1xf32, #tpu.memory_space<vmem>>, vector<64x1xf32>
    %29 = vector.broadcast %28 : vector<64x1xf32> to vector<64x256xf32>
    %30 = arith.addf %27, %29 : vector<64x256xf32>
    %cst = arith.constant 0.000000e+00 : f32
    %31 = vector.broadcast %cst : f32 to vector<64x256xf32>
    %32 = arith.maximumf %30, %31 : vector<64x256xf32>
    %c0_10 = arith.constant 0 : index
    %c0_11 = arith.constant 0 : index
    %33 = vector.load %arg6[%c0_10, %c0_11] : memref<128x64xbf16, #tpu.memory_space<vmem>>, vector<128x64xbf16>
    %34 = arith.truncf %32 : vector<64x256xf32> to vector<64x256xbf16>
    %cst_12 = arith.constant dense<0.000000e+00> : vector<128x256xf32>
    %35 = tpu.matmul %33, %34, %cst_12 {dimension_numbers = #tpu.dot_dimension_numbers<[1], [0], [0], [1], [0, 0, 1, 1], [], []>} : vector<128x64xbf16>, vector<64x256xbf16>, vector<128x256xf32> -> vector<128x256xf32>
    %c0_13 = arith.constant 0 : index
    %c0_14 = arith.constant 0 : index
    %36 = vector.load %arg7[%c0_13, %c0_14] : memref<128x1xf32, #tpu.memory_space<vmem>>, vector<128x1xf32>
    %cst_15 = arith.constant dense<0.000000e+00> : vector<128xf32>
    %37 = vector.multi_reduction <add>, %35, %cst_15 [1] : vector<128x256xf32> to vector<128xf32>
    %38 = vector.shape_cast %37 : vector<128xf32> to vector<128x1xf32>
    %39 = arith.addf %36, %38 : vector<128x1xf32>
    %c0_16 = arith.constant 0 : index
    %c0_17 = arith.constant 0 : index
    %40 = vector.load %arg7[%c0_16, %c0_17] : memref<128x1xf32, #tpu.memory_space<vmem>>, vector<128x1xf32>
    tpu.vector_store %arg7[%c0_16, %c0_17], %39 {strides = array<i32>} : memref<128x1xf32, #tpu.memory_space<vmem>>, vector<128x1xf32>,
    %c0_18 = arith.constant 0 : index
    %c0_19 = arith.constant 0 : index
    %41 = vector.load %arg8[%c0_18, %c0_19] : memref<128x1xf32, #tpu.memory_space<vmem>>, vector<128x1xf32>
    %42 = arith.mulf %35, %35 : vector<128x256xf32>
    %cst_20 = arith.constant dense<0.000000e+00> : vector<128xf32>
    %43 = vector.multi_reduction <add>, %42, %cst_20 [1] : vector<128x256xf32> to vector<128xf32>
    %44 = vector.shape_cast %43 : vector<128xf32> to vector<128x1xf32>
    %45 = arith.addf %41, %44 : vector<128x1xf32>
    %c0_21 = arith.constant 0 : index
    %c0_22 = arith.constant 0 : index
    %46 = vector.load %arg8[%c0_21, %c0_22] : memref<128x1xf32, #tpu.memory_space<vmem>>, vector<128x1xf32>
    tpu.vector_store %arg8[%c0_21, %c0_22], %45 {strides = array<i32>} : memref<128x1xf32, #tpu.memory_space<vmem>>, vector<128x1xf32>,
    return
  }
  func.func @transform_0(%arg0: i32, %arg1: i32) -> (i32, i32, i32) {
    %c0_i32 = arith.constant 0 : i32
    %c0_i32_0 = arith.constant 0 : i32
    return %arg0, %c0_i32, %arg1 : i32, i32, i32
  }
  func.func @transform_1(%arg0: i32, %arg1: i32) -> (i32, i32) {
    %c0_i32 = arith.constant 0 : i32
    %c0_i32_0 = arith.constant 0 : i32
    %c0_i32_1 = arith.constant 0 : i32
    return %c0_i32, %c0_i32_0 : i32, i32
  }
  func.func @transform_2(%arg0: i32, %arg1: i32) -> (i32, i32) {
    %c0_i32 = arith.constant 0 : i32
    %c0_i32_0 = arith.constant 0 : i32
    %c0_i32_1 = arith.constant 0 : i32
    return %c0_i32, %c0_i32_0 : i32, i32
  }
  func.func @transform_3(%arg0: i32, %arg1: i32) -> (i32, i32) {
    %c0_i32 = arith.constant 0 : i32
    %c0_i32_0 = arith.constant 0 : i32
    %c0_i32_1 = arith.constant 0 : i32
    return %c0_i32, %c0_i32_0 : i32, i32
  }
  func.func @transform_4(%arg0: i32, %arg1: i32) -> (i32, i32) {
    %c0_i32 = arith.constant 0 : i32
    %c0_i32_0 = arith.constant 0 : i32
    %c0_i32_1 = arith.constant 0 : i32
    return %c0_i32, %c0_i32_0 : i32, i32
  }
  func.func @transform_5(%arg0: i32, %arg1: i32) -> (i32, i32) {
    %c0_i32 = arith.constant 0 : i32
    %c0_i32_0 = arith.constant 0 : i32
    %c0_i32_1 = arith.constant 0 : i32
    return %c0_i32, %c0_i32_0 : i32, i32
  }
  func.func @transform_6(%arg0: i32, %arg1: i32) -> (i32, i32) {
    %c0_i32 = arith.constant 0 : i32
    %c0_i32_0 = arith.constant 0 : i32
    %c0_i32_1 = arith.constant 0 : i32
    return %c0_i32, %c0_i32_0 : i32, i32
  }
}

module attributes {stable_mosaic.version = 11 : i64} {
  func.func @_apply_kernel(%arg0: i32, %arg1: i32, %arg2: memref<1x3x256xf32, #tpu.memory_space<vmem>>, %arg3: memref<64x3xf32, #tpu.memory_space<vmem>>, %arg4: memref<64x1xf32, #tpu.memory_space<vmem>>, %arg5: memref<64x1xf32, #tpu.memory_space<vmem>>, %arg6: memref<128x64xbf16, #tpu.memory_space<vmem>>, %arg7: memref<128x1xf32, #tpu.memory_space<vmem>>, %arg8: memref<128x1xf32, #tpu.memory_space<vmem>>, %arg9: memref<1x128x256xf32, #tpu.memory_space<vmem>>) attributes {dimension_semantics = [#tpu.dimension_semantics<parallel>, #tpu.dimension_semantics<parallel>], iteration_bounds = array<i64: 2, 1>, scalar_prefetch = 0 : i64, scratch_operands = 0 : i64, tpu.core_type = #tpu.core_type<tc>, window_params = [{transform_indices = @transform_0, window_bounds = array<i64: 1, 3, 256>}, {pipeline_mode = #tpu.pipeline_mode<synchronous>, transform_indices = @transform_1, window_bounds = array<i64: 64, 3>}, {pipeline_mode = #tpu.pipeline_mode<synchronous>, transform_indices = @transform_2, window_bounds = array<i64: 64, 1>}, {pipeline_mode = #tpu.pipeline_mode<synchronous>, transform_indices = @transform_3, window_bounds = array<i64: 64, 1>}, {pipeline_mode = #tpu.pipeline_mode<synchronous>, transform_indices = @transform_4, window_bounds = array<i64: 128, 64>}, {pipeline_mode = #tpu.pipeline_mode<synchronous>, transform_indices = @transform_5, window_bounds = array<i64: 128, 1>}, {pipeline_mode = #tpu.pipeline_mode<synchronous>, transform_indices = @transform_6, window_bounds = array<i64: 128, 1>}, {transform_indices = @transform_7, window_bounds = array<i64: 1, 128, 256>}]} {
    %c0 = arith.constant 0 : index
    %c0_0 = arith.constant 0 : index
    %c0_1 = arith.constant 0 : index
    %0 = vector.load %arg2[%c0, %c0_0, %c0_1] : memref<1x3x256xf32, #tpu.memory_space<vmem>>, vector<1x3x256xf32>
    %1 = vector.shape_cast %0 : vector<1x3x256xf32> to vector<3x256xf32>
    %c0_2 = arith.constant 0 : index
    %c0_3 = arith.constant 0 : index
    %2 = vector.load %arg3[%c0_2, %c0_3] : memref<64x3xf32, #tpu.memory_space<vmem>>, vector<64x3xf32>
    %3 = vector.extract_strided_slice %2 {offsets = [0, 0], sizes = [64, 1], strides = [1, 1]} : vector<64x3xf32> to vector<64x1xf32>
    %4 = vector.extract_strided_slice %1 {offsets = [0, 0], sizes = [1, 256], strides = [1, 1]} : vector<3x256xf32> to vector<1x256xf32>
    %5 = vector.broadcast %3 : vector<64x1xf32> to vector<64x256xf32>
    %6 = vector.broadcast %4 : vector<1x256xf32> to vector<64x256xf32>
    %7 = arith.mulf %5, %6 : vector<64x256xf32>
    %8 = vector.extract_strided_slice %2 {offsets = [0, 1], sizes = [64, 1], strides = [1, 1]} : vector<64x3xf32> to vector<64x1xf32>
    %9 = vector.extract_strided_slice %1 {offsets = [1, 0], sizes = [1, 256], strides = [1, 1]} : vector<3x256xf32> to vector<1x256xf32>
    %10 = vector.broadcast %8 : vector<64x1xf32> to vector<64x256xf32>
    %11 = vector.broadcast %9 : vector<1x256xf32> to vector<64x256xf32>
    %12 = arith.mulf %10, %11 : vector<64x256xf32>
    %13 = arith.addf %7, %12 : vector<64x256xf32>
    %14 = vector.extract_strided_slice %2 {offsets = [0, 2], sizes = [64, 1], strides = [1, 1]} : vector<64x3xf32> to vector<64x1xf32>
    %15 = vector.extract_strided_slice %1 {offsets = [2, 0], sizes = [1, 256], strides = [1, 1]} : vector<3x256xf32> to vector<1x256xf32>
    %16 = vector.broadcast %14 : vector<64x1xf32> to vector<64x256xf32>
    %17 = vector.broadcast %15 : vector<1x256xf32> to vector<64x256xf32>
    %18 = arith.mulf %16, %17 : vector<64x256xf32>
    %19 = arith.addf %13, %18 : vector<64x256xf32>
    %c0_4 = arith.constant 0 : index
    %c0_5 = arith.constant 0 : index
    %20 = vector.load %arg4[%c0_4, %c0_5] : memref<64x1xf32, #tpu.memory_space<vmem>>, vector<64x1xf32>
    %21 = vector.broadcast %20 : vector<64x1xf32> to vector<64x256xf32>
    %22 = arith.mulf %19, %21 : vector<64x256xf32>
    %c0_6 = arith.constant 0 : index
    %c0_7 = arith.constant 0 : index
    %23 = vector.load %arg5[%c0_6, %c0_7] : memref<64x1xf32, #tpu.memory_space<vmem>>, vector<64x1xf32>
    %24 = vector.broadcast %23 : vector<64x1xf32> to vector<64x256xf32>
    %25 = arith.addf %22, %24 : vector<64x256xf32>
    %cst = arith.constant 0.000000e+00 : f32
    %26 = vector.broadcast %cst : f32 to vector<64x256xf32>
    %27 = arith.maximumf %25, %26 : vector<64x256xf32>
    %c0_8 = arith.constant 0 : index
    %c0_9 = arith.constant 0 : index
    %28 = vector.load %arg6[%c0_8, %c0_9] : memref<128x64xbf16, #tpu.memory_space<vmem>>, vector<128x64xbf16>
    %29 = arith.truncf %27 : vector<64x256xf32> to vector<64x256xbf16>
    %cst_10 = arith.constant dense<0.000000e+00> : vector<128x256xf32>
    %30 = tpu.matmul %28, %29, %cst_10 {dimension_numbers = #tpu.dot_dimension_numbers<[1], [0], [0], [1], [0, 0, 1, 1], [], []>} : vector<128x64xbf16>, vector<64x256xbf16>, vector<128x256xf32> -> vector<128x256xf32>
    %c0_11 = arith.constant 0 : index
    %c0_12 = arith.constant 0 : index
    %31 = vector.load %arg7[%c0_11, %c0_12] : memref<128x1xf32, #tpu.memory_space<vmem>>, vector<128x1xf32>
    %32 = vector.broadcast %31 : vector<128x1xf32> to vector<128x256xf32>
    %33 = arith.mulf %30, %32 : vector<128x256xf32>
    %c0_13 = arith.constant 0 : index
    %c0_14 = arith.constant 0 : index
    %34 = vector.load %arg8[%c0_13, %c0_14] : memref<128x1xf32, #tpu.memory_space<vmem>>, vector<128x1xf32>
    %35 = vector.broadcast %34 : vector<128x1xf32> to vector<128x256xf32>
    %36 = arith.addf %33, %35 : vector<128x256xf32>
    %cst_15 = arith.constant 0.000000e+00 : f32
    %37 = vector.broadcast %cst_15 : f32 to vector<128x256xf32>
    %38 = arith.maximumf %36, %37 : vector<128x256xf32>
    %c0_16 = arith.constant 0 : index
    %c0_17 = arith.constant 0 : index
    %c0_18 = arith.constant 0 : index
    %39 = vector.load %arg9[%c0_16, %c0_17, %c0_18] : memref<1x128x256xf32, #tpu.memory_space<vmem>>, vector<1x128x256xf32>
    %40 = vector.shape_cast %39 : vector<1x128x256xf32> to vector<128x256xf32>
    %41 = vector.shape_cast %38 : vector<128x256xf32> to vector<1x128x256xf32>
    tpu.vector_store %arg9[%c0_16, %c0_17, %c0_18], %41 {strides = array<i32>} : memref<1x128x256xf32, #tpu.memory_space<vmem>>, vector<1x128x256xf32>,
    return
  }
  func.func @transform_0(%arg0: i32, %arg1: i32) -> (i32, i32, i32) {
    %c0_i32 = arith.constant 0 : i32
    %c0_i32_0 = arith.constant 0 : i32
    return %arg0, %c0_i32, %arg1 : i32, i32, i32
  }
  func.func @transform_1(%arg0: i32, %arg1: i32) -> (i32, i32) {
    %c0_i32 = arith.constant 0 : i32
    %c0_i32_0 = arith.constant 0 : i32
    %c0_i32_1 = arith.constant 0 : i32
    return %c0_i32, %c0_i32_0 : i32, i32
  }
  func.func @transform_2(%arg0: i32, %arg1: i32) -> (i32, i32) {
    %c0_i32 = arith.constant 0 : i32
    %c0_i32_0 = arith.constant 0 : i32
    %c0_i32_1 = arith.constant 0 : i32
    return %c0_i32, %c0_i32_0 : i32, i32
  }
  func.func @transform_3(%arg0: i32, %arg1: i32) -> (i32, i32) {
    %c0_i32 = arith.constant 0 : i32
    %c0_i32_0 = arith.constant 0 : i32
    %c0_i32_1 = arith.constant 0 : i32
    return %c0_i32, %c0_i32_0 : i32, i32
  }
  func.func @transform_4(%arg0: i32, %arg1: i32) -> (i32, i32) {
    %c0_i32 = arith.constant 0 : i32
    %c0_i32_0 = arith.constant 0 : i32
    %c0_i32_1 = arith.constant 0 : i32
    return %c0_i32, %c0_i32_0 : i32, i32
  }
  func.func @transform_5(%arg0: i32, %arg1: i32) -> (i32, i32) {
    %c0_i32 = arith.constant 0 : i32
    %c0_i32_0 = arith.constant 0 : i32
    %c0_i32_1 = arith.constant 0 : i32
    return %c0_i32, %c0_i32_0 : i32, i32
  }
  func.func @transform_6(%arg0: i32, %arg1: i32) -> (i32, i32) {
    %c0_i32 = arith.constant 0 : i32
    %c0_i32_0 = arith.constant 0 : i32
    %c0_i32_1 = arith.constant 0 : i32
    return %c0_i32, %c0_i32_0 : i32, i32
  }
  func.func @transform_7(%arg0: i32, %arg1: i32) -> (i32, i32, i32) {
    %c0_i32 = arith.constant 0 : i32
    %c0_i32_0 = arith.constant 0 : i32
    return %arg0, %c0_i32, %arg1 : i32, i32, i32
  }
}

</mosaic_0001>

<llo_original>
// kernel: conv_layer_forward.3
$region0: #{conv_layer_forward.3}
  #allocation0 [shape = 'u32[]', space=smem, size = 0x4, offset = 0x4, fixed_abs, tag = 'smem constant byte address 0x4 - core index']
  #allocation1 [shape = 'u32[144,128]{1,0:T(1,128)}', space=vmem, size = 0x12000, scoped, tag = 'internal scratch']
  %s0 = inlined_call_operand.vmem [shape: f32[2,3,256], index: 0, kind: input, shape index: {}]
  %s1 = inlined_call_operand.hbm [shape: f32[64,3], index: 1, kind: input, shape index: {}]
  %s2 = inlined_call_operand.vmem [shape: f32[64,1], index: 2, kind: output, shape index: {0}]
  %s3 = inlined_call_operand.vmem [shape: f32[64,1], index: 3, kind: output, shape index: {1}]
  %4 = xla_tuple %s2, %s3
  %s5 = sld [smem:[#allocation0]]
  $region57: #{conv_layer_forward.3} parent=0
    _
  %s7 = ssub.s32 1, %s5
  %s8 = scalar_select 0, %s7, %s5
  $region1: #{conv_layer_forward.3} parent=0
    #allocation2 [shape = 'u8[32768]{0}', space=vmem, size = 0x8000, scoped, tag = 'input window, operand 1, single buffered']
    #allocation3 [shape = 's32[2]{0}', space=sflag, size = 0x8, scoped, tag = 'scoped memory for conv_layer_forward.3']
    %9 = vsyncpa [#allocation3], 0
    loop: start=0, step=1, limit=4
    $region2: #{conv_layer_forward.3} parent=1 // loop_pre_header
      _
    $region3: #{conv_layer_forward.3} parent=1 // loop_header
      %s11 = sphi 0, %s15
      %p12 = scmp.ge.s32.totalorder %s11, 4
      %s18 = sphi 0, %s30
      %s19 = sphi 0, %s26
      %s20 = sphi 0, %s18
      %s21 = sphi 0, %s19
      %s22 = sphi 0, %s20
      %s23 = sphi 0, %s21
      %s35 = sphi 0, %s37
      %s38 = sphi 0, %s35
      %s39 = sphi 0, %s38
      %s55 = sphi 0, %s39
      %s59 = sphi 0, %s59
      %s61 = sphi 0, %s59
      %s62 = sphi 0, %s61
      %s76 = sphi 0, %s62
      %s80 = sphi 0, %s80
      %s82 = sphi 0, %s80
      %s83 = sphi 0, %s82
      %s97 = sphi 0, %s83
      %s101 = sphi 0, %s101
      %s103 = sphi 0, %s101
      %s104 = sphi 0, %s103
      %s118 = sphi 0, %s104
    $region4: #{conv_layer_forward.3} parent=1 // loop_header_branch
      %14 = sbr.rel (%p12) target = $region8
    $region5: #{conv_layer_forward.3} parent=1 // loop_body
      %s16 = ssub.s32 %s11, 1
      %s17 = ssub.s32 %s11, 2
      %s24 = sadd.s32 1, %s19
      %p25 = scmp.ge.s32.totalorder %s24, 1
      %s26 = scalar_select %p25, 0, %s24
      %s27 = sadd.s32 1, %s18
      %s28 = scalar_select %p25, %s27, %s18
      %p29 = scmp.ge.s32.totalorder %s28, 2
      %s30 = scalar_select %p29, 0, %s28
      %s31 = ssub.s32 %s18, %s30
      %s32 = ssub.s32 %s19, %s26
      %s33 = sor.u32 %s31, %s32
      %p34 = scmp.eq.s32.totalorder %s33, 0
      %s36 = sadd.s32 %s35, 1
      %s37 = scalar_select %p34, %s35, %s36
      %p40 = pneg %p34
      %p41 = scmp.eq.s32.totalorder %s11, 1
      %p42 = por %p40, %p41
      %p43 = scmp.ne.s32.totalorder %s35, %s38
      %p44 = scmp.eq.s32.totalorder %s11, 0
      %p45 = por %p43, %p44
      %p46 = scmp.ne.s32.totalorder %s35, %s38
      %p47 = scmp.eq.s32.totalorder %s16, 1
      %p48 = por %p46, %p47
      %p49 = scmp.ne.s32.totalorder %s38, %s39
      %p50 = scmp.eq.s32.totalorder %s16, 0
      %p51 = por %p49, %p50
      %p52 = scmp.ne.s32.totalorder %s38, %s39
      %p53 = scmp.eq.s32.totalorder %s17, 1
      %p54 = por %p52, %p53
      %p56 = scmp.ne.s32.totalorder %s39, %s55
      %p57 = scmp.eq.s32.totalorder %s17, 0
      %p58 = por %p56, %p57
      %s60 = sadd.s32 %s59, 1
      %p63 = scmp.eq.s32.totalorder %s11, 1
      %p64 = scmp.ne.s32.totalorder %s59, %s61
      %p65 = scmp.eq.s32.totalorder %s11, 0
      %p66 = por %p64, %p65
      %p67 = scmp.ne.s32.totalorder %s59, %s61
      %p68 = scmp.eq.s32.totalorder %s16, 1
      %p69 = por %p67, %p68
      %p70 = scmp.ne.s32.totalorder %s61, %s62
      %p71 = scmp.eq.s32.totalorder %s16, 0
      %p72 = por %p70, %p71
      %p73 = scmp.ne.s32.totalorder %s61, %s62
      %p74 = scmp.eq.s32.totalorder %s17, 1
      %p75 = por %p73, %p74
      %p77 = scmp.ne.s32.totalorder %s62, %s76
      %p78 = scmp.eq.s32.totalorder %s17, 0
      %p79 = por %p77, %p78
      %s81 = sadd.s32 %s80, 1
      %p84 = scmp.eq.s32.totalorder %s11, 1
      %p85 = scmp.ne.s32.totalorder %s80, %s82
      %p86 = scmp.eq.s32.totalorder %s11, 0
      %p87 = por %p85, %p86
      %p88 = scmp.ne.s32.totalorder %s80, %s82
      %p89 = scmp.eq.s32.totalorder %s16, 1
      %p90 = por %p88, %p89
      %p91 = scmp.ne.s32.totalorder %s82, %s83
      %p92 = scmp.eq.s32.totalorder %s16, 0
      %p93 = por %p91, %p92
      %p94 = scmp.ne.s32.totalorder %s82, %s83
      %p95 = scmp.eq.s32.totalorder %s17, 1
      %p96 = por %p94, %p95
      %p98 = scmp.ne.s32.totalorder %s83, %s97
      %p99 = scmp.eq.s32.totalorder %s17, 0
      %p100 = por %p98, %p99
      %s102 = sadd.s32 %s101, 1
      %p105 = scmp.eq.s32.totalorder %s11, 1
      %p106 = scmp.ne.s32.totalorder %s101, %s103
      %p107 = scmp.eq.s32.totalorder %s11, 0
      %p108 = por %p106, %p107
      %p109 = scmp.ne.s32.totalorder %s101, %s103
      %p110 = scmp.eq.s32.totalorder %s16, 1
      %p111 = por %p109, %p110
      %p112 = scmp.ne.s32.totalorder %s103, %s104
      %p113 = scmp.eq.s32.totalorder %s16, 0
      %p114 = por %p112, %p113
      %p115 = scmp.ne.s32.totalorder %s103, %s104
      %p116 = scmp.eq.s32.totalorder %s17, 1
      %p117 = por %p115, %p116
      %p119 = scmp.ne.s32.totalorder %s104, %s118
      %p120 = scmp.eq.s32.totalorder %s17, 0
      %p121 = por %p119, %p120
      %p122 = scmp.le.s32.totalorder 1, %s11
      %p123 = scmp.lt.s32.totalorder %s11, 3
      %p124 = pnand %p122, %p123
      %p125 = pneg %p124
      // Predicated region
      $region9: #{conv_layer_forward.3} parent=5 // pred_check
        _
      $region10: #{conv_layer_forward.3} parent=5 // pred_check_branch
        %127 = sbr.rel (%p124) target = $region12
      $region11: #{conv_layer_forward.3} parent=5 // pred_region
        %s128 = ssub.s32 %s11, 1
        // Predicated region
        $region13: #{conv_layer_forward.3} parent=11 // pred_check
          %p129 = pneg %p72
        $region14: #{conv_layer_forward.3} parent=11 // pred_check_branch
          %131 = sbr.rel (%p129) target = $region16
        $region15: #{conv_layer_forward.3} parent=11 // pred_region
          %s133 = ssub.s32 1024, 1024
          %134 = vsyncadd [#allocation3], %s133
          %s135 = sshll.u32 [#allocation2], 4
          %s136 = int_to_ptr.vmem [resolvable:$true] %s135
          %141 = dma.hbm_to_vmem [thread:$0]  %s1, 1024, %s136, [#allocation3], 128, 128, 8
        $region16: #{conv_layer_forward.3} parent=11 // pred_fallthru
          _
      $region12: #{conv_layer_forward.3} parent=5 // pred_fallthru
        _
      %p142 = scmp.lt.s32.totalorder %s11, 2
      // Predicated region
      $region17: #{conv_layer_forward.3} parent=5 // pred_check
        %p143 = pneg %p142
      $region18: #{conv_layer_forward.3} parent=5 // pred_check_branch
        %145 = sbr.rel (%p143) target = $region20
      $region19: #{conv_layer_forward.3} parent=5 // pred_region
        // Predicated region
        $region21: #{conv_layer_forward.3} parent=19 // pred_check
          %p146 = pneg %p45
        $region22: #{conv_layer_forward.3} parent=19 // pred_check_branch
          %148 = sbr.rel (%p146) target = $region24
        $region23: #{conv_layer_forward.3} parent=19 // pred_region
          %s149 = smul.u32 2, %s19
          %p150 = scmp.lt.s32.totalorder %s18, 1
          %s151 = scalar_select %p150, %s18, 1
          %p152 = scmp.lt.s32.totalorder %s149, 1
          %s153 = scalar_select %p152, %s149, 1
          %s154 = smul.addr %s151, 2
          %s155 = sadd.s32 %s153, %s154
          %s156 = smul.addr %s155, 4
          %s157 = scalar_lea.vmem %s0, %s156
          %s158 = smul.u32 2, %s19
        $region24: #{conv_layer_forward.3} parent=19 // pred_fallthru
          _
      $region20: #{conv_layer_forward.3} parent=5 // pred_fallthru
        _
      %p159 = scmp.le.s32.totalorder 1, %s11
      %p160 = scmp.lt.s32.totalorder %s11, 3
      %p161 = pnand %p159, %p160
      %p162 = pneg %p161
      // Predicated region
      $region25: #{conv_layer_forward.3} parent=5 // pred_check
        _
      $region26: #{conv_layer_forward.3} parent=5 // pred_check_branch
        %164 = sbr.rel (%p161) target = $region28
      $region27: #{conv_layer_forward.3} parent=5 // pred_region
        %s165 = ssub.s32 %s11, 1
        // Predicated region
        $region29: #{conv_layer_forward.3} parent=27 // pred_check
          %p166 = pneg %p72
        $region30: #{conv_layer_forward.3} parent=27 // pred_check_branch
          %168 = sbr.rel (%p166) target = $region32
        $region31: #{conv_layer_forward.3} parent=27 // pred_region
          %169 = dma.done [#allocation3], 1024
        $region32: #{conv_layer_forward.3} parent=27 // pred_fallthru
          _
        %s170 = smul.u32 2, %s21
        %p171 = scmp.lt.s32.totalorder %s20, 1
        %s172 = scalar_select %p171, %s20, 1
        %p173 = scmp.lt.s32.totalorder %s170, 1
        %s174 = scalar_select %p173, %s170, 1
        %s175 = smul.addr %s172, 2
        %s176 = sadd.s32 %s174, %s175
        %s177 = smul.addr %s176, 4
        %s178 = scalar_lea.vmem %s0, %s177
        %p179 = pneg %p51
        %p180 = pneg %p48
        %p181 = pneg %p72
        %p182 = pneg %p69
        %p183 = pneg %p93
        %p184 = pneg %p90
        %p185 = pneg %p114
        %p186 = pneg %p111
        %s187 = smul.u32 2, %s21
        %p188 = scmp.lt.s32.totalorder %s20, 1
        %s189 = scalar_select %p188, %s20, 1
        %p190 = scmp.lt.s32.totalorder %s187, 1
        %s191 = scalar_select %p190, %s187, 1
        %s192 = smul.addr %s189, 2
        %s193 = sadd.s32 %s191, %s192
        %s194 = smul.addr %s193, 4
        %s195 = scalar_lea.vmem %s0, %s194
        %s196 = smul.u32 2, %s21
        %p197 = scmp.eq.s32.totalorder %s20, 0
        %p198 = scmp.eq.s32.totalorder %s21, 0
        %p199 = pnand %p197, %p198
        %p200 = pneg %p199
        // Predicated region
        $region33: #{conv_layer_forward.3} parent=27 // pred_check
          _
        $region34: #{conv_layer_forward.3} parent=27 // pred_check_branch
          %202 = sbr.rel (%p199) target = $region36
        $region35: #{conv_layer_forward.3} parent=27 // pred_region
          %vm203 = vcmask 7168
          %204 = vst.msk [vmem:[%s2] sm:$0xff] %vm203, 0.0
          %205 = vst.msk [vmem:[%s2 + $0x8] sm:$0xff] %vm203, 0.0
          %206 = vst.msk [vmem:[%s2 + $0x10] sm:$0xff] %vm203, 0.0
          %207 = vst.msk [vmem:[%s2 + $0x18] sm:$0xff] %vm203, 0.0
          %208 = vst.msk [vmem:[%s2 + $0x20] sm:$0xff] %vm203, 0.0
          %209 = vst.msk [vmem:[%s2 + $0x28] sm:$0xff] %vm203, 0.0
          %210 = vst.msk [vmem:[%s2 + $0x30] sm:$0xff] %vm203, 0.0
          %211 = vst.msk [vmem:[%s2 + $0x38] sm:$0xff] %vm203, 0.0
          %212 = vst.msk [vmem:[%s3] sm:$0xff] %vm203, 0.0
          %213 = vst.msk [vmem:[%s3 + $0x8] sm:$0xff] %vm203, 0.0
          %214 = vst.msk [vmem:[%s3 + $0x10] sm:$0xff] %vm203, 0.0
          %215 = vst.msk [vmem:[%s3 + $0x18] sm:$0xff] %vm203, 0.0
          %216 = vst.msk [vmem:[%s3 + $0x20] sm:$0xff] %vm203, 0.0
          %217 = vst.msk [vmem:[%s3 + $0x28] sm:$0xff] %vm203, 0.0
          %218 = vst.msk [vmem:[%s3 + $0x30] sm:$0xff] %vm203, 0.0
          %219 = vst.msk [vmem:[%s3 + $0x38] sm:$0xff] %vm203, 0.0
        $region36: #{conv_layer_forward.3} parent=27 // pred_fallthru
          _
        %v220 = vld [vmem:[%s195] sm:$0x77]
        %v221 = vld [vmem:[#allocation2] sm:$0xff]
        %v222 = vld [vmem:[#allocation2 + $0x8] sm:$0xff]
        %v223 = vld [vmem:[#allocation2 + $0x10] sm:$0xff]
        %v224 = vld [vmem:[#allocation2 + $0x18] sm:$0xff]
        %v225 = vld [vmem:[#allocation2 + $0x20] sm:$0xff]
        %v226 = vld [vmem:[#allocation2 + $0x28] sm:$0xff]
        %v227 = vld [vmem:[#allocation2 + $0x30] sm:$0xff]
        %v228 = vld [vmem:[#allocation2 + $0x38] sm:$0xff]
        %230 = vset.pattern.permute.xlu0 0
        %231 = vperm.xlu0 %230, %v221
        %v232 = vpop.permute.xlu0 %231
        %235 = vset.pattern.permute.xlu0 0
        %236 = vperm.xlu0 %235, %v222
        %v237 = vpop.permute.xlu0 %236
        %240 = vset.pattern.permute.xlu0 0
        %241 = vperm.xlu0 %240, %v223
        %v242 = vpop.permute.xlu0 %241
        %245 = vset.pattern.permute.xlu0 0
        %246 = vperm.xlu0 %245, %v224
        %v247 = vpop.permute.xlu0 %246
        %250 = vset.pattern.permute.xlu0 0
        %251 = vperm.xlu0 %250, %v225
        %v252 = vpop.permute.xlu0 %251
        %255 = vset.pattern.permute.xlu0 0
        %256 = vperm.xlu0 %255, %v226
        %v257 = vpop.permute.xlu0 %256
        %260 = vset.pattern.permute.xlu0 0
        %261 = vperm.xlu0 %260, %v227
        %v262 = vpop.permute.xlu0 %261
        %265 = vset.pattern.permute.xlu0 0
        %266 = vperm.xlu0 %265, %v228
        %v267 = vpop.permute.xlu0 %266
        %v270 = vlaneseq
        %v271 = vshrl.u32 %v270, 7
        %v272 = vsub.s32 0, %v271
        %v273 = vrot.slane %v220, %v272
        %v274 = vlaneseq
        %v275 = vshrl.u32 %v274, 7
        %v276 = vsub.s32 4, %v275
        %v277 = vrot.slane %v220, %v276
        %v280 = vlaneseq
        %v281 = vshrl.u32 %v280, 7
        %v282 = vsub.s32 0, %v281
        %v283 = vrot.slane %v273, %v282
        %v284 = vlaneseq
        %v285 = vshrl.u32 %v284, 7
        %v286 = vsub.s32 0, %v285
        %v287 = vrot.slane %v277, %v286
        %v288 = vmul.f32 %v232, %v283
        %v289 = vmul.f32 %v232, %v287
        %v290 = vmul.f32 %v237, %v283
        %v291 = vmul.f32 %v237, %v287
        %v292 = vmul.f32 %v242, %v283
        %v293 = vmul.f32 %v242, %v287
        %v294 = vmul.f32 %v247, %v283
        %v295 = vmul.f32 %v247, %v287
        %v296 = vmul.f32 %v252, %v283
        %v297 = vmul.f32 %v252, %v287
        %v298 = vmul.f32 %v257, %v283
        %v299 = vmul.f32 %v257, %v287
        %v300 = vmul.f32 %v262, %v283
        %v301 = vmul.f32 %v262, %v287
        %v302 = vmul.f32 %v267, %v283
        %v303 = vmul.f32 %v267, %v287
        %304 = vset.pattern.permute.xlu0 1
        %305 = vperm.xlu0 %304, %v221
        %v306 = vpop.permute.xlu0 %305
        %308 = vset.pattern.permute.xlu0 1
        %309 = vperm.xlu0 %308, %v222
        %v310 = vpop.permute.xlu0 %309
        %312 = vset.pattern.permute.xlu0 1
        %313 = vperm.xlu0 %312, %v223
        %v314 = vpop.permute.xlu0 %313
        %316 = vset.pattern.permute.xlu0 1
        %317 = vperm.xlu0 %316, %v224
        %v318 = vpop.permute.xlu0 %317
        %320 = vset.pattern.permute.xlu0 1
        %321 = vperm.xlu0 %320, %v225
        %v322 = vpop.permute.xlu0 %321
        %324 = vset.pattern.permute.xlu0 1
        %325 = vperm.xlu0 %324, %v226
        %v326 = vpop.permute.xlu0 %325
        %328 = vset.pattern.permute.xlu0 1
        %329 = vperm.xlu0 %328, %v227
        %v330 = vpop.permute.xlu0 %329
        %332 = vset.pattern.permute.xlu0 1
        %333 = vperm.xlu0 %332, %v228
        %v334 = vpop.permute.xlu0 %333
        %v336 = vlaneseq
        %v337 = vshrl.u32 %v336, 7
        %v338 = vsub.s32 1, %v337
        %v339 = vrot.slane %v220, %v338
        %v340 = vlaneseq
        %v341 = vshrl.u32 %v340, 7
        %v342 = vsub.s32 5, %v341
        %v343 = vrot.slane %v220, %v342
        %v346 = vlaneseq
        %v347 = vshrl.u32 %v346, 7
        %v348 = vsub.s32 1, %v347
        %v349 = vrot.slane %v339, %v348
        %v350 = vlaneseq
        %v351 = vshrl.u32 %v350, 7
        %v352 = vsub.s32 1, %v351
        %v353 = vrot.slane %v343, %v352
        %v354 = vmul.f32 %v306, %v349
        %v355 = vmul.f32 %v306, %v353
        %v356 = vmul.f32 %v310, %v349
        %v357 = vmul.f32 %v310, %v353
        %v358 = vmul.f32 %v314, %v349
        %v359 = vmul.f32 %v314, %v353
        %v360 = vmul.f32 %v318, %v349
        %v361 = vmul.f32 %v318, %v353
        %v362 = vmul.f32 %v322, %v349
        %v363 = vmul.f32 %v322, %v353
        %v364 = vmul.f32 %v326, %v349
        %v365 = vmul.f32 %v326, %v353
        %v366 = vmul.f32 %v330, %v349
        %v367 = vmul.f32 %v330, %v353
        %v368 = vmul.f32 %v334, %v349
        %v369 = vmul.f32 %v334, %v353
        %v370 = vadd.f32 %v288, %v354
        %v371 = vadd.f32 %v289, %v355
        %v372 = vadd.f32 %v290, %v356
        %v373 = vadd.f32 %v291, %v357
        %v374 = vadd.f32 %v292, %v358
        %v375 = vadd.f32 %v293, %v359
        %v376 = vadd.f32 %v294, %v360
        %v377 = vadd.f32 %v295, %v361
        %v378 = vadd.f32 %v296, %v362
        %v379 = vadd.f32 %v297, %v363
        %v380 = vadd.f32 %v298, %v364
        %v381 = vadd.f32 %v299, %v365
        %v382 = vadd.f32 %v300, %v366
        %v383 = vadd.f32 %v301, %v367
        %v384 = vadd.f32 %v302, %v368
        %v385 = vadd.f32 %v303, %v369
        %386 = vset.pattern.permute.xlu0 2
        %387 = vperm.xlu0 %386, %v221
        %v388 = vpop.permute.xlu0 %387
        %390 = vset.pattern.permute.xlu0 2
        %391 = vperm.xlu0 %390, %v222
        %v392 = vpop.permute.xlu0 %391
        %394 = vset.pattern.permute.xlu0 2
        %395 = vperm.xlu0 %394, %v223
        %v396 = vpop.permute.xlu0 %395
        %398 = vset.pattern.permute.xlu0 2
        %399 = vperm.xlu0 %398, %v224
        %v400 = vpop.permute.xlu0 %399
        %402 = vset.pattern.permute.xlu0 2
        %403 = vperm.xlu0 %402, %v225
        %v404 = vpop.permute.xlu0 %403
        %406 = vset.pattern.permute.xlu0 2
        %407 = vperm.xlu0 %406, %v226
        %v408 = vpop.permute.xlu0 %407
        %410 = vset.pattern.permute.xlu0 2
        %411 = vperm.xlu0 %410, %v227
        %v412 = vpop.permute.xlu0 %411
        %414 = vset.pattern.permute.xlu0 2
        %415 = vperm.xlu0 %414, %v228
        %v416 = vpop.permute.xlu0 %415
        %v418 = vlaneseq
        %v419 = vshrl.u32 %v418, 7
        %v420 = vsub.s32 2, %v419
        %v421 = vrot.slane %v220, %v420
        %v422 = vlaneseq
        %v423 = vshrl.u32 %v422, 7
        %v424 = vsub.s32 6, %v423
        %v425 = vrot.slane %v220, %v424
        %v428 = vlaneseq
        %v429 = vshrl.u32 %v428, 7
        %v430 = vsub.s32 2, %v429
        %v431 = vrot.slane %v421, %v430
        %v432 = vlaneseq
        %v433 = vshrl.u32 %v432, 7
        %v434 = vsub.s32 2, %v433
        %v435 = vrot.slane %v425, %v434
        %v436 = vmul.f32 %v388, %v431
        %v437 = vmul.f32 %v388, %v435
        %v438 = vmul.f32 %v392, %v431
        %v439 = vmul.f32 %v392, %v435
        %v440 = vmul.f32 %v396, %v431
        %v441 = vmul.f32 %v396, %v435
        %v442 = vmul.f32 %v400, %v431
        %v443 = vmul.f32 %v400, %v435
        %v444 = vmul.f32 %v404, %v431
        %v445 = vmul.f32 %v404, %v435
        %v446 = vmul.f32 %v408, %v431
        %v447 = vmul.f32 %v408, %v435
        %v448 = vmul.f32 %v412, %v431
        %v449 = vmul.f32 %v412, %v435
        %v450 = vmul.f32 %v416, %v431
        %v451 = vmul.f32 %v416, %v435
        %v452 = vadd.f32 %v370, %v436
        %v453 = vadd.f32 %v371, %v437
        %v454 = vadd.f32 %v372, %v438
        %v455 = vadd.f32 %v373, %v439
        %v456 = vadd.f32 %v374, %v440
        %v457 = vadd.f32 %v375, %v441
        %v458 = vadd.f32 %v376, %v442
        %v459 = vadd.f32 %v377, %v443
        %v460 = vadd.f32 %v378, %v444
        %v461 = vadd.f32 %v379, %v445
        %v462 = vadd.f32 %v380, %v446
        %v463 = vadd.f32 %v381, %v447
        %v464 = vadd.f32 %v382, %v448
        %v465 = vadd.f32 %v383, %v449
        %v466 = vadd.f32 %v384, %v450
        %v467 = vadd.f32 %v385, %v451
        %v468 = vld [vmem:[%s2] sm:$0xff]
        %v469 = vld [vmem:[%s2 + $0x8] sm:$0xff]
        %v470 = vld [vmem:[%s2 + $0x10] sm:$0xff]
        %v471 = vld [vmem:[%s2 + $0x18] sm:$0xff]
        %v472 = vld [vmem:[%s2 + $0x20] sm:$0xff]
        %v473 = vld [vmem:[%s2 + $0x28] sm:$0xff]
        %v474 = vld [vmem:[%s2 + $0x30] sm:$0xff]
        %v475 = vld [vmem:[%s2 + $0x38] sm:$0xff]
        %v476 = vadd.f32 %v452, %v453
        %477 = vadd.xlane.f32.xlu0 %v476
        %v478 = vpop.xlane.xlu0 %477
        %v479 = vadd.f32 %v454, %v455
        %480 = vadd.xlane.f32.xlu0 %v479
        %v481 = vpop.xlane.xlu0 %480
        %v482 = vadd.f32 %v456, %v457
        %483 = vadd.xlane.f32.xlu0 %v482
        %v484 = vpop.xlane.xlu0 %483
        %v485 = vadd.f32 %v458, %v459
        %486 = vadd.xlane.f32.xlu0 %v485
        %v487 = vpop.xlane.xlu0 %486
        %v488 = vadd.f32 %v460, %v461
        %489 = vadd.xlane.f32.xlu0 %v488
        %v490 = vpop.xlane.xlu0 %489
        %v491 = vadd.f32 %v462, %v463
        %492 = vadd.xlane.f32.xlu0 %v491
        %v493 = vpop.xlane.xlu0 %492
        %v494 = vadd.f32 %v464, %v465
        %495 = vadd.xlane.f32.xlu0 %v494
        %v496 = vpop.xlane.xlu0 %495
        %v497 = vadd.f32 %v466, %v467
        %498 = vadd.xlane.f32.xlu0 %v497
        %v499 = vpop.xlane.xlu0 %498
        %v500 = vadd.f32 %v468, %v478
        %v501 = vadd.f32 %v469, %v481
        %v502 = vadd.f32 %v470, %v484
        %v503 = vadd.f32 %v471, %v487
        %v504 = vadd.f32 %v472, %v490
        %v505 = vadd.f32 %v473, %v493
        %v506 = vadd.f32 %v474, %v496
        %v507 = vadd.f32 %v475, %v499
        %vm508 = vcmask 7168
        %509 = vst.msk [vmem:[%s2] sm:$0xff] %vm508, %v500
        %510 = vst.msk [vmem:[%s2 + $0x8] sm:$0xff] %vm508, %v501
        %511 = vst.msk [vmem:[%s2 + $0x10] sm:$0xff] %vm508, %v502
        %512 = vst.msk [vmem:[%s2 + $0x18] sm:$0xff] %vm508, %v503
        %513 = vst.msk [vmem:[%s2 + $0x20] sm:$0xff] %vm508, %v504
        %514 = vst.msk [vmem:[%s2 + $0x28] sm:$0xff] %vm508, %v505
        %515 = vst.msk [vmem:[%s2 + $0x30] sm:$0xff] %vm508, %v506
        %516 = vst.msk [vmem:[%s2 + $0x38] sm:$0xff] %vm508, %v507
        %v517 = vld [vmem:[%s3] sm:$0xff]
        %v518 = vld [vmem:[%s3 + $0x8] sm:$0xff]
        %v519 = vld [vmem:[%s3 + $0x10] sm:$0xff]
        %v520 = vld [vmem:[%s3 + $0x18] sm:$0xff]
        %v521 = vld [vmem:[%s3 + $0x20] sm:$0xff]
        %v522 = vld [vmem:[%s3 + $0x28] sm:$0xff]
        %v523 = vld [vmem:[%s3 + $0x30] sm:$0xff]
        %v524 = vld [vmem:[%s3 + $0x38] sm:$0xff]
        %v525 = vmul.f32 %v452, %v452
        %v526 = vmul.f32 %v453, %v453
        %v527 = vmul.f32 %v454, %v454
        %v528 = vmul.f32 %v455, %v455
        %v529 = vmul.f32 %v456, %v456
        %v530 = vmul.f32 %v457, %v457
        %v531 = vmul.f32 %v458, %v458
        %v532 = vmul.f32 %v459, %v459
        %v533 = vmul.f32 %v460, %v460
        %v534 = vmul.f32 %v461, %v461
        %v535 = vmul.f32 %v462, %v462
        %v536 = vmul.f32 %v463, %v463
        %v537 = vmul.f32 %v464, %v464
        %v538 = vmul.f32 %v465, %v465
        %v539 = vmul.f32 %v466, %v466
        %v540 = vmul.f32 %v467, %v467
        %v541 = vadd.f32 %v525, %v526
        %542 = vadd.xlane.f32.xlu0 %v541
        %v543 = vpop.xlane.xlu0 %542
        %v544 = vadd.f32 %v527, %v528
        %545 = vadd.xlane.f32.xlu0 %v544
        %v546 = vpop.xlane.xlu0 %545
        %v547 = vadd.f32 %v529, %v530
        %548 = vadd.xlane.f32.xlu0 %v547
        %v549 = vpop.xlane.xlu0 %548
        %v550 = vadd.f32 %v531, %v532
        %551 = vadd.xlane.f32.xlu0 %v550
        %v552 = vpop.xlane.xlu0 %551
        %v553 = vadd.f32 %v533, %v534
        %554 = vadd.xlane.f32.xlu0 %v553
        %v555 = vpop.xlane.xlu0 %554
        %v556 = vadd.f32 %v535, %v536
        %557 = vadd.xlane.f32.xlu0 %v556
        %v558 = vpop.xlane.xlu0 %557
        %v559 = vadd.f32 %v537, %v538
        %560 = vadd.xlane.f32.xlu0 %v559
        %v561 = vpop.xlane.xlu0 %560
        %v562 = vadd.f32 %v539, %v540
        %563 = vadd.xlane.f32.xlu0 %v562
        %v564 = vpop.xlane.xlu0 %563
        %v565 = vadd.f32 %v517, %v543
        %v566 = vadd.f32 %v518, %v546
        %v567 = vadd.f32 %v519, %v549
        %v568 = vadd.f32 %v520, %v552
        %v569 = vadd.f32 %v521, %v555
        %v570 = vadd.f32 %v522, %v558
        %v571 = vadd.f32 %v523, %v561
        %v572 = vadd.f32 %v524, %v564
        %573 = vst.msk [vmem:[%s3] sm:$0xff] %vm508, %v565
        %574 = vst.msk [vmem:[%s3 + $0x8] sm:$0xff] %vm508, %v566
        %575 = vst.msk [vmem:[%s3 + $0x10] sm:$0xff] %vm508, %v567
        %576 = vst.msk [vmem:[%s3 + $0x18] sm:$0xff] %vm508, %v568
        %577 = vst.msk [vmem:[%s3 + $0x20] sm:$0xff] %vm508, %v569
        %578 = vst.msk [vmem:[%s3 + $0x28] sm:$0xff] %vm508, %v570
        %579 = vst.msk [vmem:[%s3 + $0x30] sm:$0xff] %vm508, %v571
        %580 = vst.msk [vmem:[%s3 + $0x38] sm:$0xff] %vm508, %v572
        // Predicated region
        $region37: #{conv_layer_forward.3} parent=27 // pred_check
          %p581 = pneg %p90
        $region38: #{conv_layer_forward.3} parent=27 // pred_check_branch
          %583 = sbr.rel (%p581) target = $region40
        $region39: #{conv_layer_forward.3} parent=27 // pred_region
          _
        $region40: #{conv_layer_forward.3} parent=27 // pred_fallthru
          _
        // Predicated region
        $region41: #{conv_layer_forward.3} parent=27 // pred_check
          %p584 = pneg %p111
        $region42: #{conv_layer_forward.3} parent=27 // pred_check_branch
          %586 = sbr.rel (%p584) target = $region44
        $region43: #{conv_layer_forward.3} parent=27 // pred_region
          _
        $region44: #{conv_layer_forward.3} parent=27 // pred_fallthru
          _
        // Predicated region
        $region45: #{conv_layer_forward.3} parent=27 // pred_check
          %p587 = pneg %p90
        $region46: #{conv_layer_forward.3} parent=27 // pred_check_branch
          %589 = sbr.rel (%p587) target = $region48
        $region47: #{conv_layer_forward.3} parent=27 // pred_region
          _
        $region48: #{conv_layer_forward.3} parent=27 // pred_fallthru
          _
        // Predicated region
        $region49: #{conv_layer_forward.3} parent=27 // pred_check
          %p590 = pneg %p111
        $region50: #{conv_layer_forward.3} parent=27 // pred_check_branch
          %592 = sbr.rel (%p590) target = $region52
        $region51: #{conv_layer_forward.3} parent=27 // pred_region
          _
        $region52: #{conv_layer_forward.3} parent=27 // pred_fallthru
          _
      $region28: #{conv_layer_forward.3} parent=5 // pred_fallthru
        _
      %p593 = scmp.le.s32.totalorder 2, %s11
      // Predicated region
      $region53: #{conv_layer_forward.3} parent=5 // pred_check
        %p594 = pneg %p593
      $region54: #{conv_layer_forward.3} parent=5 // pred_check_branch
        %596 = sbr.rel (%p594) target = $region56
      $region55: #{conv_layer_forward.3} parent=5 // pred_region
        %s597 = ssub.s32 %s11, 2
      $region56: #{conv_layer_forward.3} parent=5 // pred_fallthru
        _
    $region6: #{conv_layer_forward.3} parent=1 // loop_footer
      %s15 = sadd.s32 1, %s11
    $region7: #{conv_layer_forward.3} parent=1 // loop_footer_branch
      %10 = sbr.rel target = $region3
    $region8: #{conv_layer_forward.3} parent=1 // loop_exit
      _
    %598 = vsyncpa [#allocation3], 1
    %s599 = scalar_lea.sflag [#allocation3], 1
    %600 = vsyncpa %s599, 1

// kernel: conv_layer_forward.4
$region0: #{conv_layer_forward.4}
  #allocation0 [shape = 'u32[]', space=smem, size = 0x4, offset = 0x4, fixed_abs, tag = 'smem constant byte address 0x4 - core index']
  #allocation1 [shape = 'u32[144,128]{1,0:T(1,128)}', space=vmem, size = 0x12000, scoped, tag = 'internal scratch']
  %s0 = inlined_call_operand.vmem [shape: f32[2,3,256], index: 0, kind: input, shape index: {}]
  %s1 = inlined_call_operand.vmem [shape: f32[64,3], index: 1, kind: input, shape index: {}]
  %s2 = inlined_call_operand.vmem [shape: f32[64,1], index: 2, kind: input, shape index: {}]
  %s3 = inlined_call_operand.vmem [shape: f32[64,1], index: 3, kind: input, shape index: {}]
  %s4 = inlined_call_operand.vmem [shape: bf16[128,64], index: 4, kind: input, shape index: {}]
  %s5 = inlined_call_operand.vmem [shape: f32[128,1], index: 5, kind: output, shape index: {0}]
  %s6 = inlined_call_operand.vmem [shape: f32[128,1], index: 6, kind: output, shape index: {1}]
  %7 = xla_tuple %s5, %s6
  %s8 = sld [smem:[#allocation0]]
  $region65: #{conv_layer_forward.4} parent=0
    _
  %s10 = ssub.s32 1, %s8
  %s11 = scalar_select 0, %s10, %s8
  loop: start=0, step=1, limit=4
  $region2: #{conv_layer_forward.4} parent=0 // loop_pre_header
    _
  $region3: #{conv_layer_forward.4} parent=0 // loop_header
    %s13 = sphi 0, %s17
    %p14 = scmp.ge.s32.totalorder %s13, 4
    %s20 = sphi 0, %s32
    %s21 = sphi 0, %s28
    %s22 = sphi 0, %s20
    %s23 = sphi 0, %s21
    %s24 = sphi 0, %s22
    %s25 = sphi 0, %s23
    %s37 = sphi 0, %s39
    %s40 = sphi 0, %s37
    %s41 = sphi 0, %s40
    %s57 = sphi 0, %s41
    %s61 = sphi 0, %s61
    %s63 = sphi 0, %s61
    %s64 = sphi 0, %s63
    %s78 = sphi 0, %s64
    %s82 = sphi 0, %s82
    %s84 = sphi 0, %s82
    %s85 = sphi 0, %s84
    %s99 = sphi 0, %s85
    %s103 = sphi 0, %s103
    %s105 = sphi 0, %s103
    %s106 = sphi 0, %s105
    %s120 = sphi 0, %s106
    %s124 = sphi 0, %s124
    %s126 = sphi 0, %s124
    %s127 = sphi 0, %s126
    %s141 = sphi 0, %s127
    %s145 = sphi 0, %s145
    %s147 = sphi 0, %s145
    %s148 = sphi 0, %s147
    %s162 = sphi 0, %s148
    %s166 = sphi 0, %s166
    %s168 = sphi 0, %s166
    %s169 = sphi 0, %s168
    %s183 = sphi 0, %s169
  $region4: #{conv_layer_forward.4} parent=0 // loop_header_branch
    %16 = sbr.rel (%p14) target = $region8
  $region5: #{conv_layer_forward.4} parent=0 // loop_body
    %s18 = ssub.s32 %s13, 1
    %s19 = ssub.s32 %s13, 2
    %s26 = sadd.s32 1, %s21
    %p27 = scmp.ge.s32.totalorder %s26, 1
    %s28 = scalar_select %p27, 0, %s26
    %s29 = sadd.s32 1, %s20
    %s30 = scalar_select %p27, %s29, %s20
    %p31 = scmp.ge.s32.totalorder %s30, 2
    %s32 = scalar_select %p31, 0, %s30
    %s33 = ssub.s32 %s20, %s32
    %s34 = ssub.s32 %s21, %s28
    %s35 = sor.u32 %s33, %s34
    %p36 = scmp.eq.s32.totalorder %s35, 0
    %s38 = sadd.s32 %s37, 1
    %s39 = scalar_select %p36, %s37, %s38
    %p42 = pneg %p36
    %p43 = scmp.eq.s32.totalorder %s13, 1
    %p44 = por %p42, %p43
    %p45 = scmp.ne.s32.totalorder %s37, %s40
    %p46 = scmp.eq.s32.totalorder %s13, 0
    %p47 = por %p45, %p46
    %p48 = scmp.ne.s32.totalorder %s37, %s40
    %p49 = scmp.eq.s32.totalorder %s18, 1
    %p50 = por %p48, %p49
    %p51 = scmp.ne.s32.totalorder %s40, %s41
    %p52 = scmp.eq.s32.totalorder %s18, 0
    %p53 = por %p51, %p52
    %p54 = scmp.ne.s32.totalorder %s40, %s41
    %p55 = scmp.eq.s32.totalorder %s19, 1
    %p56 = por %p54, %p55
    %p58 = scmp.ne.s32.totalorder %s41, %s57
    %p59 = scmp.eq.s32.totalorder %s19, 0
    %p60 = por %p58, %p59
    %s62 = sadd.s32 %s61, 1
    %p65 = scmp.eq.s32.totalorder %s13, 1
    %p66 = scmp.ne.s32.totalorder %s61, %s63
    %p67 = scmp.eq.s32.totalorder %s13, 0
    %p68 = por %p66, %p67
    %p69 = scmp.ne.s32.totalorder %s61, %s63
    %p70 = scmp.eq.s32.totalorder %s18, 1
    %p71 = por %p69, %p70
    %p72 = scmp.ne.s32.totalorder %s63, %s64
    %p73 = scmp.eq.s32.totalorder %s18, 0
    %p74 = por %p72, %p73
    %p75 = scmp.ne.s32.totalorder %s63, %s64
    %p76 = scmp.eq.s32.totalorder %s19, 1
    %p77 = por %p75, %p76
    %p79 = scmp.ne.s32.totalorder %s64, %s78
    %p80 = scmp.eq.s32.totalorder %s19, 0
    %p81 = por %p79, %p80
    %s83 = sadd.s32 %s82, 1
    %p86 = scmp.eq.s32.totalorder %s13, 1
    %p87 = scmp.ne.s32.totalorder %s82, %s84
    %p88 = scmp.eq.s32.totalorder %s13, 0
    %p89 = por %p87, %p88
    %p90 = scmp.ne.s32.totalorder %s82, %s84
    %p91 = scmp.eq.s32.totalorder %s18, 1
    %p92 = por %p90, %p91
    %p93 = scmp.ne.s32.totalorder %s84, %s85
    %p94 = scmp.eq.s32.totalorder %s18, 0
    %p95 = por %p93, %p94
    %p96 = scmp.ne.s32.totalorder %s84, %s85
    %p97 = scmp.eq.s32.totalorder %s19, 1
    %p98 = por %p96, %p97
    %p100 = scmp.ne.s32.totalorder %s85, %s99
    %p101 = scmp.eq.s32.totalorder %s19, 0
    %p102 = por %p100, %p101
    %s104 = sadd.s32 %s103, 1
    %p107 = scmp.eq.s32.totalorder %s13, 1
    %p108 = scmp.ne.s32.totalorder %s103, %s105
    %p109 = scmp.eq.s32.totalorder %s13, 0
    %p110 = por %p108, %p109
    %p111 = scmp.ne.s32.totalorder %s103, %s105
    %p112 = scmp.eq.s32.totalorder %s18, 1
    %p113 = por %p111, %p112
    %p114 = scmp.ne.s32.totalorder %s105, %s106
    %p115 = scmp.eq.s32.totalorder %s18, 0
    %p116 = por %p114, %p115
    %p117 = scmp.ne.s32.totalorder %s105, %s106
    %p118 = scmp.eq.s32.totalorder %s19, 1
    %p119 = por %p117, %p118
    %p121 = scmp.ne.s32.totalorder %s106, %s120
    %p122 = scmp.eq.s32.totalorder %s19, 0
    %p123 = por %p121, %p122
    %s125 = sadd.s32 %s124, 1
    %p128 = scmp.eq.s32.totalorder %s13, 1
    %p129 = scmp.ne.s32.totalorder %s124, %s126
    %p130 = scmp.eq.s32.totalorder %s13, 0
    %p131 = por %p129, %p130
    %p132 = scmp.ne.s32.totalorder %s124, %s126
    %p133 = scmp.eq.s32.totalorder %s18, 1
    %p134 = por %p132, %p133
    %p135 = scmp.ne.s32.totalorder %s126, %s127
    %p136 = scmp.eq.s32.totalorder %s18, 0
    %p137 = por %p135, %p136
    %p138 = scmp.ne.s32.totalorder %s126, %s127
    %p139 = scmp.eq.s32.totalorder %s19, 1
    %p140 = por %p138, %p139
    %p142 = scmp.ne.s32.totalorder %s127, %s141
    %p143 = scmp.eq.s32.totalorder %s19, 0
    %p144 = por %p142, %p143
    %s146 = sadd.s32 %s145, 1
    %p149 = scmp.eq.s32.totalorder %s13, 1
    %p150 = scmp.ne.s32.totalorder %s145, %s147
    %p151 = scmp.eq.s32.totalorder %s13, 0
    %p152 = por %p150, %p151
    %p153 = scmp.ne.s32.totalorder %s145, %s147
    %p154 = scmp.eq.s32.totalorder %s18, 1
    %p155 = por %p153, %p154
    %p156 = scmp.ne.s32.totalorder %s147, %s148
    %p157 = scmp.eq.s32.totalorder %s18, 0
    %p158 = por %p156, %p157
    %p159 = scmp.ne.s32.totalorder %s147, %s148
    %p160 = scmp.eq.s32.totalorder %s19, 1
    %p161 = por %p159, %p160
    %p163 = scmp.ne.s32.totalorder %s148, %s162
    %p164 = scmp.eq.s32.totalorder %s19, 0
    %p165 = por %p163, %p164
    %s167 = sadd.s32 %s166, 1
    %p170 = scmp.eq.s32.totalorder %s13, 1
    %p171 = scmp.ne.s32.totalorder %s166, %s168
    %p172 = scmp.eq.s32.totalorder %s13, 0
    %p173 = por %p171, %p172
    %p174 = scmp.ne.s32.totalorder %s166, %s168
    %p175 = scmp.eq.s32.totalorder %s18, 1
    %p176 = por %p174, %p175
    %p177 = scmp.ne.s32.totalorder %s168, %s169
    %p178 = scmp.eq.s32.totalorder %s18, 0
    %p179 = por %p177, %p178
    %p180 = scmp.ne.s32.totalorder %s168, %s169
    %p181 = scmp.eq.s32.totalorder %s19, 1
    %p182 = por %p180, %p181
    %p184 = scmp.ne.s32.totalorder %s169, %s183
    %p185 = scmp.eq.s32.totalorder %s19, 0
    %p186 = por %p184, %p185
    %p187 = scmp.le.s32.totalorder 1, %s13
    %p188 = scmp.lt.s32.totalorder %s13, 3
    %p189 = pnand %p187, %p188
    %p190 = pneg %p189
    // Predicated region
    $region9: #{conv_layer_forward.4} parent=5 // pred_check
      _
    $region10: #{conv_layer_forward.4} parent=5 // pred_check_branch
      %192 = sbr.rel (%p189) target = $region12
    $region11: #{conv_layer_forward.4} parent=5 // pred_region
      %s193 = ssub.s32 %s13, 1
      // Predicated region
      $region13: #{conv_layer_forward.4} parent=11 // pred_check
        %p194 = pneg %p74
      $region14: #{conv_layer_forward.4} parent=11 // pred_check_branch
        %196 = sbr.rel (%p194) target = $region16
      $region15: #{conv_layer_forward.4} parent=11 // pred_region
        _
      $region16: #{conv_layer_forward.4} parent=11 // pred_fallthru
        _
      // Predicated region
      $region17: #{conv_layer_forward.4} parent=11 // pred_check
        %p197 = pneg %p95
      $region18: #{conv_layer_forward.4} parent=11 // pred_check_branch
        %199 = sbr.rel (%p197) target = $region20
      $region19: #{conv_layer_forward.4} parent=11 // pred_region
        _
      $region20: #{conv_layer_forward.4} parent=11 // pred_fallthru
        _
      // Predicated region
      $region21: #{conv_layer_forward.4} parent=11 // pred_check
        %p200 = pneg %p116
      $region22: #{conv_layer_forward.4} parent=11 // pred_check_branch
        %202 = sbr.rel (%p200) target = $region24
      $region23: #{conv_layer_forward.4} parent=11 // pred_region
        _
      $region24: #{conv_layer_forward.4} parent=11 // pred_fallthru
        _
      // Predicated region
      $region25: #{conv_layer_forward.4} parent=11 // pred_check
        %p203 = pneg %p137
      $region26: #{conv_layer_forward.4} parent=11 // pred_check_branch
        %205 = sbr.rel (%p203) target = $region28
      $region27: #{conv_layer_forward.4} parent=11 // pred_region
        _
      $region28: #{conv_layer_forward.4} parent=11 // pred_fallthru
        _
    $region12: #{conv_layer_forward.4} parent=5 // pred_fallthru
      _
    %p206 = scmp.lt.s32.totalorder %s13, 2
    // Predicated region
    $region29: #{conv_layer_forward.4} parent=5 // pred_check
      %p207 = pneg %p206
    $region30: #{conv_layer_forward.4} parent=5 // pred_check_branch
      %209 = sbr.rel (%p207) target = $region32
    $region31: #{conv_layer_forward.4} parent=5 // pred_region
      // Predicated region
      $region33: #{conv_layer_forward.4} parent=31 // pred_check
        %p210 = pneg %p47
      $region34: #{conv_layer_forward.4} parent=31 // pred_check_branch
        %212 = sbr.rel (%p210) target = $region36
      $region35: #{conv_layer_forward.4} parent=31 // pred_region
        %s213 = smul.u32 2, %s21
        %p214 = scmp.lt.s32.totalorder %s20, 1
        %s215 = scalar_select %p214, %s20, 1
        %p216 = scmp.lt.s32.totalorder %s213, 1
        %s217 = scalar_select %p216, %s213, 1
        %s218 = smul.addr %s215, 2
        %s219 = sadd.s32 %s217, %s218
        %s220 = smul.addr %s219, 4
        %s221 = scalar_lea.vmem %s0, %s220
        %s222 = smul.u32 2, %s21
      $region36: #{conv_layer_forward.4} parent=31 // pred_fallthru
        _
    $region32: #{conv_layer_forward.4} parent=5 // pred_fallthru
      _
    %p223 = scmp.le.s32.totalorder 1, %s13
    %p224 = scmp.lt.s32.totalorder %s13, 3
    %p225 = pnand %p223, %p224
    %p226 = pneg %p225
    // Predicated region
    $region37: #{conv_layer_forward.4} parent=5 // pred_check
      _
    $region38: #{conv_layer_forward.4} parent=5 // pred_check_branch
      %228 = sbr.rel (%p225) target = $region40
    $region39: #{conv_layer_forward.4} parent=5 // pred_region
      %s229 = ssub.s32 %s13, 1
      %s230 = smul.u32 2, %s23
      %p231 = scmp.lt.s32.totalorder %s22, 1
      %s232 = scalar_select %p231, %s22, 1
      %p233 = scmp.lt.s32.totalorder %s230, 1
      %s234 = scalar_select %p233, %s230, 1
      %s235 = smul.addr %s232, 2
      %s236 = sadd.s32 %s234, %s235
      %s237 = smul.addr %s236, 4
      %s238 = scalar_lea.vmem %s0, %s237
      %p239 = pneg %p53
      %p240 = pneg %p50
      %p241 = pneg %p74
      %p242 = pneg %p71
      %p243 = pneg %p95
      %p244 = pneg %p92
      %p245 = pneg %p116
      %p246 = pneg %p113
      %p247 = pneg %p137
      %p248 = pneg %p134
      %p249 = pneg %p158
      %p250 = pneg %p155
      %p251 = pneg %p179
      %p252 = pneg %p176
      %s253 = smul.u32 2, %s23
      %p254 = scmp.lt.s32.totalorder %s22, 1
      %s255 = scalar_select %p254, %s22, 1
      %p256 = scmp.lt.s32.totalorder %s253, 1
      %s257 = scalar_select %p256, %s253, 1
      %s258 = smul.addr %s255, 2
      %s259 = sadd.s32 %s257, %s258
      %s260 = smul.addr %s259, 4
      %s261 = scalar_lea.vmem %s0, %s260
      %s262 = smul.u32 2, %s23
      %p264 = scmp.eq.s32.totalorder %s22, 0
      %p265 = scmp.eq.s32.totalorder %s23, 0
      %p266 = pnand %p264, %p265
      %p267 = pneg %p266
      // Predicated region
      $region41: #{conv_layer_forward.4} parent=39 // pred_check
        _
      $region42: #{conv_layer_forward.4} parent=39 // pred_check_branch
        %269 = sbr.rel (%p266) target = $region44
      $region43: #{conv_layer_forward.4} parent=39 // pred_region
        %vm270 = vcmask 7168
        %271 = vst.msk [vmem:[%s5] sm:$0xff] %vm270, 0.0
        %272 = vst.msk [vmem:[%s5 + $0x8] sm:$0xff] %vm270, 0.0
        %273 = vst.msk [vmem:[%s5 + $0x10] sm:$0xff] %vm270, 0.0
        %274 = vst.msk [vmem:[%s5 + $0x18] sm:$0xff] %vm270, 0.0
        %275 = vst.msk [vmem:[%s5 + $0x20] sm:$0xff] %vm270, 0.0
        %276 = vst.msk [vmem:[%s5 + $0x28] sm:$0xff] %vm270, 0.0
        %277 = vst.msk [vmem:[%s5 + $0x30] sm:$0xff] %vm270, 0.0
        %278 = vst.msk [vmem:[%s5 + $0x38] sm:$0xff] %vm270, 0.0
        %279 = vst.msk [vmem:[%s5 + $0x40] sm:$0xff] %vm270, 0.0
        %280 = vst.msk [vmem:[%s5 + $0x48] sm:$0xff] %vm270, 0.0
        %281 = vst.msk [vmem:[%s5 + $0x50] sm:$0xff] %vm270, 0.0
        %282 = vst.msk [vmem:[%s5 + $0x58] sm:$0xff] %vm270, 0.0
        %283 = vst.msk [vmem:[%s5 + $0x60] sm:$0xff] %vm270, 0.0
        %284 = vst.msk [vmem:[%s5 + $0x68] sm:$0xff] %vm270, 0.0
        %285 = vst.msk [vmem:[%s5 + $0x70] sm:$0xff] %vm270, 0.0
        %286 = vst.msk [vmem:[%s5 + $0x78] sm:$0xff] %vm270, 0.0
        %287 = vst.msk [vmem:[%s6] sm:$0xff] %vm270, 0.0
        %288 = vst.msk [vmem:[%s6 + $0x8] sm:$0xff] %vm270, 0.0
        %289 = vst.msk [vmem:[%s6 + $0x10] sm:$0xff] %vm270, 0.0
        %290 = vst.msk [vmem:[%s6 + $0x18] sm:$0xff] %vm270, 0.0
        %291 = vst.msk [vmem:[%s6 + $0x20] sm:$0xff] %vm270, 0.0
        %292 = vst.msk [vmem:[%s6 + $0x28] sm:$0xff] %vm270, 0.0
        %293 = vst.msk [vmem:[%s6 + $0x30] sm:$0xff] %vm270, 0.0
        %294 = vst.msk [vmem:[%s6 + $0x38] sm:$0xff] %vm270, 0.0
        %295 = vst.msk [vmem:[%s6 + $0x40] sm:$0xff] %vm270, 0.0
        %296 = vst.msk [vmem:[%s6 + $0x48] sm:$0xff] %vm270, 0.0
        %297 = vst.msk [vmem:[%s6 + $0x50] sm:$0xff] %vm270, 0.0
        %298 = vst.msk [vmem:[%s6 + $0x58] sm:$0xff] %vm270, 0.0
        %299 = vst.msk [vmem:[%s6 + $0x60] sm:$0xff] %vm270, 0.0
        %300 = vst.msk [vmem:[%s6 + $0x68] sm:$0xff] %vm270, 0.0
        %301 = vst.msk [vmem:[%s6 + $0x70] sm:$0xff] %vm270, 0.0
        %302 = vst.msk [vmem:[%s6 + $0x78] sm:$0xff] %vm270, 0.0
      $region44: #{conv_layer_forward.4} parent=39 // pred_fallthru
        _
      %v303 = vld [vmem:[%s261] sm:$0x77]
      %v304 = vld [vmem:[%s1] sm:$0xff]
      %v305 = vld [vmem:[%s1 + $0x8] sm:$0xff]
      %v306 = vld [vmem:[%s1 + $0x10] sm:$0xff]
      %v307 = vld [vmem:[%s1 + $0x18] sm:$0xff]
      %v308 = vld [vmem:[%s1 + $0x20] sm:$0xff]
      %v309 = vld [vmem:[%s1 + $0x28] sm:$0xff]
      %v310 = vld [vmem:[%s1 + $0x30] sm:$0xff]
      %v311 = vld [vmem:[%s1 + $0x38] sm:$0xff]
      %313 = vset.pattern.permute.xlu0 0
      %314 = vperm.xlu0 %313, %v304
      %v315 = vpop.permute.xlu0 %314
      %318 = vset.pattern.permute.xlu0 0
      %319 = vperm.xlu0 %318, %v305
      %v320 = vpop.permute.xlu0 %319
      %323 = vset.pattern.permute.xlu0 0
      %324 = vperm.xlu0 %323, %v306
      %v325 = vpop.permute.xlu0 %324
      %328 = vset.pattern.permute.xlu0 0
      %329 = vperm.xlu0 %328, %v307
      %v330 = vpop.permute.xlu0 %329
      %333 = vset.pattern.permute.xlu0 0
      %334 = vperm.xlu0 %333, %v308
      %v335 = vpop.permute.xlu0 %334
      %338 = vset.pattern.permute.xlu0 0
      %339 = vperm.xlu0 %338, %v309
      %v340 = vpop.permute.xlu0 %339
      %343 = vset.pattern.permute.xlu0 0
      %344 = vperm.xlu0 %343, %v310
      %v345 = vpop.permute.xlu0 %344
      %348 = vset.pattern.permute.xlu0 0
      %349 = vperm.xlu0 %348, %v311
      %v350 = vpop.permute.xlu0 %349
      %v353 = vlaneseq
      %v354 = vshrl.u32 %v353, 7
      %v355 = vsub.s32 0, %v354
      %v356 = vrot.slane %v303, %v355
      %v357 = vlaneseq
      %v358 = vshrl.u32 %v357, 7
      %v359 = vsub.s32 4, %v358
      %v360 = vrot.slane %v303, %v359
      %v363 = vlaneseq
      %v364 = vshrl.u32 %v363, 7
      %v365 = vsub.s32 0, %v364
      %v366 = vrot.slane %v356, %v365
      %v367 = vlaneseq
      %v368 = vshrl.u32 %v367, 7
      %v369 = vsub.s32 0, %v368
      %v370 = vrot.slane %v360, %v369
      %v371 = vmul.f32 %v315, %v366
      %v372 = vmul.f32 %v315, %v370
      %v373 = vmul.f32 %v320, %v366
      %v374 = vmul.f32 %v320, %v370
      %v375 = vmul.f32 %v325, %v366
      %v376 = vmul.f32 %v325, %v370
      %v377 = vmul.f32 %v330, %v366
      %v378 = vmul.f32 %v330, %v370
      %v379 = vmul.f32 %v335, %v366
      %v380 = vmul.f32 %v335, %v370
      %v381 = vmul.f32 %v340, %v366
      %v382 = vmul.f32 %v340, %v370
      %v383 = vmul.f32 %v345, %v366
      %v384 = vmul.f32 %v345, %v370
      %v385 = vmul.f32 %v350, %v366
      %v386 = vmul.f32 %v350, %v370
      %387 = vset.pattern.permute.xlu0 1
      %388 = vperm.xlu0 %387, %v304
      %v389 = vpop.permute.xlu0 %388
      %391 = vset.pattern.permute.xlu0 1
      %392 = vperm.xlu0 %391, %v305
      %v393 = vpop.permute.xlu0 %392
      %395 = vset.pattern.permute.xlu0 1
      %396 = vperm.xlu0 %395, %v306
      %v397 = vpop.permute.xlu0 %396
      %399 = vset.pattern.permute.xlu0 1
      %400 = vperm.xlu0 %399, %v307
      %v401 = vpop.permute.xlu0 %400
      %403 = vset.pattern.permute.xlu0 1
      %404 = vperm.xlu0 %403, %v308
      %v405 = vpop.permute.xlu0 %404
      %407 = vset.pattern.permute.xlu0 1
      %408 = vperm.xlu0 %407, %v309
      %v409 = vpop.permute.xlu0 %408
      %411 = vset.pattern.permute.xlu0 1
      %412 = vperm.xlu0 %411, %v310
      %v413 = vpop.permute.xlu0 %412
      %415 = vset.pattern.permute.xlu0 1
      %416 = vperm.xlu0 %415, %v311
      %v417 = vpop.permute.xlu0 %416
      %v419 = vlaneseq
      %v420 = vshrl.u32 %v419, 7
      %v421 = vsub.s32 1, %v420
      %v422 = vrot.slane %v303, %v421
      %v423 = vlaneseq
      %v424 = vshrl.u32 %v423, 7
      %v425 = vsub.s32 5, %v424
      %v426 = vrot.slane %v303, %v425
      %v429 = vlaneseq
      %v430 = vshrl.u32 %v429, 7
      %v431 = vsub.s32 1, %v430
      %v432 = vrot.slane %v422, %v431
      %v433 = vlaneseq
      %v434 = vshrl.u32 %v433, 7
      %v435 = vsub.s32 1, %v434
      %v436 = vrot.slane %v426, %v435
      %v437 = vmul.f32 %v389, %v432
      %v438 = vmul.f32 %v389, %v436
      %v439 = vmul.f32 %v393, %v432
      %v440 = vmul.f32 %v393, %v436
      %v441 = vmul.f32 %v397, %v432
      %v442 = vmul.f32 %v397, %v436
      %v443 = vmul.f32 %v401, %v432
      %v444 = vmul.f32 %v401, %v436
      %v445 = vmul.f32 %v405, %v432
      %v446 = vmul.f32 %v405, %v436
      %v447 = vmul.f32 %v409, %v432
      %v448 = vmul.f32 %v409, %v436
      %v449 = vmul.f32 %v413, %v432
      %v450 = vmul.f32 %v413, %v436
      %v451 = vmul.f32 %v417, %v432
      %v452 = vmul.f32 %v417, %v436
      %v453 = vadd.f32 %v371, %v437
      %v454 = vadd.f32 %v372, %v438
      %v455 = vadd.f32 %v373, %v439
      %v456 = vadd.f32 %v374, %v440
      %v457 = vadd.f32 %v375, %v441
      %v458 = vadd.f32 %v376, %v442
      %v459 = vadd.f32 %v377, %v443
      %v460 = vadd.f32 %v378, %v444
      %v461 = vadd.f32 %v379, %v445
      %v462 = vadd.f32 %v380, %v446
      %v463 = vadd.f32 %v381, %v447
      %v464 = vadd.f32 %v382, %v448
      %v465 = vadd.f32 %v383, %v449
      %v466 = vadd.f32 %v384, %v450
      %v467 = vadd.f32 %v385, %v451
      %v468 = vadd.f32 %v386, %v452
      %469 = vset.pattern.permute.xlu0 2
      %470 = vperm.xlu0 %469, %v304
      %v471 = vpop.permute.xlu0 %470
      %473 = vset.pattern.permute.xlu0 2
      %474 = vperm.xlu0 %473, %v305
      %v475 = vpop.permute.xlu0 %474
      %477 = vset.pattern.permute.xlu0 2
      %478 = vperm.xlu0 %477, %v306
      %v479 = vpop.permute.xlu0 %478
      %481 = vset.pattern.permute.xlu0 2
      %482 = vperm.xlu0 %481, %v307
      %v483 = vpop.permute.xlu0 %482
      %485 = vset.pattern.permute.xlu0 2
      %486 = vperm.xlu0 %485, %v308
      %v487 = vpop.permute.xlu0 %486
      %489 = vset.pattern.permute.xlu0 2
      %490 = vperm.xlu0 %489, %v309
      %v491 = vpop.permute.xlu0 %490
      %493 = vset.pattern.permute.xlu0 2
      %494 = vperm.xlu0 %493, %v310
      %v495 = vpop.permute.xlu0 %494
      %497 = vset.pattern.permute.xlu0 2
      %498 = vperm.xlu0 %497, %v311
      %v499 = vpop.permute.xlu0 %498
      %v501 = vlaneseq
      %v502 = vshrl.u32 %v501, 7
      %v503 = vsub.s32 2, %v502
      %v504 = vrot.slane %v303, %v503
      %v505 = vlaneseq
      %v506 = vshrl.u32 %v505, 7
      %v507 = vsub.s32 6, %v506
      %v508 = vrot.slane %v303, %v507
      %v511 = vlaneseq
      %v512 = vshrl.u32 %v511, 7
      %v513 = vsub.s32 2, %v512
      %v514 = vrot.slane %v504, %v513
      %v515 = vlaneseq
      %v516 = vshrl.u32 %v515, 7
      %v517 = vsub.s32 2, %v516
      %v518 = vrot.slane %v508, %v517
      %v519 = vmul.f32 %v471, %v514
      %v520 = vmul.f32 %v471, %v518
      %v521 = vmul.f32 %v475, %v514
      %v522 = vmul.f32 %v475, %v518
      %v523 = vmul.f32 %v479, %v514
      %v524 = vmul.f32 %v479, %v518
      %v525 = vmul.f32 %v483, %v514
      %v526 = vmul.f32 %v483, %v518
      %v527 = vmul.f32 %v487, %v514
      %v528 = vmul.f32 %v487, %v518
      %v529 = vmul.f32 %v491, %v514
      %v530 = vmul.f32 %v491, %v518
      %v531 = vmul.f32 %v495, %v514
      %v532 = vmul.f32 %v495, %v518
      %v533 = vmul.f32 %v499, %v514
      %v534 = vmul.f32 %v499, %v518
      %v535 = vadd.f32 %v453, %v519
      %v536 = vadd.f32 %v454, %v520
      %v537 = vadd.f32 %v455, %v521
      %v538 = vadd.f32 %v456, %v522
      %v539 = vadd.f32 %v457, %v523
      %v540 = vadd.f32 %v458, %v524
      %v541 = vadd.f32 %v459, %v525
      %v542 = vadd.f32 %v460, %v526
      %v543 = vadd.f32 %v461, %v527
      %v544 = vadd.f32 %v462, %v528
      %v545 = vadd.f32 %v463, %v529
      %v546 = vadd.f32 %v464, %v530
      %v547 = vadd.f32 %v465, %v531
      %v548 = vadd.f32 %v466, %v532
      %v549 = vadd.f32 %v467, %v533
      %v550 = vadd.f32 %v468, %v534
      %v551 = vld [vmem:[%s2] sm:$0xff]
      %v552 = vld [vmem:[%s2 + $0x8] sm:$0xff]
      %v553 = vld [vmem:[%s2 + $0x10] sm:$0xff]
      %v554 = vld [vmem:[%s2 + $0x18] sm:$0xff]
      %v555 = vld [vmem:[%s2 + $0x20] sm:$0xff]
      %v556 = vld [vmem:[%s2 + $0x28] sm:$0xff]
      %v557 = vld [vmem:[%s2 + $0x30] sm:$0xff]
      %v558 = vld [vmem:[%s2 + $0x38] sm:$0xff]
      %560 = vset.pattern.permute.xlu0 0
      %561 = vperm.xlu0 %560, %v551
      %v562 = vpop.permute.xlu0 %561
      %565 = vset.pattern.permute.xlu0 0
      %566 = vperm.xlu0 %565, %v552
      %v567 = vpop.permute.xlu0 %566
      %570 = vset.pattern.permute.xlu0 0
      %571 = vperm.xlu0 %570, %v553
      %v572 = vpop.permute.xlu0 %571
      %575 = vset.pattern.permute.xlu0 0
      %576 = vperm.xlu0 %575, %v554
      %v577 = vpop.permute.xlu0 %576
      %580 = vset.pattern.permute.xlu0 0
      %581 = vperm.xlu0 %580, %v555
      %v582 = vpop.permute.xlu0 %581
      %585 = vset.pattern.permute.xlu0 0
      %586 = vperm.xlu0 %585, %v556
      %v587 = vpop.permute.xlu0 %586
      %590 = vset.pattern.permute.xlu0 0
      %591 = vperm.xlu0 %590, %v557
      %v592 = vpop.permute.xlu0 %591
      %595 = vset.pattern.permute.xlu0 0
      %596 = vperm.xlu0 %595, %v558
      %v597 = vpop.permute.xlu0 %596
      %v599 = vmul.f32 %v535, %v562
      %v600 = vmul.f32 %v536, %v562
      %v601 = vmul.f32 %v537, %v567
      %v602 = vmul.f32 %v538, %v567
      %v603 = vmul.f32 %v539, %v572
      %v604 = vmul.f32 %v540, %v572
      %v605 = vmul.f32 %v541, %v577
      %v606 = vmul.f32 %v542, %v577
      %v607 = vmul.f32 %v543, %v582
      %v608 = vmul.f32 %v544, %v582
      %v609 = vmul.f32 %v545, %v587
      %v610 = vmul.f32 %v546, %v587
      %v611 = vmul.f32 %v547, %v592
      %v612 = vmul.f32 %v548, %v592
      %v613 = vmul.f32 %v549, %v597
      %v614 = vmul.f32 %v550, %v597
      %v615 = vld [vmem:[%s3] sm:$0xff]
      %v616 = vld [vmem:[%s3 + $0x8] sm:$0xff]
      %v617 = vld [vmem:[%s3 + $0x10] sm:$0xff]
      %v618 = vld [vmem:[%s3 + $0x18] sm:$0xff]
      %v619 = vld [vmem:[%s3 + $0x20] sm:$0xff]
      %v620 = vld [vmem:[%s3 + $0x28] sm:$0xff]
      %v621 = vld [vmem:[%s3 + $0x30] sm:$0xff]
      %v622 = vld [vmem:[%s3 + $0x38] sm:$0xff]
      %624 = vset.pattern.permute.xlu0 0
      %625 = vperm.xlu0 %624, %v615
      %v626 = vpop.permute.xlu0 %625
      %629 = vset.pattern.permute.xlu0 0
      %630 = vperm.xlu0 %629, %v616
      %v631 = vpop.permute.xlu0 %630
      %634 = vset.pattern.permute.xlu0 0
      %635 = vperm.xlu0 %634, %v617
      %v636 = vpop.permute.xlu0 %635
      %639 = vset.pattern.permute.xlu0 0
      %640 = vperm.xlu0 %639, %v618
      %v641 = vpop.permute.xlu0 %640
      %644 = vset.pattern.permute.xlu0 0
      %645 = vperm.xlu0 %644, %v619
      %v646 = vpop.permute.xlu0 %645
      %649 = vset.pattern.permute.xlu0 0
      %650 = vperm.xlu0 %649, %v620
      %v651 = vpop.permute.xlu0 %650
      %654 = vset.pattern.permute.xlu0 0
      %655 = vperm.xlu0 %654, %v621
      %v656 = vpop.permute.xlu0 %655
      %659 = vset.pattern.permute.xlu0 0
      %660 = vperm.xlu0 %659, %v622
      %v661 = vpop.permute.xlu0 %660
      %v663 = vadd.f32 %v599, %v626
      %v664 = vadd.f32 %v600, %v626
      %v665 = vadd.f32 %v601, %v631
      %v666 = vadd.f32 %v602, %v631
      %v667 = vadd.f32 %v603, %v636
      %v668 = vadd.f32 %v604, %v636
      %v669 = vadd.f32 %v605, %v641
      %v670 = vadd.f32 %v606, %v641
      %v671 = vadd.f32 %v607, %v646
      %v672 = vadd.f32 %v608, %v646
      %v673 = vadd.f32 %v609, %v651
      %v674 = vadd.f32 %v610, %v651
      %v675 = vadd.f32 %v611, %v656
      %v676 = vadd.f32 %v612, %v656
      %v677 = vadd.f32 %v613, %v661
      %v678 = vadd.f32 %v614, %v661
      %v679 = vmax.f32 %v663, 0.0
      %v680 = vmax.f32 %v664, 0.0
      %v681 = vmax.f32 %v665, 0.0
      %v682 = vmax.f32 %v666, 0.0
      %v683 = vmax.f32 %v667, 0.0
      %v684 = vmax.f32 %v668, 0.0
      %v685 = vmax.f32 %v669, 0.0
      %v686 = vmax.f32 %v670, 0.0
      %v687 = vmax.f32 %v671, 0.0
      %v688 = vmax.f32 %v672, 0.0
      %v689 = vmax.f32 %v673, 0.0
      %v690 = vmax.f32 %v674, 0.0
      %v691 = vmax.f32 %v675, 0.0
      %v692 = vmax.f32 %v676, 0.0
      %v693 = vmax.f32 %v677, 0.0
      %v694 = vmax.f32 %v678, 0.0
      %v695 = vld [vmem:[%s4] sm:$0xf]
      %v696 = vld [vmem:[%s4 + $0x4] sm:$0xf]
      %v697 = vld [vmem:[%s4 + $0x8] sm:$0xf]
      %v698 = vld [vmem:[%s4 + $0xc] sm:$0xf]
      %v699 = vld [vmem:[%s4 + $0x10] sm:$0xf]
      %v700 = vld [vmem:[%s4 + $0x14] sm:$0xf]
      %v701 = vld [vmem:[%s4 + $0x18] sm:$0xf]
      %v702 = vld [vmem:[%s4 + $0x1c] sm:$0xf]
      %v703 = vld [vmem:[%s4 + $0x20] sm:$0xf]
      %v704 = vld [vmem:[%s4 + $0x24] sm:$0xf]
      %v705 = vld [vmem:[%s4 + $0x28] sm:$0xf]
      %v706 = vld [vmem:[%s4 + $0x2c] sm:$0xf]
      %v707 = vld [vmem:[%s4 + $0x30] sm:$0xf]
      %v708 = vld [vmem:[%s4 + $0x34] sm:$0xf]
      %v709 = vld [vmem:[%s4 + $0x38] sm:$0xf]
      %v710 = vld [vmem:[%s4 + $0x3c] sm:$0xf]
      %v711 = vpack.c.bf16 %v681, %v679
      %v712 = vpack.c.bf16 %v682, %v680
      %v713 = vpack.c.bf16 %v685, %v683
      %v714 = vpack.c.bf16 %v686, %v684
      %v715 = vpack.c.bf16 %v689, %v687
      %v716 = vpack.c.bf16 %v690, %v688
      %v717 = vpack.c.bf16 %v693, %v691
      %v718 = vpack.c.bf16 %v694, %v692
      %v735 = vunpack.c.l.b16 %v695
      %v736 = vunpack.c.l.b16 %v696
      %v737 = vunpack.c.l.b16 %v697
      %v738 = vunpack.c.l.b16 %v698
      %v739 = vunpack.c.l.b16 %v699
      %v740 = vunpack.c.l.b16 %v700
      %v741 = vunpack.c.l.b16 %v701
      %v742 = vunpack.c.l.b16 %v702
      %v743 = vunpack.c.l.b16 %v703
      %v744 = vunpack.c.l.b16 %v704
      %v745 = vunpack.c.l.b16 %v705
      %v746 = vunpack.c.l.b16 %v706
      %v747 = vunpack.c.l.b16 %v707
      %v748 = vunpack.c.l.b16 %v708
      %v749 = vunpack.c.l.b16 %v709
      %v750 = vunpack.c.l.b16 %v710
      %v751 = vpack.c.b16 %v736, %v735
      %v752 = vpack.c.b16 %v738, %v737
      %v753 = vpack.c.b16 %v740, %v739
      %v754 = vpack.c.b16 %v742, %v741
      %v755 = vpack.c.b16 %v744, %v743
      %v756 = vpack.c.b16 %v746, %v745
      %v757 = vpack.c.b16 %v748, %v747
      %v758 = vpack.c.b16 %v750, %v749
      %vm759 = vcmask 523264
      %v761 = vsel %vm759, %v751, 0
      %v764 = vsel %vm759, %v752, 0
      %v767 = vsel %vm759, %v753, 0
      %v770 = vsel %vm759, %v754, 0
      %v773 = vsel %vm759, %v755, 0
      %v776 = vsel %vm759, %v756, 0
      %v779 = vsel %vm759, %v757, 0
      %v782 = vsel %vm759, %v758, 0
      %784 = vmatprep.subr.bf16.mxu0 %v712
      %785 = vmatpush1.bf16.msra.mxu0 %v711
      %786 = vmatprep.subr.bf16.mxu0 %v714
      %787 = vmatpush1.bf16.msra.mxu0 %v713
      %788 = vmatprep.subr.bf16.mxu0 %v716
      %789 = vmatpush1.bf16.msra.mxu0 %v715
      %790 = vmatprep.subr.bf16.mxu0 %v718
      %791 = vmatpush1.bf16.msra.mxu0 %v717
      %792 = vmatprep.subr.bf16.mxu0 0
      %793 = vmatpush1.bf16.msra.mxu0 0
      %794 = vmatprep.subr.bf16.mxu0 0
      %795 = vmatpush1.bf16.msra.mxu0 0
      %796 = vmatprep.subr.bf16.mxu0 0
      %797 = vmatpush1.bf16.msra.mxu0 0
      %798 = vmatprep.subr.bf16.mxu0 0
      %799 = vmatpush1.bf16.msra.mxu0 0
      %800 = vmatprep.subr.bf16.mxu0 0
      %801 = vmatpush1.bf16.msra.mxu0 0
      %802 = vmatprep.subr.bf16.mxu0 0
      %803 = vmatpush1.bf16.msra.mxu0 0
      %804 = vmatprep.subr.bf16.mxu0 0
      %805 = vmatpush1.bf16.msra.mxu0 0
      %806 = vmatprep.subr.bf16.mxu0 0
      %807 = vmatpush1.bf16.msra.mxu0 0
      %808 = vmatprep.subr.bf16.mxu0 0
      %809 = vmatpush1.bf16.msra.mxu0 0
      %810 = vmatprep.subr.bf16.mxu0 0
      %811 = vmatpush1.bf16.msra.mxu0 0
      %812 = vmatprep.subr.bf16.mxu0 0
      %813 = vmatpush1.bf16.msra.mxu0 0
      %814 = vmatprep.subr.bf16.mxu0 0
      %815 = vmatpush1.bf16.msra.mxu0 0
      %816 = vmatprep.mubr.bf16.mxu0 0
      %817 = vmatmul.mubr.bf16.gmra.mrb[0].mxu0 %v761
      %v818 = vpop.f32.mrb[0].mxu0
      %v819 = vadd.f32 0.0, %v818
      %v820 = vpop.f32.mrb[0].mxu0
      %v821 = vadd.f32 0.0, %v820
      %v822 = vpop.f32.mrb[0].mxu0
      %v823 = vadd.f32 0.0, %v822
      %v824 = vpop.f32.mrb[0].mxu0
      %v825 = vadd.f32 0.0, %v824
      %826 = vmatprep.mubr.bf16.mxu0 0
      %827 = vmatmul.mubr.bf16.gmra.mrb[0].mxu0 %v764
      %v828 = vpop.f32.mrb[0].mxu0
      %v829 = vadd.f32 0.0, %v828
      %v830 = vpop.f32.mrb[0].mxu0
      %v831 = vadd.f32 0.0, %v830
      %v832 = vpop.f32.mrb[0].mxu0
      %v833 = vadd.f32 0.0, %v832
      %v834 = vpop.f32.mrb[0].mxu0
      %v835 = vadd.f32 0.0, %v834
      %836 = vmatprep.mubr.bf16.mxu0 0
      %837 = vmatmul.mubr.bf16.gmra.mrb[0].mxu0 %v767
      %v838 = vpop.f32.mrb[0].mxu0
      %v839 = vadd.f32 0.0, %v838
      %v840 = vpop.f32.mrb[0].mxu0
      %v841 = vadd.f32 0.0, %v840
      %v842 = vpop.f32.mrb[0].mxu0
      %v843 = vadd.f32 0.0, %v842
      %v844 = vpop.f32.mrb[0].mxu0
      %v845 = vadd.f32 0.0, %v844
      %846 = vmatprep.mubr.bf16.mxu0 0
      %847 = vmatmul.mubr.bf16.gmra.mrb[0].mxu0 %v770
      %v848 = vpop.f32.mrb[0].mxu0
      %v849 = vadd.f32 0.0, %v848
      %v850 = vpop.f32.mrb[0].mxu0
      %v851 = vadd.f32 0.0, %v850
      %v852 = vpop.f32.mrb[0].mxu0
      %v853 = vadd.f32 0.0, %v852
      %v854 = vpop.f32.mrb[0].mxu0
      %v855 = vadd.f32 0.0, %v854
      %856 = vmatprep.mubr.bf16.mxu0 0
      %857 = vmatmul.mubr.bf16.gmra.mrb[0].mxu0 %v773
      %v858 = vpop.f32.mrb[0].mxu0
      %v859 = vadd.f32 0.0, %v858
      %v860 = vpop.f32.mrb[0].mxu0
      %v861 = vadd.f32 0.0, %v860
      %v862 = vpop.f32.mrb[0].mxu0
      %v863 = vadd.f32 0.0, %v862
      %v864 = vpop.f32.mrb[0].mxu0
      %v865 = vadd.f32 0.0, %v864
      %866 = vmatprep.mubr.bf16.mxu0 0
      %867 = vmatmul.mubr.bf16.gmra.mrb[0].mxu0 %v776
      %v868 = vpop.f32.mrb[0].mxu0
      %v869 = vadd.f32 0.0, %v868
      %v870 = vpop.f32.mrb[0].mxu0
      %v871 = vadd.f32 0.0, %v870
      %v872 = vpop.f32.mrb[0].mxu0
      %v873 = vadd.f32 0.0, %v872
      %v874 = vpop.f32.mrb[0].mxu0
      %v875 = vadd.f32 0.0, %v874
      %876 = vmatprep.mubr.bf16.mxu0 0
      %877 = vmatmul.mubr.bf16.gmra.mrb[0].mxu0 %v779
      %v878 = vpop.f32.mrb[0].mxu0
      %v879 = vadd.f32 0.0, %v878
      %v880 = vpop.f32.mrb[0].mxu0
      %v881 = vadd.f32 0.0, %v880
      %v882 = vpop.f32.mrb[0].mxu0
      %v883 = vadd.f32 0.0, %v882
      %v884 = vpop.f32.mrb[0].mxu0
      %v885 = vadd.f32 0.0, %v884
      %886 = vmatprep.mubr.bf16.mxu0 0
      %887 = vmatmul.mubr.bf16.gmra.mrb[0].mxu0 %v782
      %v888 = vpop.f32.mrb[0].mxu0
      %v889 = vadd.f32 0.0, %v888
      %v890 = vpop.f32.mrb[0].mxu0
      %v891 = vadd.f32 0.0, %v890
      %v892 = vpop.f32.mrb[0].mxu0
      %v893 = vadd.f32 0.0, %v892
      %v894 = vpop.f32.mrb[0].mxu0
      %v895 = vadd.f32 0.0, %v894
      %896 = vdwg.mxu0
      %v897 = vld [vmem:[%s5] sm:$0xff]
      %v898 = vld [vmem:[%s5 + $0x8] sm:$0xff]
      %v899 = vld [vmem:[%s5 + $0x10] sm:$0xff]
      %v900 = vld [vmem:[%s5 + $0x18] sm:$0xff]
      %v901 = vld [vmem:[%s5 + $0x20] sm:$0xff]
      %v902 = vld [vmem:[%s5 + $0x28] sm:$0xff]
      %v903 = vld [vmem:[%s5 + $0x30] sm:$0xff]
      %v904 = vld [vmem:[%s5 + $0x38] sm:$0xff]
      %v905 = vld [vmem:[%s5 + $0x40] sm:$0xff]
      %v906 = vld [vmem:[%s5 + $0x48] sm:$0xff]
      %v907 = vld [vmem:[%s5 + $0x50] sm:$0xff]
      %v908 = vld [vmem:[%s5 + $0x58] sm:$0xff]
      %v909 = vld [vmem:[%s5 + $0x60] sm:$0xff]
      %v910 = vld [vmem:[%s5 + $0x68] sm:$0xff]
      %v911 = vld [vmem:[%s5 + $0x70] sm:$0xff]
      %v912 = vld [vmem:[%s5 + $0x78] sm:$0xff]
      %v913 = vadd.f32 %v819, %v821
      %914 = vadd.xlane.f32.xlu0 %v913
      %v915 = vpop.xlane.xlu0 %914
      %v916 = vadd.f32 %v823, %v825
      %917 = vadd.xlane.f32.xlu0 %v916
      %v918 = vpop.xlane.xlu0 %917
      %v919 = vadd.f32 %v829, %v831
      %920 = vadd.xlane.f32.xlu0 %v919
      %v921 = vpop.xlane.xlu0 %920
      %v922 = vadd.f32 %v833, %v835
      %923 = vadd.xlane.f32.xlu0 %v922
      %v924 = vpop.xlane.xlu0 %923
      %v925 = vadd.f32 %v839, %v841
      %926 = vadd.xlane.f32.xlu0 %v925
      %v927 = vpop.xlane.xlu0 %926
      %v928 = vadd.f32 %v843, %v845
      %929 = vadd.xlane.f32.xlu0 %v928
      %v930 = vpop.xlane.xlu0 %929
      %v931 = vadd.f32 %v849, %v851
      %932 = vadd.xlane.f32.xlu0 %v931
      %v933 = vpop.xlane.xlu0 %932
      %v934 = vadd.f32 %v853, %v855
      %935 = vadd.xlane.f32.xlu0 %v934
      %v936 = vpop.xlane.xlu0 %935
      %v937 = vadd.f32 %v859, %v861
      %938 = vadd.xlane.f32.xlu0 %v937
      %v939 = vpop.xlane.xlu0 %938
      %v940 = vadd.f32 %v863, %v865
      %941 = vadd.xlane.f32.xlu0 %v940
      %v942 = vpop.xlane.xlu0 %941
      %v943 = vadd.f32 %v869, %v871
      %944 = vadd.xlane.f32.xlu0 %v943
      %v945 = vpop.xlane.xlu0 %944
      %v946 = vadd.f32 %v873, %v875
      %947 = vadd.xlane.f32.xlu0 %v946
      %v948 = vpop.xlane.xlu0 %947
      %v949 = vadd.f32 %v879, %v881
      %950 = vadd.xlane.f32.xlu0 %v949
      %v951 = vpop.xlane.xlu0 %950
      %v952 = vadd.f32 %v883, %v885
      %953 = vadd.xlane.f32.xlu0 %v952
      %v954 = vpop.xlane.xlu0 %953
      %v955 = vadd.f32 %v889, %v891
      %956 = vadd.xlane.f32.xlu0 %v955
      %v957 = vpop.xlane.xlu0 %956
      %v958 = vadd.f32 %v893, %v895
      %959 = vadd.xlane.f32.xlu0 %v958
      %v960 = vpop.xlane.xlu0 %959
      %v961 = vadd.f32 %v897, %v915
      %v962 = vadd.f32 %v898, %v918
      %v963 = vadd.f32 %v899, %v921
      %v964 = vadd.f32 %v900, %v924
      %v965 = vadd.f32 %v901, %v927
      %v966 = vadd.f32 %v902, %v930
      %v967 = vadd.f32 %v903, %v933
      %v968 = vadd.f32 %v904, %v936
      %v969 = vadd.f32 %v905, %v939
      %v970 = vadd.f32 %v906, %v942
      %v971 = vadd.f32 %v907, %v945
      %v972 = vadd.f32 %v908, %v948
      %v973 = vadd.f32 %v909, %v951
      %v974 = vadd.f32 %v910, %v954
      %v975 = vadd.f32 %v911, %v957
      %v976 = vadd.f32 %v912, %v960
      %vm977 = vcmask 7168
      %978 = vst.msk [vmem:[%s5] sm:$0xff] %vm977, %v961
      %979 = vst.msk [vmem:[%s5 + $0x8] sm:$0xff] %vm977, %v962
      %980 = vst.msk [vmem:[%s5 + $0x10] sm:$0xff] %vm977, %v963
      %981 = vst.msk [vmem:[%s5 + $0x18] sm:$0xff] %vm977, %v964
      %982 = vst.msk [vmem:[%s5 + $0x20] sm:$0xff] %vm977, %v965
      %983 = vst.msk [vmem:[%s5 + $0x28] sm:$0xff] %vm977, %v966
      %984 = vst.msk [vmem:[%s5 + $0x30] sm:$0xff] %vm977, %v967
      %985 = vst.msk [vmem:[%s5 + $0x38] sm:$0xff] %vm977, %v968
      %986 = vst.msk [vmem:[%s5 + $0x40] sm:$0xff] %vm977, %v969
      %987 = vst.msk [vmem:[%s5 + $0x48] sm:$0xff] %vm977, %v970
      %988 = vst.msk [vmem:[%s5 + $0x50] sm:$0xff] %vm977, %v971
      %989 = vst.msk [vmem:[%s5 + $0x58] sm:$0xff] %vm977, %v972
      %990 = vst.msk [vmem:[%s5 + $0x60] sm:$0xff] %vm977, %v973
      %991 = vst.msk [vmem:[%s5 + $0x68] sm:$0xff] %vm977, %v974
      %992 = vst.msk [vmem:[%s5 + $0x70] sm:$0xff] %vm977, %v975
      %993 = vst.msk [vmem:[%s5 + $0x78] sm:$0xff] %vm977, %v976
      %v994 = vld [vmem:[%s6] sm:$0xff]
      %v995 = vld [vmem:[%s6 + $0x8] sm:$0xff]
      %v996 = vld [vmem:[%s6 + $0x10] sm:$0xff]
      %v997 = vld [vmem:[%s6 + $0x18] sm:$0xff]
      %v998 = vld [vmem:[%s6 + $0x20] sm:$0xff]
      %v999 = vld [vmem:[%s6 + $0x28] sm:$0xff]
      %v1000 = vld [vmem:[%s6 + $0x30] sm:$0xff]
      %v1001 = vld [vmem:[%s6 + $0x38] sm:$0xff]
      %v1002 = vld [vmem:[%s6 + $0x40] sm:$0xff]
      %v1003 = vld [vmem:[%s6 + $0x48] sm:$0xff]
      %v1004 = vld [vmem:[%s6 + $0x50] sm:$0xff]
      %v1005 = vld [vmem:[%s6 + $0x58] sm:$0xff]
      %v1006 = vld [vmem:[%s6 + $0x60] sm:$0xff]
      %v1007 = vld [vmem:[%s6 + $0x68] sm:$0xff]
      %v1008 = vld [vmem:[%s6 + $0x70] sm:$0xff]
      %v1009 = vld [vmem:[%s6 + $0x78] sm:$0xff]
      %v1010 = vmul.f32 %v819, %v819
      %v1011 = vmul.f32 %v821, %v821
      %v1012 = vmul.f32 %v823, %v823
      %v1013 = vmul.f32 %v825, %v825
      %v1014 = vmul.f32 %v829, %v829
      %v1015 = vmul.f32 %v831, %v831
      %v1016 = vmul.f32 %v833, %v833
      %v1017 = vmul.f32 %v835, %v835
      %v1018 = vmul.f32 %v839, %v839
      %v1019 = vmul.f32 %v841, %v841
      %v1020 = vmul.f32 %v843, %v843
      %v1021 = vmul.f32 %v845, %v845
      %v1022 = vmul.f32 %v849, %v849
      %v1023 = vmul.f32 %v851, %v851
      %v1024 = vmul.f32 %v853, %v853
      %v1025 = vmul.f32 %v855, %v855
      %v1026 = vmul.f32 %v859, %v859
      %v1027 = vmul.f32 %v861, %v861
      %v1028 = vmul.f32 %v863, %v863
      %v1029 = vmul.f32 %v865, %v865
      %v1030 = vmul.f32 %v869, %v869
      %v1031 = vmul.f32 %v871, %v871
      %v1032 = vmul.f32 %v873, %v873
      %v1033 = vmul.f32 %v875, %v875
      %v1034 = vmul.f32 %v879, %v879
      %v1035 = vmul.f32 %v881, %v881
      %v1036 = vmul.f32 %v883, %v883
      %v1037 = vmul.f32 %v885, %v885
      %v1038 = vmul.f32 %v889, %v889
      %v1039 = vmul.f32 %v891, %v891
      %v1040 = vmul.f32 %v893, %v893
      %v1041 = vmul.f32 %v895, %v895
      %v1042 = vadd.f32 %v1010, %v1011
      %1043 = vadd.xlane.f32.xlu0 %v1042
      %v1044 = vpop.xlane.xlu0 %1043
      %v1045 = vadd.f32 %v1012, %v1013
      %1046 = vadd.xlane.f32.xlu0 %v1045
      %v1047 = vpop.xlane.xlu0 %1046
      %v1048 = vadd.f32 %v1014, %v1015
      %1049 = vadd.xlane.f32.xlu0 %v1048
      %v1050 = vpop.xlane.xlu0 %1049
      %v1051 = vadd.f32 %v1016, %v1017
      %1052 = vadd.xlane.f32.xlu0 %v1051
      %v1053 = vpop.xlane.xlu0 %1052
      %v1054 = vadd.f32 %v1018, %v1019
      %1055 = vadd.xlane.f32.xlu0 %v1054
      %v1056 = vpop.xlane.xlu0 %1055
      %v1057 = vadd.f32 %v1020, %v1021
      %1058 = vadd.xlane.f32.xlu0 %v1057
      %v1059 = vpop.xlane.xlu0 %1058
      %v1060 = vadd.f32 %v1022, %v1023
      %1061 = vadd.xlane.f32.xlu0 %v1060
      %v1062 = vpop.xlane.xlu0 %1061
      %v1063 = vadd.f32 %v1024, %v1025
      %1064 = vadd.xlane.f32.xlu0 %v1063
      %v1065 = vpop.xlane.xlu0 %1064
      %v1066 = vadd.f32 %v1026, %v1027
      %1067 = vadd.xlane.f32.xlu0 %v1066
      %v1068 = vpop.xlane.xlu0 %1067
      %v1069 = vadd.f32 %v1028, %v1029
      %1070 = vadd.xlane.f32.xlu0 %v1069
      %v1071 = vpop.xlane.xlu0 %1070
      %v1072 = vadd.f32 %v1030, %v1031
      %1073 = vadd.xlane.f32.xlu0 %v1072
      %v1074 = vpop.xlane.xlu0 %1073
      %v1075 = vadd.f32 %v1032, %v1033
      %1076 = vadd.xlane.f32.xlu0 %v1075
      %v1077 = vpop.xlane.xlu0 %1076
      %v1078 = vadd.f32 %v1034, %v1035
      %1079 = vadd.xlane.f32.xlu0 %v1078
      %v1080 = vpop.xlane.xlu0 %1079
      %v1081 = vadd.f32 %v1036, %v1037
      %1082 = vadd.xlane.f32.xlu0 %v1081
      %v1083 = vpop.xlane.xlu0 %1082
      %v1084 = vadd.f32 %v1038, %v1039
      %1085 = vadd.xlane.f32.xlu0 %v1084
      %v1086 = vpop.xlane.xlu0 %1085
      %v1087 = vadd.f32 %v1040, %v1041
      %1088 = vadd.xlane.f32.xlu0 %v1087
      %v1089 = vpop.xlane.xlu0 %1088
      %v1090 = vadd.f32 %v994, %v1044
      %v1091 = vadd.f32 %v995, %v1047
      %v1092 = vadd.f32 %v996, %v1050
      %v1093 = vadd.f32 %v997, %v1053
      %v1094 = vadd.f32 %v998, %v1056
      %v1095 = vadd.f32 %v999, %v1059
      %v1096 = vadd.f32 %v1000, %v1062
      %v1097 = vadd.f32 %v1001, %v1065
      %v1098 = vadd.f32 %v1002, %v1068
      %v1099 = vadd.f32 %v1003, %v1071
      %v1100 = vadd.f32 %v1004, %v1074
      %v1101 = vadd.f32 %v1005, %v1077
      %v1102 = vadd.f32 %v1006, %v1080
      %v1103 = vadd.f32 %v1007, %v1083
      %v1104 = vadd.f32 %v1008, %v1086
      %v1105 = vadd.f32 %v1009, %v1089
      %1106 = vst.msk [vmem:[%s6] sm:$0xff] %vm977, %v1090
      %1107 = vst.msk [vmem:[%s6 + $0x8] sm:$0xff] %vm977, %v1091
      %1108 = vst.msk [vmem:[%s6 + $0x10] sm:$0xff] %vm977, %v1092
      %1109 = vst.msk [vmem:[%s6 + $0x18] sm:$0xff] %vm977, %v1093
      %1110 = vst.msk [vmem:[%s6 + $0x20] sm:$0xff] %vm977, %v1094
      %1111 = vst.msk [vmem:[%s6 + $0x28] sm:$0xff] %vm977, %v1095
      %1112 = vst.msk [vmem:[%s6 + $0x30] sm:$0xff] %vm977, %v1096
      %1113 = vst.msk [vmem:[%s6 + $0x38] sm:$0xff] %vm977, %v1097
      %1114 = vst.msk [vmem:[%s6 + $0x40] sm:$0xff] %vm977, %v1098
      %1115 = vst.msk [vmem:[%s6 + $0x48] sm:$0xff] %vm977, %v1099
      %1116 = vst.msk [vmem:[%s6 + $0x50] sm:$0xff] %vm977, %v1100
      %1117 = vst.msk [vmem:[%s6 + $0x58] sm:$0xff] %vm977, %v1101
      %1118 = vst.msk [vmem:[%s6 + $0x60] sm:$0xff] %vm977, %v1102
      %1119 = vst.msk [vmem:[%s6 + $0x68] sm:$0xff] %vm977, %v1103
      %1120 = vst.msk [vmem:[%s6 + $0x70] sm:$0xff] %vm977, %v1104
      %1121 = vst.msk [vmem:[%s6 + $0x78] sm:$0xff] %vm977, %v1105
      // Predicated region
      $region45: #{conv_layer_forward.4} parent=39 // pred_check
        %p1122 = pneg %p155
      $region46: #{conv_layer_forward.4} parent=39 // pred_check_branch
        %1124 = sbr.rel (%p1122) target = $region48
      $region47: #{conv_layer_forward.4} parent=39 // pred_region
        _
      $region48: #{conv_layer_forward.4} parent=39 // pred_fallthru
        _
      // Predicated region
      $region49: #{conv_layer_forward.4} parent=39 // pred_check
        %p1125 = pneg %p176
      $region50: #{conv_layer_forward.4} parent=39 // pred_check_branch
        %1127 = sbr.rel (%p1125) target = $region52
      $region51: #{conv_layer_forward.4} parent=39 // pred_region
        _
      $region52: #{conv_layer_forward.4} parent=39 // pred_fallthru
        _
      // Predicated region
      $region53: #{conv_layer_forward.4} parent=39 // pred_check
        %p1128 = pneg %p155
      $region54: #{conv_layer_forward.4} parent=39 // pred_check_branch
        %1130 = sbr.rel (%p1128) target = $region56
      $region55: #{conv_layer_forward.4} parent=39 // pred_region
        _
      $region56: #{conv_layer_forward.4} parent=39 // pred_fallthru
        _
      // Predicated region
      $region57: #{conv_layer_forward.4} parent=39 // pred_check
        %p1131 = pneg %p176
      $region58: #{conv_layer_forward.4} parent=39 // pred_check_branch
        %1133 = sbr.rel (%p1131) target = $region60
      $region59: #{conv_layer_forward.4} parent=39 // pred_region
        _
      $region60: #{conv_layer_forward.4} parent=39 // pred_fallthru
        _
    $region40: #{conv_layer_forward.4} parent=5 // pred_fallthru
      _
    %p1134 = scmp.le.s32.totalorder 2, %s13
    // Predicated region
    $region61: #{conv_layer_forward.4} parent=5 // pred_check
      %p1135 = pneg %p1134
    $region62: #{conv_layer_forward.4} parent=5 // pred_check_branch
      %1137 = sbr.rel (%p1135) target = $region64
    $region63: #{conv_layer_forward.4} parent=5 // pred_region
      %s1138 = ssub.s32 %s13, 2
    $region64: #{conv_layer_forward.4} parent=5 // pred_fallthru
      _
  $region6: #{conv_layer_forward.4} parent=0 // loop_footer
    %s17 = sadd.s32 1, %s13
  $region7: #{conv_layer_forward.4} parent=0 // loop_footer_branch
    %12 = sbr.rel target = $region3
  $region8: #{conv_layer_forward.4} parent=0 // loop_exit
    _

// kernel: conv_layer_forward.5
$region0: #{conv_layer_forward.5}
  #allocation0 [shape = 'u32[]', space=smem, size = 0x4, offset = 0x4, fixed_abs, tag = 'smem constant byte address 0x4 - core index']
  #allocation1 [shape = 'u32[144,128]{1,0:T(1,128)}', space=vmem, size = 0x12000, scoped, tag = 'internal scratch']
  %s0 = inlined_call_operand.vmem [shape: f32[2,3,256], index: 0, kind: input, shape index: {}]
  %s1 = inlined_call_operand.vmem [shape: f32[64,3], index: 1, kind: input, shape index: {}]
  %s2 = inlined_call_operand.vmem [shape: f32[64,1], index: 2, kind: input, shape index: {}]
  %s3 = inlined_call_operand.vmem [shape: f32[64,1], index: 3, kind: input, shape index: {}]
  %s4 = inlined_call_operand.vmem [shape: bf16[128,64], index: 4, kind: input, shape index: {}]
  %s5 = inlined_call_operand.vmem [shape: f32[128,1], index: 5, kind: input, shape index: {}]
  %s6 = inlined_call_operand.vmem [shape: f32[128,1], index: 6, kind: input, shape index: {}]
  %s7 = inlined_call_operand.hbm [shape: f32[2,128,256], index: 7, kind: output, shape index: {}]
  %s8 = sld [smem:[#allocation0]]
  $region61: #{conv_layer_forward.5} parent=0
    _
  %s10 = ssub.s32 1, %s8
  %s11 = scalar_select 0, %s10, %s8
  $region1: #{conv_layer_forward.5} parent=0
    #allocation2 [shape = 'u8[262144]{0}', space=vmem, size = 0x40000, scoped, tag = 'output window, operand 0']
    #allocation3 [shape = 's32[2]{0}', space=sflag, size = 0x8, scoped, tag = 'scoped memory for conv_layer_forward.5']
    %12 = vsyncpa [#allocation3], 0
    %s13 = scalar_lea.sflag [#allocation3], 1
    %14 = vsyncpa %s13, 0
    loop: start=0, step=1, limit=4
    $region2: #{conv_layer_forward.5} parent=1 // loop_pre_header
      _
    $region3: #{conv_layer_forward.5} parent=1 // loop_header
      %s16 = sphi 0, %s20
      %p17 = scmp.ge.s32.totalorder %s16, 4
      %s23 = sphi 0, %s35
      %s24 = sphi 0, %s31
      %s25 = sphi 0, %s23
      %s26 = sphi 0, %s24
      %s27 = sphi 0, %s25
      %s28 = sphi 0, %s26
      %s40 = sphi 0, %s42
      %s43 = sphi 0, %s40
      %s44 = sphi 0, %s43
      %s60 = sphi 0, %s44
      %s64 = sphi 0, %s64
      %s66 = sphi 0, %s64
      %s67 = sphi 0, %s66
      %s81 = sphi 0, %s67
      %s85 = sphi 0, %s85
      %s87 = sphi 0, %s85
      %s88 = sphi 0, %s87
      %s102 = sphi 0, %s88
      %s106 = sphi 0, %s106
      %s108 = sphi 0, %s106
      %s109 = sphi 0, %s108
      %s123 = sphi 0, %s109
      %s127 = sphi 0, %s127
      %s129 = sphi 0, %s127
      %s130 = sphi 0, %s129
      %s144 = sphi 0, %s130
      %s148 = sphi 0, %s148
      %s150 = sphi 0, %s148
      %s151 = sphi 0, %s150
      %s165 = sphi 0, %s151
      %s169 = sphi 0, %s169
      %s171 = sphi 0, %s169
      %s172 = sphi 0, %s171
      %s186 = sphi 0, %s172
      %s194 = sphi 0, %s196
      %s197 = sphi 0, %s194
      %s198 = sphi 0, %s197
      %s214 = sphi 0, %s198
    $region4: #{conv_layer_forward.5} parent=1 // loop_header_branch
      %19 = sbr.rel (%p17) target = $region8
    $region5: #{conv_layer_forward.5} parent=1 // loop_body
      %s21 = ssub.s32 %s16, 1
      %s22 = ssub.s32 %s16, 2
      %s29 = sadd.s32 1, %s24
      %p30 = scmp.ge.s32.totalorder %s29, 1
      %s31 = scalar_select %p30, 0, %s29
      %s32 = sadd.s32 1, %s23
      %s33 = scalar_select %p30, %s32, %s23
      %p34 = scmp.ge.s32.totalorder %s33, 2
      %s35 = scalar_select %p34, 0, %s33
      %s36 = ssub.s32 %s23, %s35
      %s37 = ssub.s32 %s24, %s31
      %s38 = sor.u32 %s36, %s37
      %p39 = scmp.eq.s32.totalorder %s38, 0
      %s41 = sadd.s32 %s40, 1
      %s42 = scalar_select %p39, %s40, %s41
      %p45 = pneg %p39
      %p46 = scmp.eq.s32.totalorder %s16, 1
      %p47 = por %p45, %p46
      %p48 = scmp.ne.s32.totalorder %s40, %s43
      %p49 = scmp.eq.s32.totalorder %s16, 0
      %p50 = por %p48, %p49
      %p51 = scmp.ne.s32.totalorder %s40, %s43
      %p52 = scmp.eq.s32.totalorder %s21, 1
      %p53 = por %p51, %p52
      %p54 = scmp.ne.s32.totalorder %s43, %s44
      %p55 = scmp.eq.s32.totalorder %s21, 0
      %p56 = por %p54, %p55
      %p57 = scmp.ne.s32.totalorder %s43, %s44
      %p58 = scmp.eq.s32.totalorder %s22, 1
      %p59 = por %p57, %p58
      %p61 = scmp.ne.s32.totalorder %s44, %s60
      %p62 = scmp.eq.s32.totalorder %s22, 0
      %p63 = por %p61, %p62
      %s65 = sadd.s32 %s64, 1
      %p68 = scmp.eq.s32.totalorder %s16, 1
      %p69 = scmp.ne.s32.totalorder %s64, %s66
      %p70 = scmp.eq.s32.totalorder %s16, 0
      %p71 = por %p69, %p70
      %p72 = scmp.ne.s32.totalorder %s64, %s66
      %p73 = scmp.eq.s32.totalorder %s21, 1
      %p74 = por %p72, %p73
      %p75 = scmp.ne.s32.totalorder %s66, %s67
      %p76 = scmp.eq.s32.totalorder %s21, 0
      %p77 = por %p75, %p76
      %p78 = scmp.ne.s32.totalorder %s66, %s67
      %p79 = scmp.eq.s32.totalorder %s22, 1
      %p80 = por %p78, %p79
      %p82 = scmp.ne.s32.totalorder %s67, %s81
      %p83 = scmp.eq.s32.totalorder %s22, 0
      %p84 = por %p82, %p83
      %s86 = sadd.s32 %s85, 1
      %p89 = scmp.eq.s32.totalorder %s16, 1
      %p90 = scmp.ne.s32.totalorder %s85, %s87
      %p91 = scmp.eq.s32.totalorder %s16, 0
      %p92 = por %p90, %p91
      %p93 = scmp.ne.s32.totalorder %s85, %s87
      %p94 = scmp.eq.s32.totalorder %s21, 1
      %p95 = por %p93, %p94
      %p96 = scmp.ne.s32.totalorder %s87, %s88
      %p97 = scmp.eq.s32.totalorder %s21, 0
      %p98 = por %p96, %p97
      %p99 = scmp.ne.s32.totalorder %s87, %s88
      %p100 = scmp.eq.s32.totalorder %s22, 1
      %p101 = por %p99, %p100
      %p103 = scmp.ne.s32.totalorder %s88, %s102
      %p104 = scmp.eq.s32.totalorder %s22, 0
      %p105 = por %p103, %p104
      %s107 = sadd.s32 %s106, 1
      %p110 = scmp.eq.s32.totalorder %s16, 1
      %p111 = scmp.ne.s32.totalorder %s106, %s108
      %p112 = scmp.eq.s32.totalorder %s16, 0
      %p113 = por %p111, %p112
      %p114 = scmp.ne.s32.totalorder %s106, %s108
      %p115 = scmp.eq.s32.totalorder %s21, 1
      %p116 = por %p114, %p115
      %p117 = scmp.ne.s32.totalorder %s108, %s109
      %p118 = scmp.eq.s32.totalorder %s21, 0
      %p119 = por %p117, %p118
      %p120 = scmp.ne.s32.totalorder %s108, %s109
      %p121 = scmp.eq.s32.totalorder %s22, 1
      %p122 = por %p120, %p121
      %p124 = scmp.ne.s32.totalorder %s109, %s123
      %p125 = scmp.eq.s32.totalorder %s22, 0
      %p126 = por %p124, %p125
      %s128 = sadd.s32 %s127, 1
      %p131 = scmp.eq.s32.totalorder %s16, 1
      %p132 = scmp.ne.s32.totalorder %s127, %s129
      %p133 = scmp.eq.s32.totalorder %s16, 0
      %p134 = por %p132, %p133
      %p135 = scmp.ne.s32.totalorder %s127, %s129
      %p136 = scmp.eq.s32.totalorder %s21, 1
      %p137 = por %p135, %p136
      %p138 = scmp.ne.s32.totalorder %s129, %s130
      %p139 = scmp.eq.s32.totalorder %s21, 0
      %p140 = por %p138, %p139
      %p141 = scmp.ne.s32.totalorder %s129, %s130
      %p142 = scmp.eq.s32.totalorder %s22, 1
      %p143 = por %p141, %p142
      %p145 = scmp.ne.s32.totalorder %s130, %s144
      %p146 = scmp.eq.s32.totalorder %s22, 0
      %p147 = por %p145, %p146
      %s149 = sadd.s32 %s148, 1
      %p152 = scmp.eq.s32.totalorder %s16, 1
      %p153 = scmp.ne.s32.totalorder %s148, %s150
      %p154 = scmp.eq.s32.totalorder %s16, 0
      %p155 = por %p153, %p154
      %p156 = scmp.ne.s32.totalorder %s148, %s150
      %p157 = scmp.eq.s32.totalorder %s21, 1
      %p158 = por %p156, %p157
      %p159 = scmp.ne.s32.totalorder %s150, %s151
      %p160 = scmp.eq.s32.totalorder %s21, 0
      %p161 = por %p159, %p160
      %p162 = scmp.ne.s32.totalorder %s150, %s151
      %p163 = scmp.eq.s32.totalorder %s22, 1
      %p164 = por %p162, %p163
      %p166 = scmp.ne.s32.totalorder %s151, %s165
      %p167 = scmp.eq.s32.totalorder %s22, 0
      %p168 = por %p166, %p167
      %s170 = sadd.s32 %s169, 1
      %p173 = scmp.eq.s32.totalorder %s16, 1
      %p174 = scmp.ne.s32.totalorder %s169, %s171
      %p175 = scmp.eq.s32.totalorder %s16, 0
      %p176 = por %p174, %p175
      %p177 = scmp.ne.s32.totalorder %s169, %s171
      %p178 = scmp.eq.s32.totalorder %s21, 1
      %p179 = por %p177, %p178
      %p180 = scmp.ne.s32.totalorder %s171, %s172
      %p181 = scmp.eq.s32.totalorder %s21, 0
      %p182 = por %p180, %p181
      %p183 = scmp.ne.s32.totalorder %s171, %s172
      %p184 = scmp.eq.s32.totalorder %s22, 1
      %p185 = por %p183, %p184
      %p187 = scmp.ne.s32.totalorder %s172, %s186
      %p188 = scmp.eq.s32.totalorder %s22, 0
      %p189 = por %p187, %p188
      %s190 = ssub.s32 %s23, %s35
      %s191 = ssub.s32 %s24, %s31
      %s192 = sor.u32 %s190, %s191
      %p193 = scmp.eq.s32.totalorder %s192, 0
      %s195 = sadd.s32 %s194, 1
      %s196 = scalar_select %p193, %s194, %s195
      %p199 = pneg %p193
      %p200 = scmp.eq.s32.totalorder %s16, 1
      %p201 = por %p199, %p200
      %p202 = scmp.ne.s32.totalorder %s194, %s197
      %p203 = scmp.eq.s32.totalorder %s16, 0
      %p204 = por %p202, %p203
      %p205 = scmp.ne.s32.totalorder %s194, %s197
      %p206 = scmp.eq.s32.totalorder %s21, 1
      %p207 = por %p205, %p206
      %p208 = scmp.ne.s32.totalorder %s197, %s198
      %p209 = scmp.eq.s32.totalorder %s21, 0
      %p210 = por %p208, %p209
      %p211 = scmp.ne.s32.totalorder %s197, %s198
      %p212 = scmp.eq.s32.totalorder %s22, 1
      %p213 = por %p211, %p212
      %p215 = scmp.ne.s32.totalorder %s198, %s214
      %p216 = scmp.eq.s32.totalorder %s22, 0
      %p217 = por %p215, %p216
      %p218 = scmp.le.s32.totalorder 1, %s16
      %p219 = scmp.lt.s32.totalorder %s16, 3
      %p220 = pnand %p218, %p219
      %p221 = pneg %p220
      // Predicated region
      $region9: #{conv_layer_forward.5} parent=5 // pred_check
        _
      $region10: #{conv_layer_forward.5} parent=5 // pred_check_branch
        %223 = sbr.rel (%p220) target = $region12
      $region11: #{conv_layer_forward.5} parent=5 // pred_region
        %s224 = ssub.s32 %s16, 1
        // Predicated region
        $region13: #{conv_layer_forward.5} parent=11 // pred_check
          %p225 = pneg %p77
        $region14: #{conv_layer_forward.5} parent=11 // pred_check_branch
          %227 = sbr.rel (%p225) target = $region16
        $region15: #{conv_layer_forward.5} parent=11 // pred_region
          _
        $region16: #{conv_layer_forward.5} parent=11 // pred_fallthru
          _
        // Predicated region
        $region17: #{conv_layer_forward.5} parent=11 // pred_check
          %p228 = pneg %p98
        $region18: #{conv_layer_forward.5} parent=11 // pred_check_branch
          %230 = sbr.rel (%p228) target = $region20
        $region19: #{conv_layer_forward.5} parent=11 // pred_region
          _
        $region20: #{conv_layer_forward.5} parent=11 // pred_fallthru
          _
        // Predicated region
        $region21: #{conv_layer_forward.5} parent=11 // pred_check
          %p231 = pneg %p119
        $region22: #{conv_layer_forward.5} parent=11 // pred_check_branch
          %233 = sbr.rel (%p231) target = $region24
        $region23: #{conv_layer_forward.5} parent=11 // pred_region
          _
        $region24: #{conv_layer_forward.5} parent=11 // pred_fallthru
          _
        // Predicated region
        $region25: #{conv_layer_forward.5} parent=11 // pred_check
          %p234 = pneg %p140
        $region26: #{conv_layer_forward.5} parent=11 // pred_check_branch
          %236 = sbr.rel (%p234) target = $region28
        $region27: #{conv_layer_forward.5} parent=11 // pred_region
          _
        $region28: #{conv_layer_forward.5} parent=11 // pred_fallthru
          _
        // Predicated region
        $region29: #{conv_layer_forward.5} parent=11 // pred_check
          %p237 = pneg %p161
        $region30: #{conv_layer_forward.5} parent=11 // pred_check_branch
          %239 = sbr.rel (%p237) target = $region32
        $region31: #{conv_layer_forward.5} parent=11 // pred_region
          _
        $region32: #{conv_layer_forward.5} parent=11 // pred_fallthru
          _
        // Predicated region
        $region33: #{conv_layer_forward.5} parent=11 // pred_check
          %p240 = pneg %p182
        $region34: #{conv_layer_forward.5} parent=11 // pred_check_branch
          %242 = sbr.rel (%p240) target = $region36
        $region35: #{conv_layer_forward.5} parent=11 // pred_region
          _
        $region36: #{conv_layer_forward.5} parent=11 // pred_fallthru
          _
      $region12: #{conv_layer_forward.5} parent=5 // pred_fallthru
        _
      %p243 = scmp.lt.s32.totalorder %s16, 2
      // Predicated region
      $region37: #{conv_layer_forward.5} parent=5 // pred_check
        %p244 = pneg %p243
      $region38: #{conv_layer_forward.5} parent=5 // pred_check_branch
        %246 = sbr.rel (%p244) target = $region40
      $region39: #{conv_layer_forward.5} parent=5 // pred_region
        // Predicated region
        $region41: #{conv_layer_forward.5} parent=39 // pred_check
          %p247 = pneg %p50
        $region42: #{conv_layer_forward.5} parent=39 // pred_check_branch
          %249 = sbr.rel (%p247) target = $region44
        $region43: #{conv_layer_forward.5} parent=39 // pred_region
          %s250 = smul.u32 2, %s24
          %p251 = scmp.lt.s32.totalorder %s23, 1
          %s252 = scalar_select %p251, %s23, 1
          %p253 = scmp.lt.s32.totalorder %s250, 1
          %s254 = scalar_select %p253, %s250, 1
          %s255 = smul.addr %s252, 2
          %s256 = sadd.s32 %s254, %s255
          %s257 = smul.addr %s256, 4
          %s258 = scalar_lea.vmem %s0, %s257
          %s259 = smul.u32 2, %s24
        $region44: #{conv_layer_forward.5} parent=39 // pred_fallthru
          _
      $region40: #{conv_layer_forward.5} parent=5 // pred_fallthru
        _
      %p260 = scmp.le.s32.totalorder 1, %s16
      %p261 = scmp.lt.s32.totalorder %s16, 3
      %p262 = pnand %p260, %p261
      %p263 = pneg %p262
      // Predicated region
      $region45: #{conv_layer_forward.5} parent=5 // pred_check
        _
      $region46: #{conv_layer_forward.5} parent=5 // pred_check_branch
        %265 = sbr.rel (%p262) target = $region48
      $region47: #{conv_layer_forward.5} parent=5 // pred_region
        %s266 = ssub.s32 %s16, 1
        %s267 = smul.u32 2, %s26
        %p268 = scmp.lt.s32.totalorder %s25, 1
        %s269 = scalar_select %p268, %s25, 1
        %p270 = scmp.lt.s32.totalorder %s267, 1
        %s271 = scalar_select %p270, %s267, 1
        %s272 = smul.addr %s269, 2
        %s273 = sadd.s32 %s271, %s272
        %s274 = smul.addr %s273, 4
        %s275 = scalar_lea.vmem %s0, %s274
        %p276 = pneg %p56
        %p277 = pneg %p53
        %p278 = pneg %p77
        %p279 = pneg %p74
        %p280 = pneg %p98
        %p281 = pneg %p95
        %p282 = pneg %p119
        %p283 = pneg %p116
        %p284 = pneg %p140
        %p285 = pneg %p137
        %p286 = pneg %p161
        %p287 = pneg %p158
        %p288 = pneg %p182
        %p289 = pneg %p179
        %p290 = pneg %p210
        %p291 = pneg %p207
        %s292 = sand.u32 %s197, 1
        %s293 = scalar_lea.sflag [#allocation3], %s292
        %s294 = sand.u32 %s197, 1
        %s295 = smul.addr %s294, 256
        %s296 = scalar_lea.vmem [#allocation2], %s295
        %s297 = smul.u32 2, %s26
        %p298 = scmp.lt.s32.totalorder %s25, 1
        %s299 = scalar_select %p298, %s25, 1
        %p300 = scmp.lt.s32.totalorder %s297, 1
        %s301 = scalar_select %p300, %s297, 1
        %s302 = smul.addr %s299, 2
        %s303 = sadd.s32 %s301, %s302
        %s304 = smul.addr %s303, 4
        %s305 = scalar_lea.vmem %s0, %s304
        %s306 = smul.u32 2, %s26
        %s307 = smul.u32 2, %s26
        %v309 = vld [vmem:[%s305] sm:$0x77]
        %v310 = vld [vmem:[%s1] sm:$0xff]
        %v311 = vld [vmem:[%s1 + $0x8] sm:$0xff]
        %v312 = vld [vmem:[%s1 + $0x10] sm:$0xff]
        %v313 = vld [vmem:[%s1 + $0x18] sm:$0xff]
        %v314 = vld [vmem:[%s1 + $0x20] sm:$0xff]
        %v315 = vld [vmem:[%s1 + $0x28] sm:$0xff]
        %v316 = vld [vmem:[%s1 + $0x30] sm:$0xff]
        %v317 = vld [vmem:[%s1 + $0x38] sm:$0xff]
        %319 = vset.pattern.permute.xlu0 0
        %320 = vperm.xlu0 %319, %v310
        %v321 = vpop.permute.xlu0 %320
        %324 = vset.pattern.permute.xlu0 0
        %325 = vperm.xlu0 %324, %v311
        %v326 = vpop.permute.xlu0 %325
        %329 = vset.pattern.permute.xlu0 0
        %330 = vperm.xlu0 %329, %v312
        %v331 = vpop.permute.xlu0 %330
        %334 = vset.pattern.permute.xlu0 0
        %335 = vperm.xlu0 %334, %v313
        %v336 = vpop.permute.xlu0 %335
        %339 = vset.pattern.permute.xlu0 0
        %340 = vperm.xlu0 %339, %v314
        %v341 = vpop.permute.xlu0 %340
        %344 = vset.pattern.permute.xlu0 0
        %345 = vperm.xlu0 %344, %v315
        %v346 = vpop.permute.xlu0 %345
        %349 = vset.pattern.permute.xlu0 0
        %350 = vperm.xlu0 %349, %v316
        %v351 = vpop.permute.xlu0 %350
        %354 = vset.pattern.permute.xlu0 0
        %355 = vperm.xlu0 %354, %v317
        %v356 = vpop.permute.xlu0 %355
        %v359 = vlaneseq
        %v360 = vshrl.u32 %v359, 7
        %v361 = vsub.s32 0, %v360
        %v362 = vrot.slane %v309, %v361
        %v363 = vlaneseq
        %v364 = vshrl.u32 %v363, 7
        %v365 = vsub.s32 4, %v364
        %v366 = vrot.slane %v309, %v365
        %v369 = vlaneseq
        %v370 = vshrl.u32 %v369, 7
        %v371 = vsub.s32 0, %v370
        %v372 = vrot.slane %v362, %v371
        %v373 = vlaneseq
        %v374 = vshrl.u32 %v373, 7
        %v375 = vsub.s32 0, %v374
        %v376 = vrot.slane %v366, %v375
        %v377 = vmul.f32 %v321, %v372
        %v378 = vmul.f32 %v321, %v376
        %v379 = vmul.f32 %v326, %v372
        %v380 = vmul.f32 %v326, %v376
        %v381 = vmul.f32 %v331, %v372
        %v382 = vmul.f32 %v331, %v376
        %v383 = vmul.f32 %v336, %v372
        %v384 = vmul.f32 %v336, %v376
        %v385 = vmul.f32 %v341, %v372
        %v386 = vmul.f32 %v341, %v376
        %v387 = vmul.f32 %v346, %v372
        %v388 = vmul.f32 %v346, %v376
        %v389 = vmul.f32 %v351, %v372
        %v390 = vmul.f32 %v351, %v376
        %v391 = vmul.f32 %v356, %v372
        %v392 = vmul.f32 %v356, %v376
        %393 = vset.pattern.permute.xlu0 1
        %394 = vperm.xlu0 %393, %v310
        %v395 = vpop.permute.xlu0 %394
        %397 = vset.pattern.permute.xlu0 1
        %398 = vperm.xlu0 %397, %v311
        %v399 = vpop.permute.xlu0 %398
        %401 = vset.pattern.permute.xlu0 1
        %402 = vperm.xlu0 %401, %v312
        %v403 = vpop.permute.xlu0 %402
        %405 = vset.pattern.permute.xlu0 1
        %406 = vperm.xlu0 %405, %v313
        %v407 = vpop.permute.xlu0 %406
        %409 = vset.pattern.permute.xlu0 1
        %410 = vperm.xlu0 %409, %v314
        %v411 = vpop.permute.xlu0 %410
        %413 = vset.pattern.permute.xlu0 1
        %414 = vperm.xlu0 %413, %v315
        %v415 = vpop.permute.xlu0 %414
        %417 = vset.pattern.permute.xlu0 1
        %418 = vperm.xlu0 %417, %v316
        %v419 = vpop.permute.xlu0 %418
        %421 = vset.pattern.permute.xlu0 1
        %422 = vperm.xlu0 %421, %v317
        %v423 = vpop.permute.xlu0 %422
        %v425 = vlaneseq
        %v426 = vshrl.u32 %v425, 7
        %v427 = vsub.s32 1, %v426
        %v428 = vrot.slane %v309, %v427
        %v429 = vlaneseq
        %v430 = vshrl.u32 %v429, 7
        %v431 = vsub.s32 5, %v430
        %v432 = vrot.slane %v309, %v431
        %v435 = vlaneseq
        %v436 = vshrl.u32 %v435, 7
        %v437 = vsub.s32 1, %v436
        %v438 = vrot.slane %v428, %v437
        %v439 = vlaneseq
        %v440 = vshrl.u32 %v439, 7
        %v441 = vsub.s32 1, %v440
        %v442 = vrot.slane %v432, %v441
        %v443 = vmul.f32 %v395, %v438
        %v444 = vmul.f32 %v395, %v442
        %v445 = vmul.f32 %v399, %v438
        %v446 = vmul.f32 %v399, %v442
        %v447 = vmul.f32 %v403, %v438
        %v448 = vmul.f32 %v403, %v442
        %v449 = vmul.f32 %v407, %v438
        %v450 = vmul.f32 %v407, %v442
        %v451 = vmul.f32 %v411, %v438
        %v452 = vmul.f32 %v411, %v442
        %v453 = vmul.f32 %v415, %v438
        %v454 = vmul.f32 %v415, %v442
        %v455 = vmul.f32 %v419, %v438
        %v456 = vmul.f32 %v419, %v442
        %v457 = vmul.f32 %v423, %v438
        %v458 = vmul.f32 %v423, %v442
        %v459 = vadd.f32 %v377, %v443
        %v460 = vadd.f32 %v378, %v444
        %v461 = vadd.f32 %v379, %v445
        %v462 = vadd.f32 %v380, %v446
        %v463 = vadd.f32 %v381, %v447
        %v464 = vadd.f32 %v382, %v448
        %v465 = vadd.f32 %v383, %v449
        %v466 = vadd.f32 %v384, %v450
        %v467 = vadd.f32 %v385, %v451
        %v468 = vadd.f32 %v386, %v452
        %v469 = vadd.f32 %v387, %v453
        %v470 = vadd.f32 %v388, %v454
        %v471 = vadd.f32 %v389, %v455
        %v472 = vadd.f32 %v390, %v456
        %v473 = vadd.f32 %v391, %v457
        %v474 = vadd.f32 %v392, %v458
        %475 = vset.pattern.permute.xlu0 2
        %476 = vperm.xlu0 %475, %v310
        %v477 = vpop.permute.xlu0 %476
        %479 = vset.pattern.permute.xlu0 2
        %480 = vperm.xlu0 %479, %v311
        %v481 = vpop.permute.xlu0 %480
        %483 = vset.pattern.permute.xlu0 2
        %484 = vperm.xlu0 %483, %v312
        %v485 = vpop.permute.xlu0 %484
        %487 = vset.pattern.permute.xlu0 2
        %488 = vperm.xlu0 %487, %v313
        %v489 = vpop.permute.xlu0 %488
        %491 = vset.pattern.permute.xlu0 2
        %492 = vperm.xlu0 %491, %v314
        %v493 = vpop.permute.xlu0 %492
        %495 = vset.pattern.permute.xlu0 2
        %496 = vperm.xlu0 %495, %v315
        %v497 = vpop.permute.xlu0 %496
        %499 = vset.pattern.permute.xlu0 2
        %500 = vperm.xlu0 %499, %v316
        %v501 = vpop.permute.xlu0 %500
        %503 = vset.pattern.permute.xlu0 2
        %504 = vperm.xlu0 %503, %v317
        %v505 = vpop.permute.xlu0 %504
        %v507 = vlaneseq
        %v508 = vshrl.u32 %v507, 7
        %v509 = vsub.s32 2, %v508
        %v510 = vrot.slane %v309, %v509
        %v511 = vlaneseq
        %v512 = vshrl.u32 %v511, 7
        %v513 = vsub.s32 6, %v512
        %v514 = vrot.slane %v309, %v513
        %v517 = vlaneseq
        %v518 = vshrl.u32 %v517, 7
        %v519 = vsub.s32 2, %v518
        %v520 = vrot.slane %v510, %v519
        %v521 = vlaneseq
        %v522 = vshrl.u32 %v521, 7
        %v523 = vsub.s32 2, %v522
        %v524 = vrot.slane %v514, %v523
        %v525 = vmul.f32 %v477, %v520
        %v526 = vmul.f32 %v477, %v524
        %v527 = vmul.f32 %v481, %v520
        %v528 = vmul.f32 %v481, %v524
        %v529 = vmul.f32 %v485, %v520
        %v530 = vmul.f32 %v485, %v524
        %v531 = vmul.f32 %v489, %v520
        %v532 = vmul.f32 %v489, %v524
        %v533 = vmul.f32 %v493, %v520
        %v534 = vmul.f32 %v493, %v524
        %v535 = vmul.f32 %v497, %v520
        %v536 = vmul.f32 %v497, %v524
        %v537 = vmul.f32 %v501, %v520
        %v538 = vmul.f32 %v501, %v524
        %v539 = vmul.f32 %v505, %v520
        %v540 = vmul.f32 %v505, %v524
        %v541 = vadd.f32 %v459, %v525
        %v542 = vadd.f32 %v460, %v526
        %v543 = vadd.f32 %v461, %v527
        %v544 = vadd.f32 %v462, %v528
        %v545 = vadd.f32 %v463, %v529
        %v546 = vadd.f32 %v464, %v530
        %v547 = vadd.f32 %v465, %v531
        %v548 = vadd.f32 %v466, %v532
        %v549 = vadd.f32 %v467, %v533
        %v550 = vadd.f32 %v468, %v534
        %v551 = vadd.f32 %v469, %v535
        %v552 = vadd.f32 %v470, %v536
        %v553 = vadd.f32 %v471, %v537
        %v554 = vadd.f32 %v472, %v538
        %v555 = vadd.f32 %v473, %v539
        %v556 = vadd.f32 %v474, %v540
        %v557 = vld [vmem:[%s2] sm:$0xff]
        %v558 = vld [vmem:[%s2 + $0x8] sm:$0xff]
        %v559 = vld [vmem:[%s2 + $0x10] sm:$0xff]
        %v560 = vld [vmem:[%s2 + $0x18] sm:$0xff]
        %v561 = vld [vmem:[%s2 + $0x20] sm:$0xff]
        %v562 = vld [vmem:[%s2 + $0x28] sm:$0xff]
        %v563 = vld [vmem:[%s2 + $0x30] sm:$0xff]
        %v564 = vld [vmem:[%s2 + $0x38] sm:$0xff]
        %566 = vset.pattern.permute.xlu0 0
        %567 = vperm.xlu0 %566, %v557
        %v568 = vpop.permute.xlu0 %567
        %571 = vset.pattern.permute.xlu0 0
        %572 = vperm.xlu0 %571, %v558
        %v573 = vpop.permute.xlu0 %572
        %576 = vset.pattern.permute.xlu0 0
        %577 = vperm.xlu0 %576, %v559
        %v578 = vpop.permute.xlu0 %577
        %581 = vset.pattern.permute.xlu0 0
        %582 = vperm.xlu0 %581, %v560
        %v583 = vpop.permute.xlu0 %582
        %586 = vset.pattern.permute.xlu0 0
        %587 = vperm.xlu0 %586, %v561
        %v588 = vpop.permute.xlu0 %587
        %591 = vset.pattern.permute.xlu0 0
        %592 = vperm.xlu0 %591, %v562
        %v593 = vpop.permute.xlu0 %592
        %596 = vset.pattern.permute.xlu0 0
        %597 = vperm.xlu0 %596, %v563
        %v598 = vpop.permute.xlu0 %597
        %601 = vset.pattern.permute.xlu0 0
        %602 = vperm.xlu0 %601, %v564
        %v603 = vpop.permute.xlu0 %602
        %v605 = vmul.f32 %v541, %v568
        %v606 = vmul.f32 %v542, %v568
        %v607 = vmul.f32 %v543, %v573
        %v608 = vmul.f32 %v544, %v573
        %v609 = vmul.f32 %v545, %v578
        %v610 = vmul.f32 %v546, %v578
        %v611 = vmul.f32 %v547, %v583
        %v612 = vmul.f32 %v548, %v583
        %v613 = vmul.f32 %v549, %v588
        %v614 = vmul.f32 %v550, %v588
        %v615 = vmul.f32 %v551, %v593
        %v616 = vmul.f32 %v552, %v593
        %v617 = vmul.f32 %v553, %v598
        %v618 = vmul.f32 %v554, %v598
        %v619 = vmul.f32 %v555, %v603
        %v620 = vmul.f32 %v556, %v603
        %v621 = vld [vmem:[%s3] sm:$0xff]
        %v622 = vld [vmem:[%s3 + $0x8] sm:$0xff]
        %v623 = vld [vmem:[%s3 + $0x10] sm:$0xff]
        %v624 = vld [vmem:[%s3 + $0x18] sm:$0xff]
        %v625 = vld [vmem:[%s3 + $0x20] sm:$0xff]
        %v626 = vld [vmem:[%s3 + $0x28] sm:$0xff]
        %v627 = vld [vmem:[%s3 + $0x30] sm:$0xff]
        %v628 = vld [vmem:[%s3 + $0x38] sm:$0xff]
        %630 = vset.pattern.permute.xlu0 0
        %631 = vperm.xlu0 %630, %v621
        %v632 = vpop.permute.xlu0 %631
        %635 = vset.pattern.permute.xlu0 0
        %636 = vperm.xlu0 %635, %v622
        %v637 = vpop.permute.xlu0 %636
        %640 = vset.pattern.permute.xlu0 0
        %641 = vperm.xlu0 %640, %v623
        %v642 = vpop.permute.xlu0 %641
        %645 = vset.pattern.permute.xlu0 0
        %646 = vperm.xlu0 %645, %v624
        %v647 = vpop.permute.xlu0 %646
        %650 = vset.pattern.permute.xlu0 0
        %651 = vperm.xlu0 %650, %v625
        %v652 = vpop.permute.xlu0 %651
        %655 = vset.pattern.permute.xlu0 0
        %656 = vperm.xlu0 %655, %v626
        %v657 = vpop.permute.xlu0 %656
        %660 = vset.pattern.permute.xlu0 0
        %661 = vperm.xlu0 %660, %v627
        %v662 = vpop.permute.xlu0 %661
        %665 = vset.pattern.permute.xlu0 0
        %666 = vperm.xlu0 %665, %v628
        %v667 = vpop.permute.xlu0 %666
        %v669 = vadd.f32 %v605, %v632
        %v670 = vadd.f32 %v606, %v632
        %v671 = vadd.f32 %v607, %v637
        %v672 = vadd.f32 %v608, %v637
        %v673 = vadd.f32 %v609, %v642
        %v674 = vadd.f32 %v610, %v642
        %v675 = vadd.f32 %v611, %v647
        %v676 = vadd.f32 %v612, %v647
        %v677 = vadd.f32 %v613, %v652
        %v678 = vadd.f32 %v614, %v652
        %v679 = vadd.f32 %v615, %v657
        %v680 = vadd.f32 %v616, %v657
        %v681 = vadd.f32 %v617, %v662
        %v682 = vadd.f32 %v618, %v662
        %v683 = vadd.f32 %v619, %v667
        %v684 = vadd.f32 %v620, %v667
        %v685 = vmax.f32 %v669, 0.0
        %v686 = vmax.f32 %v670, 0.0
        %v687 = vmax.f32 %v671, 0.0
        %v688 = vmax.f32 %v672, 0.0
        %v689 = vmax.f32 %v673, 0.0
        %v690 = vmax.f32 %v674, 0.0
        %v691 = vmax.f32 %v675, 0.0
        %v692 = vmax.f32 %v676, 0.0
        %v693 = vmax.f32 %v677, 0.0
        %v694 = vmax.f32 %v678, 0.0
        %v695 = vmax.f32 %v679, 0.0
        %v696 = vmax.f32 %v680, 0.0
        %v697 = vmax.f32 %v681, 0.0
        %v698 = vmax.f32 %v682, 0.0
        %v699 = vmax.f32 %v683, 0.0
        %v700 = vmax.f32 %v684, 0.0
        %v701 = vld [vmem:[%s4] sm:$0xf]
        %v702 = vld [vmem:[%s4 + $0x4] sm:$0xf]
        %v703 = vld [vmem:[%s4 + $0x8] sm:$0xf]
        %v704 = vld [vmem:[%s4 + $0xc] sm:$0xf]
        %v705 = vld [vmem:[%s4 + $0x10] sm:$0xf]
        %v706 = vld [vmem:[%s4 + $0x14] sm:$0xf]
        %v707 = vld [vmem:[%s4 + $0x18] sm:$0xf]
        %v708 = vld [vmem:[%s4 + $0x1c] sm:$0xf]
        %v709 = vld [vmem:[%s4 + $0x20] sm:$0xf]
        %v710 = vld [vmem:[%s4 + $0x24] sm:$0xf]
        %v711 = vld [vmem:[%s4 + $0x28] sm:$0xf]
        %v712 = vld [vmem:[%s4 + $0x2c] sm:$0xf]
        %v713 = vld [vmem:[%s4 + $0x30] sm:$0xf]
        %v714 = vld [vmem:[%s4 + $0x34] sm:$0xf]
        %v715 = vld [vmem:[%s4 + $0x38] sm:$0xf]
        %v716 = vld [vmem:[%s4 + $0x3c] sm:$0xf]
        %v717 = vpack.c.bf16 %v687, %v685
        %v718 = vpack.c.bf16 %v688, %v686
        %v719 = vpack.c.bf16 %v691, %v689
        %v720 = vpack.c.bf16 %v692, %v690
        %v721 = vpack.c.bf16 %v695, %v693
        %v722 = vpack.c.bf16 %v696, %v694
        %v723 = vpack.c.bf16 %v699, %v697
        %v724 = vpack.c.bf16 %v700, %v698
        %v741 = vunpack.c.l.b16 %v701
        %v742 = vunpack.c.l.b16 %v702
        %v743 = vunpack.c.l.b16 %v703
        %v744 = vunpack.c.l.b16 %v704
        %v745 = vunpack.c.l.b16 %v705
        %v746 = vunpack.c.l.b16 %v706
        %v747 = vunpack.c.l.b16 %v707
        %v748 = vunpack.c.l.b16 %v708
        %v749 = vunpack.c.l.b16 %v709
        %v750 = vunpack.c.l.b16 %v710
        %v751 = vunpack.c.l.b16 %v711
        %v752 = vunpack.c.l.b16 %v712
        %v753 = vunpack.c.l.b16 %v713
        %v754 = vunpack.c.l.b16 %v714
        %v755 = vunpack.c.l.b16 %v715
        %v756 = vunpack.c.l.b16 %v716
        %v757 = vpack.c.b16 %v742, %v741
        %v758 = vpack.c.b16 %v744, %v743
        %v759 = vpack.c.b16 %v746, %v745
        %v760 = vpack.c.b16 %v748, %v747
        %v761 = vpack.c.b16 %v750, %v749
        %v762 = vpack.c.b16 %v752, %v751
        %v763 = vpack.c.b16 %v754, %v753
        %v764 = vpack.c.b16 %v756, %v755
        %vm765 = vcmask 523264
        %v767 = vsel %vm765, %v757, 0
        %v770 = vsel %vm765, %v758, 0
        %v773 = vsel %vm765, %v759, 0
        %v776 = vsel %vm765, %v760, 0
        %v779 = vsel %vm765, %v761, 0
        %v782 = vsel %vm765, %v762, 0
        %v785 = vsel %vm765, %v763, 0
        %v788 = vsel %vm765, %v764, 0
        %790 = vmatprep.subr.bf16.mxu0 %v718
        %791 = vmatpush1.bf16.msra.mxu0 %v717
        %792 = vmatprep.subr.bf16.mxu0 %v720
        %793 = vmatpush1.bf16.msra.mxu0 %v719
        %794 = vmatprep.subr.bf16.mxu0 %v722
        %795 = vmatpush1.bf16.msra.mxu0 %v721
        %796 = vmatprep.subr.bf16.mxu0 %v724
        %797 = vmatpush1.bf16.msra.mxu0 %v723
        %798 = vmatprep.subr.bf16.mxu0 0
        %799 = vmatpush1.bf16.msra.mxu0 0
        %800 = vmatprep.subr.bf16.mxu0 0
        %801 = vmatpush1.bf16.msra.mxu0 0
        %802 = vmatprep.subr.bf16.mxu0 0
        %803 = vmatpush1.bf16.msra.mxu0 0
        %804 = vmatprep.subr.bf16.mxu0 0
        %805 = vmatpush1.bf16.msra.mxu0 0
        %806 = vmatprep.subr.bf16.mxu0 0
        %807 = vmatpush1.bf16.msra.mxu0 0
        %808 = vmatprep.subr.bf16.mxu0 0
        %809 = vmatpush1.bf16.msra.mxu0 0
        %810 = vmatprep.subr.bf16.mxu0 0
        %811 = vmatpush1.bf16.msra.mxu0 0
        %812 = vmatprep.subr.bf16.mxu0 0
        %813 = vmatpush1.bf16.msra.mxu0 0
        %814 = vmatprep.subr.bf16.mxu0 0
        %815 = vmatpush1.bf16.msra.mxu0 0
        %816 = vmatprep.subr.bf16.mxu0 0
        %817 = vmatpush1.bf16.msra.mxu0 0
        %818 = vmatprep.subr.bf16.mxu0 0
        %819 = vmatpush1.bf16.msra.mxu0 0
        %820 = vmatprep.subr.bf16.mxu0 0
        %821 = vmatpush1.bf16.msra.mxu0 0
        %822 = vmatprep.mubr.bf16.mxu0 0
        %823 = vmatmul.mubr.bf16.gmra.mrb[0].mxu0 %v767
        %v824 = vpop.f32.mrb[0].mxu0
        %v825 = vadd.f32 0.0, %v824
        %v826 = vpop.f32.mrb[0].mxu0
        %v827 = vadd.f32 0.0, %v826
        %v828 = vpop.f32.mrb[0].mxu0
        %v829 = vadd.f32 0.0, %v828
        %v830 = vpop.f32.mrb[0].mxu0
        %v831 = vadd.f32 0.0, %v830
        %832 = vmatprep.mubr.bf16.mxu0 0
        %833 = vmatmul.mubr.bf16.gmra.mrb[0].mxu0 %v770
        %v834 = vpop.f32.mrb[0].mxu0
        %v835 = vadd.f32 0.0, %v834
        %v836 = vpop.f32.mrb[0].mxu0
        %v837 = vadd.f32 0.0, %v836
        %v838 = vpop.f32.mrb[0].mxu0
        %v839 = vadd.f32 0.0, %v838
        %v840 = vpop.f32.mrb[0].mxu0
        %v841 = vadd.f32 0.0, %v840
        %842 = vmatprep.mubr.bf16.mxu0 0
        %843 = vmatmul.mubr.bf16.gmra.mrb[0].mxu0 %v773
        %v844 = vpop.f32.mrb[0].mxu0
        %v845 = vadd.f32 0.0, %v844
        %v846 = vpop.f32.mrb[0].mxu0
        %v847 = vadd.f32 0.0, %v846
        %v848 = vpop.f32.mrb[0].mxu0
        %v849 = vadd.f32 0.0, %v848
        %v850 = vpop.f32.mrb[0].mxu0
        %v851 = vadd.f32 0.0, %v850
        %852 = vmatprep.mubr.bf16.mxu0 0
        %853 = vmatmul.mubr.bf16.gmra.mrb[0].mxu0 %v776
        %v854 = vpop.f32.mrb[0].mxu0
        %v855 = vadd.f32 0.0, %v854
        %v856 = vpop.f32.mrb[0].mxu0
        %v857 = vadd.f32 0.0, %v856
        %v858 = vpop.f32.mrb[0].mxu0
        %v859 = vadd.f32 0.0, %v858
        %v860 = vpop.f32.mrb[0].mxu0
        %v861 = vadd.f32 0.0, %v860
        %862 = vmatprep.mubr.bf16.mxu0 0
        %863 = vmatmul.mubr.bf16.gmra.mrb[0].mxu0 %v779
        %v864 = vpop.f32.mrb[0].mxu0
        %v865 = vadd.f32 0.0, %v864
        %v866 = vpop.f32.mrb[0].mxu0
        %v867 = vadd.f32 0.0, %v866
        %v868 = vpop.f32.mrb[0].mxu0
        %v869 = vadd.f32 0.0, %v868
        %v870 = vpop.f32.mrb[0].mxu0
        %v871 = vadd.f32 0.0, %v870
        %872 = vmatprep.mubr.bf16.mxu0 0
        %873 = vmatmul.mubr.bf16.gmra.mrb[0].mxu0 %v782
        %v874 = vpop.f32.mrb[0].mxu0
        %v875 = vadd.f32 0.0, %v874
        %v876 = vpop.f32.mrb[0].mxu0
        %v877 = vadd.f32 0.0, %v876
        %v878 = vpop.f32.mrb[0].mxu0
        %v879 = vadd.f32 0.0, %v878
        %v880 = vpop.f32.mrb[0].mxu0
        %v881 = vadd.f32 0.0, %v880
        %882 = vmatprep.mubr.bf16.mxu0 0
        %883 = vmatmul.mubr.bf16.gmra.mrb[0].mxu0 %v785
        %v884 = vpop.f32.mrb[0].mxu0
        %v885 = vadd.f32 0.0, %v884
        %v886 = vpop.f32.mrb[0].mxu0
        %v887 = vadd.f32 0.0, %v886
        %v888 = vpop.f32.mrb[0].mxu0
        %v889 = vadd.f32 0.0, %v888
        %v890 = vpop.f32.mrb[0].mxu0
        %v891 = vadd.f32 0.0, %v890
        %892 = vmatprep.mubr.bf16.mxu0 0
        %893 = vmatmul.mubr.bf16.gmra.mrb[0].mxu0 %v788
        %v894 = vpop.f32.mrb[0].mxu0
        %v895 = vadd.f32 0.0, %v894
        %v896 = vpop.f32.mrb[0].mxu0
        %v897 = vadd.f32 0.0, %v896
        %v898 = vpop.f32.mrb[0].mxu0
        %v899 = vadd.f32 0.0, %v898
        %v900 = vpop.f32.mrb[0].mxu0
        %v901 = vadd.f32 0.0, %v900
        %902 = vdwg.mxu0
        %v903 = vld [vmem:[%s5] sm:$0xff]
        %v904 = vld [vmem:[%s5 + $0x8] sm:$0xff]
        %v905 = vld [vmem:[%s5 + $0x10] sm:$0xff]
        %v906 = vld [vmem:[%s5 + $0x18] sm:$0xff]
        %v907 = vld [vmem:[%s5 + $0x20] sm:$0xff]
        %v908 = vld [vmem:[%s5 + $0x28] sm:$0xff]
        %v909 = vld [vmem:[%s5 + $0x30] sm:$0xff]
        %v910 = vld [vmem:[%s5 + $0x38] sm:$0xff]
        %v911 = vld [vmem:[%s5 + $0x40] sm:$0xff]
        %v912 = vld [vmem:[%s5 + $0x48] sm:$0xff]
        %v913 = vld [vmem:[%s5 + $0x50] sm:$0xff]
        %v914 = vld [vmem:[%s5 + $0x58] sm:$0xff]
        %v915 = vld [vmem:[%s5 + $0x60] sm:$0xff]
        %v916 = vld [vmem:[%s5 + $0x68] sm:$0xff]
        %v917 = vld [vmem:[%s5 + $0x70] sm:$0xff]
        %v918 = vld [vmem:[%s5 + $0x78] sm:$0xff]
        %920 = vset.pattern.permute.xlu0 0
        %921 = vperm.xlu0 %920, %v903
        %v922 = vpop.permute.xlu0 %921
        %925 = vset.pattern.permute.xlu0 0
        %926 = vperm.xlu0 %925, %v904
        %v927 = vpop.permute.xlu0 %926
        %930 = vset.pattern.permute.xlu0 0
        %931 = vperm.xlu0 %930, %v905
        %v932 = vpop.permute.xlu0 %931
        %935 = vset.pattern.permute.xlu0 0
        %936 = vperm.xlu0 %935, %v906
        %v937 = vpop.permute.xlu0 %936
        %940 = vset.pattern.permute.xlu0 0
        %941 = vperm.xlu0 %940, %v907
        %v942 = vpop.permute.xlu0 %941
        %945 = vset.pattern.permute.xlu0 0
        %946 = vperm.xlu0 %945, %v908
        %v947 = vpop.permute.xlu0 %946
        %950 = vset.pattern.permute.xlu0 0
        %951 = vperm.xlu0 %950, %v909
        %v952 = vpop.permute.xlu0 %951
        %955 = vset.pattern.permute.xlu0 0
        %956 = vperm.xlu0 %955, %v910
        %v957 = vpop.permute.xlu0 %956
        %960 = vset.pattern.permute.xlu0 0
        %961 = vperm.xlu0 %960, %v911
        %v962 = vpop.permute.xlu0 %961
        %965 = vset.pattern.permute.xlu0 0
        %966 = vperm.xlu0 %965, %v912
        %v967 = vpop.permute.xlu0 %966
        %970 = vset.pattern.permute.xlu0 0
        %971 = vperm.xlu0 %970, %v913
        %v972 = vpop.permute.xlu0 %971
        %975 = vset.pattern.permute.xlu0 0
        %976 = vperm.xlu0 %975, %v914
        %v977 = vpop.permute.xlu0 %976
        %980 = vset.pattern.permute.xlu0 0
        %981 = vperm.xlu0 %980, %v915
        %v982 = vpop.permute.xlu0 %981
        %985 = vset.pattern.permute.xlu0 0
        %986 = vperm.xlu0 %985, %v916
        %v987 = vpop.permute.xlu0 %986
        %990 = vset.pattern.permute.xlu0 0
        %991 = vperm.xlu0 %990, %v917
        %v992 = vpop.permute.xlu0 %991
        %995 = vset.pattern.permute.xlu0 0
        %996 = vperm.xlu0 %995, %v918
        %v997 = vpop.permute.xlu0 %996
        %v999 = vmul.f32 %v825, %v922
        %v1000 = vmul.f32 %v827, %v922
        %v1001 = vmul.f32 %v829, %v927
        %v1002 = vmul.f32 %v831, %v927
        %v1003 = vmul.f32 %v835, %v932
        %v1004 = vmul.f32 %v837, %v932
        %v1005 = vmul.f32 %v839, %v937
        %v1006 = vmul.f32 %v841, %v937
        %v1007 = vmul.f32 %v845, %v942
        %v1008 = vmul.f32 %v847, %v942
        %v1009 = vmul.f32 %v849, %v947
        %v1010 = vmul.f32 %v851, %v947
        %v1011 = vmul.f32 %v855, %v952
        %v1012 = vmul.f32 %v857, %v952
        %v1013 = vmul.f32 %v859, %v957
        %v1014 = vmul.f32 %v861, %v957
        %v1015 = vmul.f32 %v865, %v962
        %v1016 = vmul.f32 %v867, %v962
        %v1017 = vmul.f32 %v869, %v967
        %v1018 = vmul.f32 %v871, %v967
        %v1019 = vmul.f32 %v875, %v972
        %v1020 = vmul.f32 %v877, %v972
        %v1021 = vmul.f32 %v879, %v977
        %v1022 = vmul.f32 %v881, %v977
        %v1023 = vmul.f32 %v885, %v982
        %v1024 = vmul.f32 %v887, %v982
        %v1025 = vmul.f32 %v889, %v987
        %v1026 = vmul.f32 %v891, %v987
        %v1027 = vmul.f32 %v895, %v992
        %v1028 = vmul.f32 %v897, %v992
        %v1029 = vmul.f32 %v899, %v997
        %v1030 = vmul.f32 %v901, %v997
        %v1031 = vld [vmem:[%s6] sm:$0xff]
        %v1032 = vld [vmem:[%s6 + $0x8] sm:$0xff]
        %v1033 = vld [vmem:[%s6 + $0x10] sm:$0xff]
        %v1034 = vld [vmem:[%s6 + $0x18] sm:$0xff]
        %v1035 = vld [vmem:[%s6 + $0x20] sm:$0xff]
        %v1036 = vld [vmem:[%s6 + $0x28] sm:$0xff]
        %v1037 = vld [vmem:[%s6 + $0x30] sm:$0xff]
        %v1038 = vld [vmem:[%s6 + $0x38] sm:$0xff]
        %v1039 = vld [vmem:[%s6 + $0x40] sm:$0xff]
        %v1040 = vld [vmem:[%s6 + $0x48] sm:$0xff]
        %v1041 = vld [vmem:[%s6 + $0x50] sm:$0xff]
        %v1042 = vld [vmem:[%s6 + $0x58] sm:$0xff]
        %v1043 = vld [vmem:[%s6 + $0x60] sm:$0xff]
        %v1044 = vld [vmem:[%s6 + $0x68] sm:$0xff]
        %v1045 = vld [vmem:[%s6 + $0x70] sm:$0xff]
        %v1046 = vld [vmem:[%s6 + $0x78] sm:$0xff]
        %1048 = vset.pattern.permute.xlu0 0
        %1049 = vperm.xlu0 %1048, %v1031
        %v1050 = vpop.permute.xlu0 %1049
        %1053 = vset.pattern.permute.xlu0 0
        %1054 = vperm.xlu0 %1053, %v1032
        %v1055 = vpop.permute.xlu0 %1054
        %1058 = vset.pattern.permute.xlu0 0
        %1059 = vperm.xlu0 %1058, %v1033
        %v1060 = vpop.permute.xlu0 %1059
        %1063 = vset.pattern.permute.xlu0 0
        %1064 = vperm.xlu0 %1063, %v1034
        %v1065 = vpop.permute.xlu0 %1064
        %1068 = vset.pattern.permute.xlu0 0
        %1069 = vperm.xlu0 %1068, %v1035
        %v1070 = vpop.permute.xlu0 %1069
        %1073 = vset.pattern.permute.xlu0 0
        %1074 = vperm.xlu0 %1073, %v1036
        %v1075 = vpop.permute.xlu0 %1074
        %1078 = vset.pattern.permute.xlu0 0
        %1079 = vperm.xlu0 %1078, %v1037
        %v1080 = vpop.permute.xlu0 %1079
        %1083 = vset.pattern.permute.xlu0 0
        %1084 = vperm.xlu0 %1083, %v1038
        %v1085 = vpop.permute.xlu0 %1084
        %1088 = vset.pattern.permute.xlu0 0
        %1089 = vperm.xlu0 %1088, %v1039
        %v1090 = vpop.permute.xlu0 %1089
        %1093 = vset.pattern.permute.xlu0 0
        %1094 = vperm.xlu0 %1093, %v1040
        %v1095 = vpop.permute.xlu0 %1094
        %1098 = vset.pattern.permute.xlu0 0
        %1099 = vperm.xlu0 %1098, %v1041
        %v1100 = vpop.permute.xlu0 %1099
        %1103 = vset.pattern.permute.xlu0 0
        %1104 = vperm.xlu0 %1103, %v1042
        %v1105 = vpop.permute.xlu0 %1104
        %1108 = vset.pattern.permute.xlu0 0
        %1109 = vperm.xlu0 %1108, %v1043
        %v1110 = vpop.permute.xlu0 %1109
        %1113 = vset.pattern.permute.xlu0 0
        %1114 = vperm.xlu0 %1113, %v1044
        %v1115 = vpop.permute.xlu0 %1114
        %1118 = vset.pattern.permute.xlu0 0
        %1119 = vperm.xlu0 %1118, %v1045
        %v1120 = vpop.permute.xlu0 %1119
        %1123 = vset.pattern.permute.xlu0 0
        %1124 = vperm.xlu0 %1123, %v1046
        %v1125 = vpop.permute.xlu0 %1124
        %v1127 = vadd.f32 %v999, %v1050
        %v1128 = vadd.f32 %v1000, %v1050
        %v1129 = vadd.f32 %v1001, %v1055
        %v1130 = vadd.f32 %v1002, %v1055
        %v1131 = vadd.f32 %v1003, %v1060
        %v1132 = vadd.f32 %v1004, %v1060
        %v1133 = vadd.f32 %v1005, %v1065
        %v1134 = vadd.f32 %v1006, %v1065
        %v1135 = vadd.f32 %v1007, %v1070
        %v1136 = vadd.f32 %v1008, %v1070
        %v1137 = vadd.f32 %v1009, %v1075
        %v1138 = vadd.f32 %v1010, %v1075
        %v1139 = vadd.f32 %v1011, %v1080
        %v1140 = vadd.f32 %v1012, %v1080
        %v1141 = vadd.f32 %v1013, %v1085
        %v1142 = vadd.f32 %v1014, %v1085
        %v1143 = vadd.f32 %v1015, %v1090
        %v1144 = vadd.f32 %v1016, %v1090
        %v1145 = vadd.f32 %v1017, %v1095
        %v1146 = vadd.f32 %v1018, %v1095
        %v1147 = vadd.f32 %v1019, %v1100
        %v1148 = vadd.f32 %v1020, %v1100
        %v1149 = vadd.f32 %v1021, %v1105
        %v1150 = vadd.f32 %v1022, %v1105
        %v1151 = vadd.f32 %v1023, %v1110
        %v1152 = vadd.f32 %v1024, %v1110
        %v1153 = vadd.f32 %v1025, %v1115
        %v1154 = vadd.f32 %v1026, %v1115
        %v1155 = vadd.f32 %v1027, %v1120
        %v1156 = vadd.f32 %v1028, %v1120
        %v1157 = vadd.f32 %v1029, %v1125
        %v1158 = vadd.f32 %v1030, %v1125
        %v1159 = vmax.f32 %v1127, 0.0
        %v1160 = vmax.f32 %v1128, 0.0
        %v1161 = vmax.f32 %v1129, 0.0
        %v1162 = vmax.f32 %v1130, 0.0
        %v1163 = vmax.f32 %v1131, 0.0
        %v1164 = vmax.f32 %v1132, 0.0
        %v1165 = vmax.f32 %v1133, 0.0
        %v1166 = vmax.f32 %v1134, 0.0
        %v1167 = vmax.f32 %v1135, 0.0
        %v1168 = vmax.f32 %v1136, 0.0
        %v1169 = vmax.f32 %v1137, 0.0
        %v1170 = vmax.f32 %v1138, 0.0
        %v1171 = vmax.f32 %v1139, 0.0
        %v1172 = vmax.f32 %v1140, 0.0
        %v1173 = vmax.f32 %v1141, 0.0
        %v1174 = vmax.f32 %v1142, 0.0
        %v1175 = vmax.f32 %v1143, 0.0
        %v1176 = vmax.f32 %v1144, 0.0
        %v1177 = vmax.f32 %v1145, 0.0
        %v1178 = vmax.f32 %v1146, 0.0
        %v1179 = vmax.f32 %v1147, 0.0
        %v1180 = vmax.f32 %v1148, 0.0
        %v1181 = vmax.f32 %v1149, 0.0
        %v1182 = vmax.f32 %v1150, 0.0
        %v1183 = vmax.f32 %v1151, 0.0
        %v1184 = vmax.f32 %v1152, 0.0
        %v1185 = vmax.f32 %v1153, 0.0
        %v1186 = vmax.f32 %v1154, 0.0
        %v1187 = vmax.f32 %v1155, 0.0
        %v1188 = vmax.f32 %v1156, 0.0
        %v1189 = vmax.f32 %v1157, 0.0
        %v1190 = vmax.f32 %v1158, 0.0
        %1191 = vst [vmem:[%s296] sm:$0xff] %v1159
        %1192 = vst [vmem:[%s296 + $0x8] sm:$0xff] %v1160
        %1193 = vst [vmem:[%s296 + $0x10] sm:$0xff] %v1161
        %1194 = vst [vmem:[%s296 + $0x18] sm:$0xff] %v1162
        %1195 = vst [vmem:[%s296 + $0x20] sm:$0xff] %v1163
        %1196 = vst [vmem:[%s296 + $0x28] sm:$0xff] %v1164
        %1197 = vst [vmem:[%s296 + $0x30] sm:$0xff] %v1165
        %1198 = vst [vmem:[%s296 + $0x38] sm:$0xff] %v1166
        %1199 = vst [vmem:[%s296 + $0x40] sm:$0xff] %v1167
        %1200 = vst [vmem:[%s296 + $0x48] sm:$0xff] %v1168
        %1201 = vst [vmem:[%s296 + $0x50] sm:$0xff] %v1169
        %1202 = vst [vmem:[%s296 + $0x58] sm:$0xff] %v1170
        %1203 = vst [vmem:[%s296 + $0x60] sm:$0xff] %v1171
        %1204 = vst [vmem:[%s296 + $0x68] sm:$0xff] %v1172
        %1205 = vst [vmem:[%s296 + $0x70] sm:$0xff] %v1173
        %1206 = vst [vmem:[%s296 + $0x78] sm:$0xff] %v1174
        %1207 = vst [vmem:[%s296 + $0x80] sm:$0xff] %v1175
        %1208 = vst [vmem:[%s296 + $0x88] sm:$0xff] %v1176
        %1209 = vst [vmem:[%s296 + $0x90] sm:$0xff] %v1177
        %1210 = vst [vmem:[%s296 + $0x98] sm:$0xff] %v1178
        %1211 = vst [vmem:[%s296 + $0xa0] sm:$0xff] %v1179
        %1212 = vst [vmem:[%s296 + $0xa8] sm:$0xff] %v1180
        %1213 = vst [vmem:[%s296 + $0xb0] sm:$0xff] %v1181
        %1214 = vst [vmem:[%s296 + $0xb8] sm:$0xff] %v1182
        %1215 = vst [vmem:[%s296 + $0xc0] sm:$0xff] %v1183
        %1216 = vst [vmem:[%s296 + $0xc8] sm:$0xff] %v1184
        %1217 = vst [vmem:[%s296 + $0xd0] sm:$0xff] %v1185
        %1218 = vst [vmem:[%s296 + $0xd8] sm:$0xff] %v1186
        %1219 = vst [vmem:[%s296 + $0xe0] sm:$0xff] %v1187
        %1220 = vst [vmem:[%s296 + $0xe8] sm:$0xff] %v1188
        %1221 = vst [vmem:[%s296 + $0xf0] sm:$0xff] %v1189
        %1222 = vst [vmem:[%s296 + $0xf8] sm:$0xff] %v1190
        %s1223 = sand.u32 %s197, 1
        %s1224 = scalar_lea.sflag [#allocation3], %s1223
        %s1225 = sand.u32 %s197, 1
        %s1226 = smul.addr %s1225, 256
        %s1227 = scalar_lea.vmem [#allocation2], %s1226
        // Predicated region
        $region49: #{conv_layer_forward.5} parent=47 // pred_check
          %p1228 = pneg %p207
        $region50: #{conv_layer_forward.5} parent=47 // pred_check_branch
          %1230 = sbr.rel (%p1228) target = $region52
        $region51: #{conv_layer_forward.5} parent=47 // pred_region
          %s1231 = smul.u32 2, %s26
          %s1233 = ssub.s32 4096, 4096
          %1234 = vsyncadd %s1224, %s1233
          %s1235 = smul.addr %s25, 32
          %s1236 = sadd.s32 %s1231, %s1235
          %s1237 = smul.addr %s1236, 128
          %s1238 = scalar_lea.hbm %s7, %s1237
          %s1239 = sshll.u32 %s1227, 4
          %s1240 = int_to_ptr.vmem [resolvable:$true] %s1239
          %1245 = dma.vmem_to_hbm [thread:$0]  %s1240, 4096, %s1238, %s1224, 256, 256, 16
        $region52: #{conv_layer_forward.5} parent=47 // pred_fallthru
          _
      $region48: #{conv_layer_forward.5} parent=5 // pred_fallthru
        _
      %p1246 = scmp.le.s32.totalorder 2, %s16
      // Predicated region
      $region53: #{conv_layer_forward.5} parent=5 // pred_check
        %p1247 = pneg %p1246
      $region54: #{conv_layer_forward.5} parent=5 // pred_check_branch
        %1249 = sbr.rel (%p1247) target = $region56
      $region55: #{conv_layer_forward.5} parent=5 // pred_region
        %s1250 = ssub.s32 %s16, 2
        // Predicated region
        $region57: #{conv_layer_forward.5} parent=55 // pred_check
          %p1251 = pneg %p213
        $region58: #{conv_layer_forward.5} parent=55 // pred_check_branch
          %1253 = sbr.rel (%p1251) target = $region60
        $region59: #{conv_layer_forward.5} parent=55 // pred_region
          %s1254 = sand.u32 %s198, 1
          %s1255 = scalar_lea.sflag [#allocation3], %s1254
          %s1256 = sand.u32 %s198, 1
          %s1257 = smul.addr %s1256, 256
          %s1258 = scalar_lea.vmem [#allocation2], %s1257
          %1259 = dma.done %s1255, 4096
        $region60: #{conv_layer_forward.5} parent=55 // pred_fallthru
          _
      $region56: #{conv_layer_forward.5} parent=5 // pred_fallthru
        _
    $region6: #{conv_layer_forward.5} parent=1 // loop_footer
      %s20 = sadd.s32 1, %s16
    $region7: #{conv_layer_forward.5} parent=1 // loop_footer_branch
      %15 = sbr.rel target = $region3
    $region8: #{conv_layer_forward.5} parent=1 // loop_exit
      _
    %1260 = vsyncpa [#allocation3], 1
    %s1261 = scalar_lea.sflag [#allocation3], 1
    %1262 = vsyncpa %s1261, 1

</llo_original>
